<compile_context>
chip_gen: v6e
topology: v6e:2x2x1
jax: 0.10.0
libtpu: 0.0.40
codegen_flags: <defaults>
</compile_context>

<pallas_src>
import functools

import jax
import jax.numpy as jnp
from jax.experimental import pallas as pl
from jax.experimental.pallas import tpu as pltpu


def _round_up(v, m):
    return (v + m - 1) // m * m


def _gelu_erf(x):
    """Exact GELU: x * 0.5 * (1 + erf(x / sqrt(2))).

    erf via Abramowitz & Stegun 7.1.26 (|error| <= 1.5e-7): only mul/add, one
    divide and one exp, so it lowers cleanly (EUP handles exp / the divide).
    """
    z = x * 0.7071067811865475
    az = jnp.abs(z)
    t = 1.0 / (1.0 + 0.3275911 * az)
    poly = ((((1.061405429 * t - 1.453152027) * t + 1.421413741) * t
             - 0.284496736) * t + 0.254829592) * t
    e = 1.0 - poly * jnp.exp(-az * az)
    erf = jnp.where(z < 0.0, -e, e)
    return 0.5 * x * (1.0 + erf)


# -----------------------------------------------------------------------------
# Fused kernel.  One grid step = one (batch, row-tile) and runs the whole block
# end-to-end.  The input block xt_ref is a pre-padded, halo'd window
# (TH + 2P, PADL + W + P, Cp); its interior [P:P+TH, PADL:PADL+W, :] is exactly
# the original x (used for the residual), the borders are zeros (conv padding).
# -----------------------------------------------------------------------------
def _fused_kernel(xt_ref, dw_w_ref, dw_b_ref, ln_w_ref, ln_b_ref,
                  w1_ref, b1_ref, w2_ref, b2_ref, gamma_ref,
                  out_ref, xn_ref,
                  *, C, K, P, PADL, TH, W, RG, eps, hd_chunk):
    Cp = out_ref.shape[-1]
    Hdp = w1_ref.shape[1]
    col0 = PADL - P            # window column where tap kw=0 starts for out col 0

    dw_w = dw_w_ref[...]       # (K, K, Cp) -- small, kept live across the loop
    dw_b = dw_b_ref[0]         # (Cp,)
    ln_w = ln_w_ref[0]
    ln_b = ln_b_ref[0]

    need_cmask = (C != Cp)
    if need_cmask:
        lane = jax.lax.broadcasted_iota(jnp.int32, (1, 1, Cp), 2)
        cmask = (lane < C).astype(jnp.float32)
    inv_c = 1.0 / C

    n_groups = TH // RG

    # ---- depthwise KxK conv + LayerNorm, streamed over small row groups -----
    # acc is (RG, W, Cp) f32 (<= ~8 vregs) so it never spills; the 49 taps are
    # pure VALU work with one (RG, Wp, Cp) row load per kh.
    def conv_ln_group(g, carry):
        r0 = g * RG
        acc = jnp.zeros((RG, W, Cp), jnp.float32)
        for kh in range(K):                                  # static taps
            rows = xt_ref[pl.ds(r0 + kh, RG), :, :]          # (RG, Wp, Cp)
            for kw in range(K):
                s = col0 + kw
                acc = acc + rows[:, s:s + W, :] * dw_w[kh, kw]
        acc = acc + dw_b

        # LayerNorm over the real C channels (pad channels are exact zeros).
        mean = jnp.sum(acc, axis=-1, keepdims=True) * inv_c
        d = acc - mean
        if need_cmask:
            d = d * cmask
        var = jnp.sum(d * d, axis=-1, keepdims=True) * inv_c  # biased (torch LN)
        xn = d * jax.lax.rsqrt(var + eps) * ln_w + ln_b
        xn_ref[pl.ds(r0, RG), :, :] = xn.astype(xn_ref.dtype)
        return carry

    jax.lax.fori_loop(0, n_groups, conv_ln_group, 0)

    # ---- MLP on the whole tile: big-M MXU matmuls, hidden dim chunked -------
    xh = xn_ref[...].reshape(TH * W, Cp)
    y = jnp.zeros((TH * W, Cp), jnp.float32)
    j = 0
    while j < Hdp:                                           # static chunks
        jw = min(hd_chunk, Hdp - j)
        h = jnp.dot(xh, w1_ref[:, j:j + jw],
                    preferred_element_type=jnp.float32) + b1_ref[0, j:j + jw]
        h = _gelu_erf(h)
        y = y + jnp.dot(h.astype(w2_ref.dtype), w2_ref[j:j + jw, :],
                        preferred_element_type=jnp.float32)
        j += jw
    y = (y + b2_ref[0]) * gamma_ref[0]                       # bias + layer scale

    # ---- residual (DropPath(0.0) == Identity); x == interior of the window --
    resid = xt_ref[P:P + TH, PADL:PADL + W, :].astype(jnp.float32)
    out_ref[...] = (resid + y.reshape(TH, W, Cp)).astype(out_ref.dtype)


# -----------------------------------------------------------------------------
# Wrapper
# -----------------------------------------------------------------------------
def convnext_block(x_nchw, params, *, kernel_size=7, eps=1e-6,
                   hd_chunk=512, mlp_dtype=jnp.float32):
    B, C, H, W = map(int, x_nchw.shape)
    K = int(kernel_size)
    assert K % 2 == 1, "kernel_size must be odd to preserve the spatial shape"
    P = (K - 1) // 2
    Hd = int(params["w1"].shape[1])

    LANE = 128
    Cp = _round_up(C, LANE)
    Hdp = _round_up(Hd, LANE)
    hd_c = min(int(hd_chunk), Hdp)           # 512 default: multiple of 256
    PADL = _round_up(P, 8) if P else 0       # left pad aligned -> residual read aligned
    Wp = PADL + W + P
    itm = jnp.dtype(mlp_dtype).itemsize

    # --- generation-aware VMEM budget (leave headroom on v7x's 64 MiB) -------
    try:
        phys_vmem = int(getattr(pltpu.get_tpu_info(), "vmem_capacity_bytes",
                                64 * 2**20))
    except Exception:
        phys_vmem = 64 * 2**20

    weight_bytes = (K * K * Cp + 5 * Cp + Hdp) * 4 + 2 * Cp * Hdp * itm

    def act_bytes(th):
        hs = th + 2 * P
        return (2 * hs * Wp * Cp * 4                 # input window, double-buffered
                + 2 * th * W * Cp * 4                # output block, double-buffered
                + th * W * Cp * itm                  # post-LN scratch
                + th * W * (2 * hd_c + 3 * Cp) * 4)  # h / gelu / y / resid temps

    budget = max(int(0.75 * phys_vmem) - 2 * weight_bytes - (4 << 20), 8 << 20)
    TH = 1
    for d in sorted((d for d in range(1, H + 1) if H % d == 0), reverse=True):
        if act_bytes(d) <= budget:
            TH = d                                   # largest divisor of H that fits
            break
    R = H // TH
    Hs = TH + 2 * P

    # Conv row-group size: keep the (RG, W, Cp) f32 accumulator <= ~8 vregs.
    vregs_per_row = -(-(W * Cp) // 1024)
    RG = max(1, 8 // vregs_per_row)
    while TH % RG:
        RG -= 1

    vmem_limit = int(min(max(2 * weight_bytes + act_bytes(TH) + (8 << 20),
                             32 << 20),
                         int(0.85 * phys_vmem)))

    f32 = jnp.float32
    # Glue (unavoidable for an NCHW interface): one fused transpose + pad copy.
    # Spatial halo + zero borders + channel pad are all produced here, so the
    # kernel needs no zero fills and no manual halo DMA.
    x_nhwc = jnp.transpose(x_nchw, (0, 2, 3, 1)).astype(f32)
    xpad = jnp.pad(x_nhwc, ((0, 0), (P, P), (PADL, P), (0, Cp - C)))
    if R == 1:
        xt = xpad                                     # (B, Hs, Wp, Cp), no extra copy
    else:
        # Rare fallback for very large H*W*Cp: materialize overlapping windows.
        xt = jnp.stack([xpad[:, r * TH:r * TH + Hs] for r in range(R)], axis=1)
        xt = xt.reshape(B * R, Hs, Wp, Cp)

    cpad = ((0, 0), (0, Cp - C))
    dw_w = jnp.pad(params["dw_w"].astype(f32), ((0, 0), (0, 0), (0, Cp - C)))
    dw_b = jnp.pad(params["dw_b"].astype(f32), cpad)
    ln_w = jnp.pad(params["ln_w"].astype(f32), cpad)
    ln_b = jnp.pad(params["ln_b"].astype(f32), cpad)
    b2 = jnp.pad(params["b2"].astype(f32), cpad)
    gamma = jnp.pad(params["gamma"].astype(f32), cpad)
    b1 = jnp.pad(params["b1"].astype(f32), ((0, 0), (0, Hdp - Hd)))
    w1 = jnp.pad(params["w1"].astype(f32),
                 ((0, Cp - C), (0, Hdp - Hd))).astype(mlp_dtype)
    w2 = jnp.pad(params["w2"].astype(f32),
                 ((0, Hdp - Hd), (0, Cp - C))).astype(mlp_dtype)

    kernel = functools.partial(
        _fused_kernel, C=C, K=K, P=P, PADL=PADL, TH=TH, W=W, RG=RG,
        eps=float(eps), hd_chunk=hd_c)

    cw = lambda b, r: (0, 0)

    out_p = pl.pallas_call(
        kernel,
        out_shape=jax.ShapeDtypeStruct((B, H, W, Cp), f32),
        grid=(B, R),
        in_specs=[
            # pre-padded halo'd window: one contiguous auto-pipelined block/step
            pl.BlockSpec((None, Hs, Wp, Cp), lambda b, r: (b * R + r, 0, 0, 0)),
            pl.BlockSpec((K, K, Cp), lambda b, r: (0, 0, 0)),   # dwconv weight
            pl.BlockSpec((1, Cp), cw),                          # dwconv bias
            pl.BlockSpec((1, Cp), cw),                          # LN weight
            pl.BlockSpec((1, Cp), cw),                          # LN bias
            pl.BlockSpec((Cp, Hdp), cw),                        # pwconv1 weight
            pl.BlockSpec((1, Hdp), cw),                         # pwconv1 bias
            pl.BlockSpec((Hdp, Cp), cw),                        # pwconv2 weight
            pl.BlockSpec((1, Cp), cw),                          # pwconv2 bias
            pl.BlockSpec((1, Cp), cw),                          # gamma (layer scale)
        ],
        out_specs=pl.BlockSpec((None, TH, W, Cp), lambda b, r: (b, r, 0, 0)),
        scratch_shapes=[pltpu.VMEM((TH, W, Cp), mlp_dtype)],    # post-LN activations
        compiler_params=pltpu.CompilerParams(
            dimension_semantics=("parallel", "parallel"),
            vmem_limit_bytes=vmem_limit),
    )(xt, dw_w, dw_b, ln_w, ln_b, w1, b1, w2, b2, gamma)

    # glue back: drop the channel pad, NHWC -> NCHW
    return jnp.transpose(out_p[..., :C], (0, 3, 1, 2)).astype(x_nchw.dtype)


# -----------------------------------------------------------------------------
# Pure-JAX reference (exact module semantics: erf GELU, f32) for a sanity check.
# -----------------------------------------------------------------------------
def convnext_block_ref(x_nchw, params, *, kernel_size=7, eps=1e-6):
    B, C, H, W = x_nchw.shape
    P = (kernel_size - 1) // 2
    w_oihw = jnp.transpose(params["dw_w"], (2, 0, 1))[:, None, :, :]
    y = jax.lax.conv_general_dilated(
        x_nchw, w_oihw, (1, 1), [(P, P), (P, P)],
        feature_group_count=C, dimension_numbers=("NCHW", "OIHW", "NCHW"))
    y = y + params["dw_b"].reshape(1, C, 1, 1)
    yt = jnp.transpose(y, (0, 2, 3, 1))
    mean = yt.mean(-1, keepdims=True)
    var = ((yt - mean) ** 2).mean(-1, keepdims=True)
    yn = (yt - mean) / jnp.sqrt(var + eps) * params["ln_w"][0] + params["ln_b"][0]
    h = yn @ params["w1"] + params["b1"][0]
    h = jax.nn.gelu(h, approximate=False)
    z = h @ params["w2"] + params["b2"][0]
    z = z * params["gamma"][0]
    return x_nchw + jnp.transpose(z, (0, 3, 1, 2))


if __name__ == "__main__":
    # Module config: dim=4, kernel_size=7, mlp_ratio=4.0 -> hidden=16,
    # drop_path=0.0 (Identity).  The layer scale is set to a non-trivial value
    # (5e-3, vs. the 1e-6 init) so the LN/MLP/GELU path is actually exercised
    # against the reference instead of being suppressed.
    B, C, H, W = 2, 4, 16, 16
    K, HID = 7, int(4.0 * C)

    key = jax.random.PRNGKey(0)
    ks = jax.random.split(key, 7)
    params = {
        "dw_w": 0.1 * jax.random.normal(ks[0], (K, K, C), jnp.float32),
        "dw_b": 0.01 * jax.random.normal(ks[1], (1, C), jnp.float32),
        "ln_w": jnp.ones((1, C), jnp.float32),
        "ln_b": jnp.zeros((1, C), jnp.float32),
        "w1": jax.random.normal(ks[2], (C, HID), jnp.float32) / jnp.sqrt(C),
        "b1": 0.01 * jax.random.normal(ks[3], (1, HID), jnp.float32),
        "w2": jax.random.normal(ks[4], (HID, C), jnp.float32) / jnp.sqrt(HID),
        "b2": 0.01 * jax.random.normal(ks[5], (1, C), jnp.float32),
        "gamma": 5e-3 * jnp.ones((1, C), jnp.float32),
    }
    x = jax.random.normal(ks[6], (B, C, H, W), jnp.float32)

    out = convnext_block(x, params, kernel_size=K)
    out = jax.block_until_ready(out)

    ref = convnext_block_ref(x, params, kernel_size=K)
    assert out.shape == (B, C, H, W)
    assert jnp.allclose(out, ref, atol=1e-4, rtol=1e-4), "mismatch vs reference"

    print("KERNEL_OK")
</pallas_src>

<mosaic_0001>
module attributes {stable_mosaic.version = 11 : i64} {
  func.func @_fused_kernel(%arg0: i32, %arg1: i32, %arg2: memref<1x22x27x128xf32, #tpu.memory_space<vmem>>, %arg3: memref<7x7x128xf32, #tpu.memory_space<vmem>>, %arg4: memref<1x128xf32, #tpu.memory_space<vmem>>, %arg5: memref<1x128xf32, #tpu.memory_space<vmem>>, %arg6: memref<1x128xf32, #tpu.memory_space<vmem>>, %arg7: memref<128x128xf32, #tpu.memory_space<vmem>>, %arg8: memref<1x128xf32, #tpu.memory_space<vmem>>, %arg9: memref<128x128xf32, #tpu.memory_space<vmem>>, %arg10: memref<1x128xf32, #tpu.memory_space<vmem>>, %arg11: memref<1x128xf32, #tpu.memory_space<vmem>>, %arg12: memref<1x16x16x128xf32, #tpu.memory_space<vmem>>, %arg13: memref<16x16x128xf32, #tpu.memory_space<vmem>>) attributes {dimension_semantics = [#tpu.dimension_semantics<parallel>, #tpu.dimension_semantics<parallel>], iteration_bounds = array<i64: 2, 1>, scalar_prefetch = 0 : i64, scratch_operands = 1 : i64, tpu.core_type = #tpu.core_type<tc>, window_params = [{transform_indices = @transform_0, window_bounds = array<i64: 1, 22, 27, 128>}, {pipeline_mode = #tpu.pipeline_mode<synchronous>, transform_indices = @transform_1, window_bounds = array<i64: 7, 7, 128>}, {pipeline_mode = #tpu.pipeline_mode<synchronous>, transform_indices = @transform_2, window_bounds = array<i64: 1, 128>}, {pipeline_mode = #tpu.pipeline_mode<synchronous>, transform_indices = @transform_3, window_bounds = array<i64: 1, 128>}, {pipeline_mode = #tpu.pipeline_mode<synchronous>, transform_indices = @transform_4, window_bounds = array<i64: 1, 128>}, {pipeline_mode = #tpu.pipeline_mode<synchronous>, transform_indices = @transform_5, window_bounds = array<i64: 128, 128>}, {pipeline_mode = #tpu.pipeline_mode<synchronous>, transform_indices = @transform_6, window_bounds = array<i64: 1, 128>}, {pipeline_mode = #tpu.pipeline_mode<synchronous>, transform_indices = @transform_7, window_bounds = array<i64: 128, 128>}, {pipeline_mode = #tpu.pipeline_mode<synchronous>, transform_indices = @transform_8, window_bounds = array<i64: 1, 128>}, {pipeline_mode = #tpu.pipeline_mode<synchronous>, transform_indices = @transform_9, window_bounds = array<i64: 1, 128>}, {transform_indices = @transform_10, window_bounds = array<i64: 1, 16, 16, 128>}]} {
    %c0 = arith.constant 0 : index
    %c0_0 = arith.constant 0 : index
    %c0_1 = arith.constant 0 : index
    %0 = vector.load %arg3[%c0, %c0_0, %c0_1] : memref<7x7x128xf32, #tpu.memory_space<vmem>>, vector<7x7x128xf32>
    %c0_2 = arith.constant 0 : index
    %c0_3 = arith.constant 0 : index
    %1 = vector.load %arg4[%c0_2, %c0_3] : memref<1x128xf32, #tpu.memory_space<vmem>>, vector<1x128xf32>
    %2 = vector.shape_cast %1 : vector<1x128xf32> to vector<128xf32>
    %c0_4 = arith.constant 0 : index
    %c0_5 = arith.constant 0 : index
    %3 = vector.load %arg5[%c0_4, %c0_5] : memref<1x128xf32, #tpu.memory_space<vmem>>, vector<1x128xf32>
    %4 = vector.shape_cast %3 : vector<1x128xf32> to vector<128xf32>
    %c0_6 = arith.constant 0 : index
    %c0_7 = arith.constant 0 : index
    %5 = vector.load %arg6[%c0_6, %c0_7] : memref<1x128xf32, #tpu.memory_space<vmem>>, vector<1x128xf32>
    %6 = vector.shape_cast %5 : vector<1x128xf32> to vector<128xf32>
    %7 = tpu.iota {dimensions = array<i32: 2>} : vector<1x1x128xi32>
    %c4_i32 = arith.constant 4 : i32
    %8 = vector.broadcast %c4_i32 : i32 to vector<1x1x128xi32>
    %9 = arith.cmpi slt, %7, %8 : vector<1x1x128xi32>
    %10 = arith.extui %9 : vector<1x1x128xi1> to vector<1x1x128xi32>
    %11 = arith.sitofp %10 : vector<1x1x128xi32> to vector<1x1x128xf32>
    %c0_i32 = arith.constant 0 : i32
    %c4_i32_8 = arith.constant 4 : i32
    %12 = arith.addi %c0_i32, %c4_i32_8 : i32
    %c1_i32 = arith.constant 1 : i32
    scf.for %arg14 = %c0_i32 to %12 step %c1_i32  : i32 {
      %c4_i32_46 = arith.constant 4 : i32
      %83 = arith.muli %arg14, %c4_i32_46 : i32
      %cst_47 = arith.constant 0.000000e+00 : f32
      %84 = vector.broadcast %cst_47 : f32 to vector<4x16x128xf32>
      %c0_i32_48 = arith.constant 0 : i32
      %85 = arith.addi %83, %c0_i32_48 : i32
      %c0_49 = arith.constant 0 : index
      %86 = arith.index_cast %85 : i32 to index
      %c0_50 = arith.constant 0 : index
      %c0_51 = arith.constant 0 : index
      %87 = vector.load %arg2[%c0_49, %86, %c0_50, %c0_51] : memref<1x22x27x128xf32, #tpu.memory_space<vmem>>, vector<1x4x27x128xf32>
      %88 = vector.shape_cast %87 : vector<1x4x27x128xf32> to vector<4x27x128xf32>
      %89 = vector.extract_strided_slice %88 {offsets = [0, 5, 0], sizes = [4, 16, 128], strides = [1, 1, 1]} : vector<4x27x128xf32> to vector<4x16x128xf32>
      %90 = vector.extract_strided_slice %0 {offsets = [0, 0, 0], sizes = [1, 1, 128], strides = [1, 1, 1]} : vector<7x7x128xf32> to vector<1x1x128xf32>
      %91 = vector.shape_cast %90 : vector<1x1x128xf32> to vector<128xf32>
      %92 = vector.shape_cast %91 : vector<128xf32> to vector<1x1x128xf32>
      %93 = vector.broadcast %92 : vector<1x1x128xf32> to vector<4x16x128xf32>
      %94 = arith.mulf %89, %93 : vector<4x16x128xf32>
      %95 = arith.addf %84, %94 : vector<4x16x128xf32>
      %96 = vector.extract_strided_slice %88 {offsets = [0, 6, 0], sizes = [4, 16, 128], strides = [1, 1, 1]} : vector<4x27x128xf32> to vector<4x16x128xf32>
      %97 = vector.extract_strided_slice %0 {offsets = [0, 1, 0], sizes = [1, 1, 128], strides = [1, 1, 1]} : vector<7x7x128xf32> to vector<1x1x128xf32>
      %98 = vector.shape_cast %97 : vector<1x1x128xf32> to vector<128xf32>
      %99 = vector.shape_cast %98 : vector<128xf32> to vector<1x1x128xf32>
      %100 = vector.broadcast %99 : vector<1x1x128xf32> to vector<4x16x128xf32>
      %101 = arith.mulf %96, %100 : vector<4x16x128xf32>
      %102 = arith.addf %95, %101 : vector<4x16x128xf32>
      %103 = vector.extract_strided_slice %88 {offsets = [0, 7, 0], sizes = [4, 16, 128], strides = [1, 1, 1]} : vector<4x27x128xf32> to vector<4x16x128xf32>
      %104 = vector.extract_strided_slice %0 {offsets = [0, 2, 0], sizes = [1, 1, 128], strides = [1, 1, 1]} : vector<7x7x128xf32> to vector<1x1x128xf32>
      %105 = vector.shape_cast %104 : vector<1x1x128xf32> to vector<128xf32>
      %106 = vector.shape_cast %105 : vector<128xf32> to vector<1x1x128xf32>
      %107 = vector.broadcast %106 : vector<1x1x128xf32> to vector<4x16x128xf32>
      %108 = arith.mulf %103, %107 : vector<4x16x128xf32>
      %109 = arith.addf %102, %108 : vector<4x16x128xf32>
      %110 = vector.extract_strided_slice %88 {offsets = [0, 8, 0], sizes = [4, 16, 128], strides = [1, 1, 1]} : vector<4x27x128xf32> to vector<4x16x128xf32>
      %111 = vector.extract_strided_slice %0 {offsets = [0, 3, 0], sizes = [1, 1, 128], strides = [1, 1, 1]} : vector<7x7x128xf32> to vector<1x1x128xf32>
      %112 = vector.shape_cast %111 : vector<1x1x128xf32> to vector<128xf32>
      %113 = vector.shape_cast %112 : vector<128xf32> to vector<1x1x128xf32>
      %114 = vector.broadcast %113 : vector<1x1x128xf32> to vector<4x16x128xf32>
      %115 = arith.mulf %110, %114 : vector<4x16x128xf32>
      %116 = arith.addf %109, %115 : vector<4x16x128xf32>
      %117 = vector.extract_strided_slice %88 {offsets = [0, 9, 0], sizes = [4, 16, 128], strides = [1, 1, 1]} : vector<4x27x128xf32> to vector<4x16x128xf32>
      %118 = vector.extract_strided_slice %0 {offsets = [0, 4, 0], sizes = [1, 1, 128], strides = [1, 1, 1]} : vector<7x7x128xf32> to vector<1x1x128xf32>
      %119 = vector.shape_cast %118 : vector<1x1x128xf32> to vector<128xf32>
      %120 = vector.shape_cast %119 : vector<128xf32> to vector<1x1x128xf32>
      %121 = vector.broadcast %120 : vector<1x1x128xf32> to vector<4x16x128xf32>
      %122 = arith.mulf %117, %121 : vector<4x16x128xf32>
      %123 = arith.addf %116, %122 : vector<4x16x128xf32>
      %124 = vector.extract_strided_slice %88 {offsets = [0, 10, 0], sizes = [4, 16, 128], strides = [1, 1, 1]} : vector<4x27x128xf32> to vector<4x16x128xf32>
      %125 = vector.extract_strided_slice %0 {offsets = [0, 5, 0], sizes = [1, 1, 128], strides = [1, 1, 1]} : vector<7x7x128xf32> to vector<1x1x128xf32>
      %126 = vector.shape_cast %125 : vector<1x1x128xf32> to vector<128xf32>
      %127 = vector.shape_cast %126 : vector<128xf32> to vector<1x1x128xf32>
      %128 = vector.broadcast %127 : vector<1x1x128xf32> to vector<4x16x128xf32>
      %129 = arith.mulf %124, %128 : vector<4x16x128xf32>
      %130 = arith.addf %123, %129 : vector<4x16x128xf32>
      %131 = vector.extract_strided_slice %88 {offsets = [0, 11, 0], sizes = [4, 16, 128], strides = [1, 1, 1]} : vector<4x27x128xf32> to vector<4x16x128xf32>
      %132 = vector.extract_strided_slice %0 {offsets = [0, 6, 0], sizes = [1, 1, 128], strides = [1, 1, 1]} : vector<7x7x128xf32> to vector<1x1x128xf32>
      %133 = vector.shape_cast %132 : vector<1x1x128xf32> to vector<128xf32>
      %134 = vector.shape_cast %133 : vector<128xf32> to vector<1x1x128xf32>
      %135 = vector.broadcast %134 : vector<1x1x128xf32> to vector<4x16x128xf32>
      %136 = arith.mulf %131, %135 : vector<4x16x128xf32>
      %137 = arith.addf %130, %136 : vector<4x16x128xf32>
      %c1_i32_52 = arith.constant 1 : i32
      %138 = arith.addi %83, %c1_i32_52 : i32
      %c0_53 = arith.constant 0 : index
      %139 = arith.index_cast %138 : i32 to index
      %c0_54 = arith.constant 0 : index
      %c0_55 = arith.constant 0 : index
      %140 = vector.load %arg2[%c0_53, %139, %c0_54, %c0_55] : memref<1x22x27x128xf32, #tpu.memory_space<vmem>>, vector<1x4x27x128xf32>
      %141 = vector.shape_cast %140 : vector<1x4x27x128xf32> to vector<4x27x128xf32>
      %142 = vector.extract_strided_slice %141 {offsets = [0, 5, 0], sizes = [4, 16, 128], strides = [1, 1, 1]} : vector<4x27x128xf32> to vector<4x16x128xf32>
      %143 = vector.extract_strided_slice %0 {offsets = [1, 0, 0], sizes = [1, 1, 128], strides = [1, 1, 1]} : vector<7x7x128xf32> to vector<1x1x128xf32>
      %144 = vector.shape_cast %143 : vector<1x1x128xf32> to vector<128xf32>
      %145 = vector.shape_cast %144 : vector<128xf32> to vector<1x1x128xf32>
      %146 = vector.broadcast %145 : vector<1x1x128xf32> to vector<4x16x128xf32>
      %147 = arith.mulf %142, %146 : vector<4x16x128xf32>
      %148 = arith.addf %137, %147 : vector<4x16x128xf32>
      %149 = vector.extract_strided_slice %141 {offsets = [0, 6, 0], sizes = [4, 16, 128], strides = [1, 1, 1]} : vector<4x27x128xf32> to vector<4x16x128xf32>
      %150 = vector.extract_strided_slice %0 {offsets = [1, 1, 0], sizes = [1, 1, 128], strides = [1, 1, 1]} : vector<7x7x128xf32> to vector<1x1x128xf32>
      %151 = vector.shape_cast %150 : vector<1x1x128xf32> to vector<128xf32>
      %152 = vector.shape_cast %151 : vector<128xf32> to vector<1x1x128xf32>
      %153 = vector.broadcast %152 : vector<1x1x128xf32> to vector<4x16x128xf32>
      %154 = arith.mulf %149, %153 : vector<4x16x128xf32>
      %155 = arith.addf %148, %154 : vector<4x16x128xf32>
      %156 = vector.extract_strided_slice %141 {offsets = [0, 7, 0], sizes = [4, 16, 128], strides = [1, 1, 1]} : vector<4x27x128xf32> to vector<4x16x128xf32>
      %157 = vector.extract_strided_slice %0 {offsets = [1, 2, 0], sizes = [1, 1, 128], strides = [1, 1, 1]} : vector<7x7x128xf32> to vector<1x1x128xf32>
      %158 = vector.shape_cast %157 : vector<1x1x128xf32> to vector<128xf32>
      %159 = vector.shape_cast %158 : vector<128xf32> to vector<1x1x128xf32>
      %160 = vector.broadcast %159 : vector<1x1x128xf32> to vector<4x16x128xf32>
      %161 = arith.mulf %156, %160 : vector<4x16x128xf32>
      %162 = arith.addf %155, %161 : vector<4x16x128xf32>
      %163 = vector.extract_strided_slice %141 {offsets = [0, 8, 0], sizes = [4, 16, 128], strides = [1, 1, 1]} : vector<4x27x128xf32> to vector<4x16x128xf32>
      %164 = vector.extract_strided_slice %0 {offsets = [1, 3, 0], sizes = [1, 1, 128], strides = [1, 1, 1]} : vector<7x7x128xf32> to vector<1x1x128xf32>
      %165 = vector.shape_cast %164 : vector<1x1x128xf32> to vector<128xf32>
      %166 = vector.shape_cast %165 : vector<128xf32> to vector<1x1x128xf32>
      %167 = vector.broadcast %166 : vector<1x1x128xf32> to vector<4x16x128xf32>
      %168 = arith.mulf %163, %167 : vector<4x16x128xf32>
      %169 = arith.addf %162, %168 : vector<4x16x128xf32>
      %170 = vector.extract_strided_slice %141 {offsets = [0, 9, 0], sizes = [4, 16, 128], strides = [1, 1, 1]} : vector<4x27x128xf32> to vector<4x16x128xf32>
      %171 = vector.extract_strided_slice %0 {offsets = [1, 4, 0], sizes = [1, 1, 128], strides = [1, 1, 1]} : vector<7x7x128xf32> to vector<1x1x128xf32>
      %172 = vector.shape_cast %171 : vector<1x1x128xf32> to vector<128xf32>
      %173 = vector.shape_cast %172 : vector<128xf32> to vector<1x1x128xf32>
      %174 = vector.broadcast %173 : vector<1x1x128xf32> to vector<4x16x128xf32>
      %175 = arith.mulf %170, %174 : vector<4x16x128xf32>
      %176 = arith.addf %169, %175 : vector<4x16x128xf32>
      %177 = vector.extract_strided_slice %141 {offsets = [0, 10, 0], sizes = [4, 16, 128], strides = [1, 1, 1]} : vector<4x27x128xf32> to vector<4x16x128xf32>
      %178 = vector.extract_strided_slice %0 {offsets = [1, 5, 0], sizes = [1, 1, 128], strides = [1, 1, 1]} : vector<7x7x128xf32> to vector<1x1x128xf32>
      %179 = vector.shape_cast %178 : vector<1x1x128xf32> to vector<128xf32>
      %180 = vector.shape_cast %179 : vector<128xf32> to vector<1x1x128xf32>
      %181 = vector.broadcast %180 : vector<1x1x128xf32> to vector<4x16x128xf32>
      %182 = arith.mulf %177, %181 : vector<4x16x128xf32>
      %183 = arith.addf %176, %182 : vector<4x16x128xf32>
      %184 = vector.extract_strided_slice %141 {offsets = [0, 11, 0], sizes = [4, 16, 128], strides = [1, 1, 1]} : vector<4x27x128xf32> to vector<4x16x128xf32>
      %185 = vector.extract_strided_slice %0 {offsets = [1, 6, 0], sizes = [1, 1, 128], strides = [1, 1, 1]} : vector<7x7x128xf32> to vector<1x1x128xf32>
      %186 = vector.shape_cast %185 : vector<1x1x128xf32> to vector<128xf32>
      %187 = vector.shape_cast %186 : vector<128xf32> to vector<1x1x128xf32>
      %188 = vector.broadcast %187 : vector<1x1x128xf32> to vector<4x16x128xf32>
      %189 = arith.mulf %184, %188 : vector<4x16x128xf32>
      %190 = arith.addf %183, %189 : vector<4x16x128xf32>
      %c2_i32 = arith.constant 2 : i32
      %191 = arith.addi %83, %c2_i32 : i32
      %c0_56 = arith.constant 0 : index
      %192 = arith.index_cast %191 : i32 to index
      %c0_57 = arith.constant 0 : index
      %c0_58 = arith.constant 0 : index
      %193 = vector.load %arg2[%c0_56, %192, %c0_57, %c0_58] : memref<1x22x27x128xf32, #tpu.memory_space<vmem>>, vector<1x4x27x128xf32>
      %194 = vector.shape_cast %193 : vector<1x4x27x128xf32> to vector<4x27x128xf32>
      %195 = vector.extract_strided_slice %194 {offsets = [0, 5, 0], sizes = [4, 16, 128], strides = [1, 1, 1]} : vector<4x27x128xf32> to vector<4x16x128xf32>
      %196 = vector.extract_strided_slice %0 {offsets = [2, 0, 0], sizes = [1, 1, 128], strides = [1, 1, 1]} : vector<7x7x128xf32> to vector<1x1x128xf32>
      %197 = vector.shape_cast %196 : vector<1x1x128xf32> to vector<128xf32>
      %198 = vector.shape_cast %197 : vector<128xf32> to vector<1x1x128xf32>
      %199 = vector.broadcast %198 : vector<1x1x128xf32> to vector<4x16x128xf32>
      %200 = arith.mulf %195, %199 : vector<4x16x128xf32>
      %201 = arith.addf %190, %200 : vector<4x16x128xf32>
      %202 = vector.extract_strided_slice %194 {offsets = [0, 6, 0], sizes = [4, 16, 128], strides = [1, 1, 1]} : vector<4x27x128xf32> to vector<4x16x128xf32>
      %203 = vector.extract_strided_slice %0 {offsets = [2, 1, 0], sizes = [1, 1, 128], strides = [1, 1, 1]} : vector<7x7x128xf32> to vector<1x1x128xf32>
      %204 = vector.shape_cast %203 : vector<1x1x128xf32> to vector<128xf32>
      %205 = vector.shape_cast %204 : vector<128xf32> to vector<1x1x128xf32>
      %206 = vector.broadcast %205 : vector<1x1x128xf32> to vector<4x16x128xf32>
      %207 = arith.mulf %202, %206 : vector<4x16x128xf32>
      %208 = arith.addf %201, %207 : vector<4x16x128xf32>
      %209 = vector.extract_strided_slice %194 {offsets = [0, 7, 0], sizes = [4, 16, 128], strides = [1, 1, 1]} : vector<4x27x128xf32> to vector<4x16x128xf32>
      %210 = vector.extract_strided_slice %0 {offsets = [2, 2, 0], sizes = [1, 1, 128], strides = [1, 1, 1]} : vector<7x7x128xf32> to vector<1x1x128xf32>
      %211 = vector.shape_cast %210 : vector<1x1x128xf32> to vector<128xf32>
      %212 = vector.shape_cast %211 : vector<128xf32> to vector<1x1x128xf32>
      %213 = vector.broadcast %212 : vector<1x1x128xf32> to vector<4x16x128xf32>
      %214 = arith.mulf %209, %213 : vector<4x16x128xf32>
      %215 = arith.addf %208, %214 : vector<4x16x128xf32>
      %216 = vector.extract_strided_slice %194 {offsets = [0, 8, 0], sizes = [4, 16, 128], strides = [1, 1, 1]} : vector<4x27x128xf32> to vector<4x16x128xf32>
      %217 = vector.extract_strided_slice %0 {offsets = [2, 3, 0], sizes = [1, 1, 128], strides = [1, 1, 1]} : vector<7x7x128xf32> to vector<1x1x128xf32>
      %218 = vector.shape_cast %217 : vector<1x1x128xf32> to vector<128xf32>
      %219 = vector.shape_cast %218 : vector<128xf32> to vector<1x1x128xf32>
      %220 = vector.broadcast %219 : vector<1x1x128xf32> to vector<4x16x128xf32>
      %221 = arith.mulf %216, %220 : vector<4x16x128xf32>
      %222 = arith.addf %215, %221 : vector<4x16x128xf32>
      %223 = vector.extract_strided_slice %194 {offsets = [0, 9, 0], sizes = [4, 16, 128], strides = [1, 1, 1]} : vector<4x27x128xf32> to vector<4x16x128xf32>
      %224 = vector.extract_strided_slice %0 {offsets = [2, 4, 0], sizes = [1, 1, 128], strides = [1, 1, 1]} : vector<7x7x128xf32> to vector<1x1x128xf32>
      %225 = vector.shape_cast %224 : vector<1x1x128xf32> to vector<128xf32>
      %226 = vector.shape_cast %225 : vector<128xf32> to vector<1x1x128xf32>
      %227 = vector.broadcast %226 : vector<1x1x128xf32> to vector<4x16x128xf32>
      %228 = arith.mulf %223, %227 : vector<4x16x128xf32>
      %229 = arith.addf %222, %228 : vector<4x16x128xf32>
      %230 = vector.extract_strided_slice %194 {offsets = [0, 10, 0], sizes = [4, 16, 128], strides = [1, 1, 1]} : vector<4x27x128xf32> to vector<4x16x128xf32>
      %231 = vector.extract_strided_slice %0 {offsets = [2, 5, 0], sizes = [1, 1, 128], strides = [1, 1, 1]} : vector<7x7x128xf32> to vector<1x1x128xf32>
      %232 = vector.shape_cast %231 : vector<1x1x128xf32> to vector<128xf32>
      %233 = vector.shape_cast %232 : vector<128xf32> to vector<1x1x128xf32>
      %234 = vector.broadcast %233 : vector<1x1x128xf32> to vector<4x16x128xf32>
      %235 = arith.mulf %230, %234 : vector<4x16x128xf32>
      %236 = arith.addf %229, %235 : vector<4x16x128xf32>
      %237 = vector.extract_strided_slice %194 {offsets = [0, 11, 0], sizes = [4, 16, 128], strides = [1, 1, 1]} : vector<4x27x128xf32> to vector<4x16x128xf32>
      %238 = vector.extract_strided_slice %0 {offsets = [2, 6, 0], sizes = [1, 1, 128], strides = [1, 1, 1]} : vector<7x7x128xf32> to vector<1x1x128xf32>
      %239 = vector.shape_cast %238 : vector<1x1x128xf32> to vector<128xf32>
      %240 = vector.shape_cast %239 : vector<128xf32> to vector<1x1x128xf32>
      %241 = vector.broadcast %240 : vector<1x1x128xf32> to vector<4x16x128xf32>
      %242 = arith.mulf %237, %241 : vector<4x16x128xf32>
      %243 = arith.addf %236, %242 : vector<4x16x128xf32>
      %c3_i32 = arith.constant 3 : i32
      %244 = arith.addi %83, %c3_i32 : i32
      %c0_59 = arith.constant 0 : index
      %245 = arith.index_cast %244 : i32 to index
      %c0_60 = arith.constant 0 : index
      %c0_61 = arith.constant 0 : index
      %246 = vector.load %arg2[%c0_59, %245, %c0_60, %c0_61] : memref<1x22x27x128xf32, #tpu.memory_space<vmem>>, vector<1x4x27x128xf32>
      %247 = vector.shape_cast %246 : vector<1x4x27x128xf32> to vector<4x27x128xf32>
      %248 = vector.extract_strided_slice %247 {offsets = [0, 5, 0], sizes = [4, 16, 128], strides = [1, 1, 1]} : vector<4x27x128xf32> to vector<4x16x128xf32>
      %249 = vector.extract_strided_slice %0 {offsets = [3, 0, 0], sizes = [1, 1, 128], strides = [1, 1, 1]} : vector<7x7x128xf32> to vector<1x1x128xf32>
      %250 = vector.shape_cast %249 : vector<1x1x128xf32> to vector<128xf32>
      %251 = vector.shape_cast %250 : vector<128xf32> to vector<1x1x128xf32>
      %252 = vector.broadcast %251 : vector<1x1x128xf32> to vector<4x16x128xf32>
      %253 = arith.mulf %248, %252 : vector<4x16x128xf32>
      %254 = arith.addf %243, %253 : vector<4x16x128xf32>
      %255 = vector.extract_strided_slice %247 {offsets = [0, 6, 0], sizes = [4, 16, 128], strides = [1, 1, 1]} : vector<4x27x128xf32> to vector<4x16x128xf32>
      %256 = vector.extract_strided_slice %0 {offsets = [3, 1, 0], sizes = [1, 1, 128], strides = [1, 1, 1]} : vector<7x7x128xf32> to vector<1x1x128xf32>
      %257 = vector.shape_cast %256 : vector<1x1x128xf32> to vector<128xf32>
      %258 = vector.shape_cast %257 : vector<128xf32> to vector<1x1x128xf32>
      %259 = vector.broadcast %258 : vector<1x1x128xf32> to vector<4x16x128xf32>
      %260 = arith.mulf %255, %259 : vector<4x16x128xf32>
      %261 = arith.addf %254, %260 : vector<4x16x128xf32>
      %262 = vector.extract_strided_slice %247 {offsets = [0, 7, 0], sizes = [4, 16, 128], strides = [1, 1, 1]} : vector<4x27x128xf32> to vector<4x16x128xf32>
      %263 = vector.extract_strided_slice %0 {offsets = [3, 2, 0], sizes = [1, 1, 128], strides = [1, 1, 1]} : vector<7x7x128xf32> to vector<1x1x128xf32>
      %264 = vector.shape_cast %263 : vector<1x1x128xf32> to vector<128xf32>
      %265 = vector.shape_cast %264 : vector<128xf32> to vector<1x1x128xf32>
      %266 = vector.broadcast %265 : vector<1x1x128xf32> to vector<4x16x128xf32>
      %267 = arith.mulf %262, %266 : vector<4x16x128xf32>
      %268 = arith.addf %261, %267 : vector<4x16x128xf32>
      %269 = vector.extract_strided_slice %247 {offsets = [0, 8, 0], sizes = [4, 16, 128], strides = [1, 1, 1]} : vector<4x27x128xf32> to vector<4x16x128xf32>
      %270 = vector.extract_strided_slice %0 {offsets = [3, 3, 0], sizes = [1, 1, 128], strides = [1, 1, 1]} : vector<7x7x128xf32> to vector<1x1x128xf32>
      %271 = vector.shape_cast %270 : vector<1x1x128xf32> to vector<128xf32>
      %272 = vector.shape_cast %271 : vector<128xf32> to vector<1x1x128xf32>
      %273 = vector.broadcast %272 : vector<1x1x128xf32> to vector<4x16x128xf32>
      %274 = arith.mulf %269, %273 : vector<4x16x128xf32>
      %275 = arith.addf %268, %274 : vector<4x16x128xf32>
      %276 = vector.extract_strided_slice %247 {offsets = [0, 9, 0], sizes = [4, 16, 128], strides = [1, 1, 1]} : vector<4x27x128xf32> to vector<4x16x128xf32>
      %277 = vector.extract_strided_slice %0 {offsets = [3, 4, 0], sizes = [1, 1, 128], strides = [1, 1, 1]} : vector<7x7x128xf32> to vector<1x1x128xf32>
      %278 = vector.shape_cast %277 : vector<1x1x128xf32> to vector<128xf32>
      %279 = vector.shape_cast %278 : vector<128xf32> to vector<1x1x128xf32>
      %280 = vector.broadcast %279 : vector<1x1x128xf32> to vector<4x16x128xf32>
      %281 = arith.mulf %276, %280 : vector<4x16x128xf32>
      %282 = arith.addf %275, %281 : vector<4x16x128xf32>
      %283 = vector.extract_strided_slice %247 {offsets = [0, 10, 0], sizes = [4, 16, 128], strides = [1, 1, 1]} : vector<4x27x128xf32> to vector<4x16x128xf32>
      %284 = vector.extract_strided_slice %0 {offsets = [3, 5, 0], sizes = [1, 1, 128], strides = [1, 1, 1]} : vector<7x7x128xf32> to vector<1x1x128xf32>
      %285 = vector.shape_cast %284 : vector<1x1x128xf32> to vector<128xf32>
      %286 = vector.shape_cast %285 : vector<128xf32> to vector<1x1x128xf32>
      %287 = vector.broadcast %286 : vector<1x1x128xf32> to vector<4x16x128xf32>
      %288 = arith.mulf %283, %287 : vector<4x16x128xf32>
      %289 = arith.addf %282, %288 : vector<4x16x128xf32>
      %290 = vector.extract_strided_slice %247 {offsets = [0, 11, 0], sizes = [4, 16, 128], strides = [1, 1, 1]} : vector<4x27x128xf32> to vector<4x16x128xf32>
      %291 = vector.extract_strided_slice %0 {offsets = [3, 6, 0], sizes = [1, 1, 128], strides = [1, 1, 1]} : vector<7x7x128xf32> to vector<1x1x128xf32>
      %292 = vector.shape_cast %291 : vector<1x1x128xf32> to vector<128xf32>
      %293 = vector.shape_cast %292 : vector<128xf32> to vector<1x1x128xf32>
      %294 = vector.broadcast %293 : vector<1x1x128xf32> to vector<4x16x128xf32>
      %295 = arith.mulf %290, %294 : vector<4x16x128xf32>
      %296 = arith.addf %289, %295 : vector<4x16x128xf32>
      %c4_i32_62 = arith.constant 4 : i32
      %297 = arith.addi %83, %c4_i32_62 : i32
      %c0_63 = arith.constant 0 : index
      %298 = arith.index_cast %297 : i32 to index
      %c0_64 = arith.constant 0 : index
      %c0_65 = arith.constant 0 : index
      %299 = vector.load %arg2[%c0_63, %298, %c0_64, %c0_65] : memref<1x22x27x128xf32, #tpu.memory_space<vmem>>, vector<1x4x27x128xf32>
      %300 = vector.shape_cast %299 : vector<1x4x27x128xf32> to vector<4x27x128xf32>
      %301 = vector.extract_strided_slice %300 {offsets = [0, 5, 0], sizes = [4, 16, 128], strides = [1, 1, 1]} : vector<4x27x128xf32> to vector<4x16x128xf32>
      %302 = vector.extract_strided_slice %0 {offsets = [4, 0, 0], sizes = [1, 1, 128], strides = [1, 1, 1]} : vector<7x7x128xf32> to vector<1x1x128xf32>
      %303 = vector.shape_cast %302 : vector<1x1x128xf32> to vector<128xf32>
      %304 = vector.shape_cast %303 : vector<128xf32> to vector<1x1x128xf32>
      %305 = vector.broadcast %304 : vector<1x1x128xf32> to vector<4x16x128xf32>
      %306 = arith.mulf %301, %305 : vector<4x16x128xf32>
      %307 = arith.addf %296, %306 : vector<4x16x128xf32>
      %308 = vector.extract_strided_slice %300 {offsets = [0, 6, 0], sizes = [4, 16, 128], strides = [1, 1, 1]} : vector<4x27x128xf32> to vector<4x16x128xf32>
      %309 = vector.extract_strided_slice %0 {offsets = [4, 1, 0], sizes = [1, 1, 128], strides = [1, 1, 1]} : vector<7x7x128xf32> to vector<1x1x128xf32>
      %310 = vector.shape_cast %309 : vector<1x1x128xf32> to vector<128xf32>
      %311 = vector.shape_cast %310 : vector<128xf32> to vector<1x1x128xf32>
      %312 = vector.broadcast %311 : vector<1x1x128xf32> to vector<4x16x128xf32>
      %313 = arith.mulf %308, %312 : vector<4x16x128xf32>
      %314 = arith.addf %307, %313 : vector<4x16x128xf32>
      %315 = vector.extract_strided_slice %300 {offsets = [0, 7, 0], sizes = [4, 16, 128], strides = [1, 1, 1]} : vector<4x27x128xf32> to vector<4x16x128xf32>
      %316 = vector.extract_strided_slice %0 {offsets = [4, 2, 0], sizes = [1, 1, 128], strides = [1, 1, 1]} : vector<7x7x128xf32> to vector<1x1x128xf32>
      %317 = vector.shape_cast %316 : vector<1x1x128xf32> to vector<128xf32>
      %318 = vector.shape_cast %317 : vector<128xf32> to vector<1x1x128xf32>
      %319 = vector.broadcast %318 : vector<1x1x128xf32> to vector<4x16x128xf32>
      %320 = arith.mulf %315, %319 : vector<4x16x128xf32>
      %321 = arith.addf %314, %320 : vector<4x16x128xf32>
      %322 = vector.extract_strided_slice %300 {offsets = [0, 8, 0], sizes = [4, 16, 128], strides = [1, 1, 1]} : vector<4x27x128xf32> to vector<4x16x128xf32>
      %323 = vector.extract_strided_slice %0 {offsets = [4, 3, 0], sizes = [1, 1, 128], strides = [1, 1, 1]} : vector<7x7x128xf32> to vector<1x1x128xf32>
      %324 = vector.shape_cast %323 : vector<1x1x128xf32> to vector<128xf32>
      %325 = vector.shape_cast %324 : vector<128xf32> to vector<1x1x128xf32>
      %326 = vector.broadcast %325 : vector<1x1x128xf32> to vector<4x16x128xf32>
      %327 = arith.mulf %322, %326 : vector<4x16x128xf32>
      %328 = arith.addf %321, %327 : vector<4x16x128xf32>
      %329 = vector.extract_strided_slice %300 {offsets = [0, 9, 0], sizes = [4, 16, 128], strides = [1, 1, 1]} : vector<4x27x128xf32> to vector<4x16x128xf32>
      %330 = vector.extract_strided_slice %0 {offsets = [4, 4, 0], sizes = [1, 1, 128], strides = [1, 1, 1]} : vector<7x7x128xf32> to vector<1x1x128xf32>
      %331 = vector.shape_cast %330 : vector<1x1x128xf32> to vector<128xf32>
      %332 = vector.shape_cast %331 : vector<128xf32> to vector<1x1x128xf32>
      %333 = vector.broadcast %332 : vector<1x1x128xf32> to vector<4x16x128xf32>
      %334 = arith.mulf %329, %333 : vector<4x16x128xf32>
      %335 = arith.addf %328, %334 : vector<4x16x128xf32>
      %336 = vector.extract_strided_slice %300 {offsets = [0, 10, 0], sizes = [4, 16, 128], strides = [1, 1, 1]} : vector<4x27x128xf32> to vector<4x16x128xf32>
      %337 = vector.extract_strided_slice %0 {offsets = [4, 5, 0], sizes = [1, 1, 128], strides = [1, 1, 1]} : vector<7x7x128xf32> to vector<1x1x128xf32>
      %338 = vector.shape_cast %337 : vector<1x1x128xf32> to vector<128xf32>
      %339 = vector.shape_cast %338 : vector<128xf32> to vector<1x1x128xf32>
      %340 = vector.broadcast %339 : vector<1x1x128xf32> to vector<4x16x128xf32>
      %341 = arith.mulf %336, %340 : vector<4x16x128xf32>
      %342 = arith.addf %335, %341 : vector<4x16x128xf32>
      %343 = vector.extract_strided_slice %300 {offsets = [0, 11, 0], sizes = [4, 16, 128], strides = [1, 1, 1]} : vector<4x27x128xf32> to vector<4x16x128xf32>
      %344 = vector.extract_strided_slice %0 {offsets = [4, 6, 0], sizes = [1, 1, 128], strides = [1, 1, 1]} : vector<7x7x128xf32> to vector<1x1x128xf32>
      %345 = vector.shape_cast %344 : vector<1x1x128xf32> to vector<128xf32>
      %346 = vector.shape_cast %345 : vector<128xf32> to vector<1x1x128xf32>
      %347 = vector.broadcast %346 : vector<1x1x128xf32> to vector<4x16x128xf32>
      %348 = arith.mulf %343, %347 : vector<4x16x128xf32>
      %349 = arith.addf %342, %348 : vector<4x16x128xf32>
      %c5_i32 = arith.constant 5 : i32
      %350 = arith.addi %83, %c5_i32 : i32
      %c0_66 = arith.constant 0 : index
      %351 = arith.index_cast %350 : i32 to index
      %c0_67 = arith.constant 0 : index
      %c0_68 = arith.constant 0 : index
      %352 = vector.load %arg2[%c0_66, %351, %c0_67, %c0_68] : memref<1x22x27x128xf32, #tpu.memory_space<vmem>>, vector<1x4x27x128xf32>
      %353 = vector.shape_cast %352 : vector<1x4x27x128xf32> to vector<4x27x128xf32>
      %354 = vector.extract_strided_slice %353 {offsets = [0, 5, 0], sizes = [4, 16, 128], strides = [1, 1, 1]} : vector<4x27x128xf32> to vector<4x16x128xf32>
      %355 = vector.extract_strided_slice %0 {offsets = [5, 0, 0], sizes = [1, 1, 128], strides = [1, 1, 1]} : vector<7x7x128xf32> to vector<1x1x128xf32>
      %356 = vector.shape_cast %355 : vector<1x1x128xf32> to vector<128xf32>
      %357 = vector.shape_cast %356 : vector<128xf32> to vector<1x1x128xf32>
      %358 = vector.broadcast %357 : vector<1x1x128xf32> to vector<4x16x128xf32>
      %359 = arith.mulf %354, %358 : vector<4x16x128xf32>
      %360 = arith.addf %349, %359 : vector<4x16x128xf32>
      %361 = vector.extract_strided_slice %353 {offsets = [0, 6, 0], sizes = [4, 16, 128], strides = [1, 1, 1]} : vector<4x27x128xf32> to vector<4x16x128xf32>
      %362 = vector.extract_strided_slice %0 {offsets = [5, 1, 0], sizes = [1, 1, 128], strides = [1, 1, 1]} : vector<7x7x128xf32> to vector<1x1x128xf32>
      %363 = vector.shape_cast %362 : vector<1x1x128xf32> to vector<128xf32>
      %364 = vector.shape_cast %363 : vector<128xf32> to vector<1x1x128xf32>
      %365 = vector.broadcast %364 : vector<1x1x128xf32> to vector<4x16x128xf32>
      %366 = arith.mulf %361, %365 : vector<4x16x128xf32>
      %367 = arith.addf %360, %366 : vector<4x16x128xf32>
      %368 = vector.extract_strided_slice %353 {offsets = [0, 7, 0], sizes = [4, 16, 128], strides = [1, 1, 1]} : vector<4x27x128xf32> to vector<4x16x128xf32>
      %369 = vector.extract_strided_slice %0 {offsets = [5, 2, 0], sizes = [1, 1, 128], strides = [1, 1, 1]} : vector<7x7x128xf32> to vector<1x1x128xf32>
      %370 = vector.shape_cast %369 : vector<1x1x128xf32> to vector<128xf32>
      %371 = vector.shape_cast %370 : vector<128xf32> to vector<1x1x128xf32>
      %372 = vector.broadcast %371 : vector<1x1x128xf32> to vector<4x16x128xf32>
      %373 = arith.mulf %368, %372 : vector<4x16x128xf32>
      %374 = arith.addf %367, %373 : vector<4x16x128xf32>
      %375 = vector.extract_strided_slice %353 {offsets = [0, 8, 0], sizes = [4, 16, 128], strides = [1, 1, 1]} : vector<4x27x128xf32> to vector<4x16x128xf32>
      %376 = vector.extract_strided_slice %0 {offsets = [5, 3, 0], sizes = [1, 1, 128], strides = [1, 1, 1]} : vector<7x7x128xf32> to vector<1x1x128xf32>
      %377 = vector.shape_cast %376 : vector<1x1x128xf32> to vector<128xf32>
      %378 = vector.shape_cast %377 : vector<128xf32> to vector<1x1x128xf32>
      %379 = vector.broadcast %378 : vector<1x1x128xf32> to vector<4x16x128xf32>
      %380 = arith.mulf %375, %379 : vector<4x16x128xf32>
      %381 = arith.addf %374, %380 : vector<4x16x128xf32>
      %382 = vector.extract_strided_slice %353 {offsets = [0, 9, 0], sizes = [4, 16, 128], strides = [1, 1, 1]} : vector<4x27x128xf32> to vector<4x16x128xf32>
      %383 = vector.extract_strided_slice %0 {offsets = [5, 4, 0], sizes = [1, 1, 128], strides = [1, 1, 1]} : vector<7x7x128xf32> to vector<1x1x128xf32>
      %384 = vector.shape_cast %383 : vector<1x1x128xf32> to vector<128xf32>
      %385 = vector.shape_cast %384 : vector<128xf32> to vector<1x1x128xf32>
      %386 = vector.broadcast %385 : vector<1x1x128xf32> to vector<4x16x128xf32>
      %387 = arith.mulf %382, %386 : vector<4x16x128xf32>
      %388 = arith.addf %381, %387 : vector<4x16x128xf32>
      %389 = vector.extract_strided_slice %353 {offsets = [0, 10, 0], sizes = [4, 16, 128], strides = [1, 1, 1]} : vector<4x27x128xf32> to vector<4x16x128xf32>
      %390 = vector.extract_strided_slice %0 {offsets = [5, 5, 0], sizes = [1, 1, 128], strides = [1, 1, 1]} : vector<7x7x128xf32> to vector<1x1x128xf32>
      %391 = vector.shape_cast %390 : vector<1x1x128xf32> to vector<128xf32>
      %392 = vector.shape_cast %391 : vector<128xf32> to vector<1x1x128xf32>
      %393 = vector.broadcast %392 : vector<1x1x128xf32> to vector<4x16x128xf32>
      %394 = arith.mulf %389, %393 : vector<4x16x128xf32>
      %395 = arith.addf %388, %394 : vector<4x16x128xf32>
      %396 = vector.extract_strided_slice %353 {offsets = [0, 11, 0], sizes = [4, 16, 128], strides = [1, 1, 1]} : vector<4x27x128xf32> to vector<4x16x128xf32>
      %397 = vector.extract_strided_slice %0 {offsets = [5, 6, 0], sizes = [1, 1, 128], strides = [1, 1, 1]} : vector<7x7x128xf32> to vector<1x1x128xf32>
      %398 = vector.shape_cast %397 : vector<1x1x128xf32> to vector<128xf32>
      %399 = vector.shape_cast %398 : vector<128xf32> to vector<1x1x128xf32>
      %400 = vector.broadcast %399 : vector<1x1x128xf32> to vector<4x16x128xf32>
      %401 = arith.mulf %396, %400 : vector<4x16x128xf32>
      %402 = arith.addf %395, %401 : vector<4x16x128xf32>
      %c6_i32 = arith.constant 6 : i32
      %403 = arith.addi %83, %c6_i32 : i32
      %c0_69 = arith.constant 0 : index
      %404 = arith.index_cast %403 : i32 to index
      %c0_70 = arith.constant 0 : index
      %c0_71 = arith.constant 0 : index
      %405 = vector.load %arg2[%c0_69, %404, %c0_70, %c0_71] : memref<1x22x27x128xf32, #tpu.memory_space<vmem>>, vector<1x4x27x128xf32>
      %406 = vector.shape_cast %405 : vector<1x4x27x128xf32> to vector<4x27x128xf32>
      %407 = vector.extract_strided_slice %406 {offsets = [0, 5, 0], sizes = [4, 16, 128], strides = [1, 1, 1]} : vector<4x27x128xf32> to vector<4x16x128xf32>
      %408 = vector.extract_strided_slice %0 {offsets = [6, 0, 0], sizes = [1, 1, 128], strides = [1, 1, 1]} : vector<7x7x128xf32> to vector<1x1x128xf32>
      %409 = vector.shape_cast %408 : vector<1x1x128xf32> to vector<128xf32>
      %410 = vector.shape_cast %409 : vector<128xf32> to vector<1x1x128xf32>
      %411 = vector.broadcast %410 : vector<1x1x128xf32> to vector<4x16x128xf32>
      %412 = arith.mulf %407, %411 : vector<4x16x128xf32>
      %413 = arith.addf %402, %412 : vector<4x16x128xf32>
      %414 = vector.extract_strided_slice %406 {offsets = [0, 6, 0], sizes = [4, 16, 128], strides = [1, 1, 1]} : vector<4x27x128xf32> to vector<4x16x128xf32>
      %415 = vector.extract_strided_slice %0 {offsets = [6, 1, 0], sizes = [1, 1, 128], strides = [1, 1, 1]} : vector<7x7x128xf32> to vector<1x1x128xf32>
      %416 = vector.shape_cast %415 : vector<1x1x128xf32> to vector<128xf32>
      %417 = vector.shape_cast %416 : vector<128xf32> to vector<1x1x128xf32>
      %418 = vector.broadcast %417 : vector<1x1x128xf32> to vector<4x16x128xf32>
      %419 = arith.mulf %414, %418 : vector<4x16x128xf32>
      %420 = arith.addf %413, %419 : vector<4x16x128xf32>
      %421 = vector.extract_strided_slice %406 {offsets = [0, 7, 0], sizes = [4, 16, 128], strides = [1, 1, 1]} : vector<4x27x128xf32> to vector<4x16x128xf32>
      %422 = vector.extract_strided_slice %0 {offsets = [6, 2, 0], sizes = [1, 1, 128], strides = [1, 1, 1]} : vector<7x7x128xf32> to vector<1x1x128xf32>
      %423 = vector.shape_cast %422 : vector<1x1x128xf32> to vector<128xf32>
      %424 = vector.shape_cast %423 : vector<128xf32> to vector<1x1x128xf32>
      %425 = vector.broadcast %424 : vector<1x1x128xf32> to vector<4x16x128xf32>
      %426 = arith.mulf %421, %425 : vector<4x16x128xf32>
      %427 = arith.addf %420, %426 : vector<4x16x128xf32>
      %428 = vector.extract_strided_slice %406 {offsets = [0, 8, 0], sizes = [4, 16, 128], strides = [1, 1, 1]} : vector<4x27x128xf32> to vector<4x16x128xf32>
      %429 = vector.extract_strided_slice %0 {offsets = [6, 3, 0], sizes = [1, 1, 128], strides = [1, 1, 1]} : vector<7x7x128xf32> to vector<1x1x128xf32>
      %430 = vector.shape_cast %429 : vector<1x1x128xf32> to vector<128xf32>
      %431 = vector.shape_cast %430 : vector<128xf32> to vector<1x1x128xf32>
      %432 = vector.broadcast %431 : vector<1x1x128xf32> to vector<4x16x128xf32>
      %433 = arith.mulf %428, %432 : vector<4x16x128xf32>
      %434 = arith.addf %427, %433 : vector<4x16x128xf32>
      %435 = vector.extract_strided_slice %406 {offsets = [0, 9, 0], sizes = [4, 16, 128], strides = [1, 1, 1]} : vector<4x27x128xf32> to vector<4x16x128xf32>
      %436 = vector.extract_strided_slice %0 {offsets = [6, 4, 0], sizes = [1, 1, 128], strides = [1, 1, 1]} : vector<7x7x128xf32> to vector<1x1x128xf32>
      %437 = vector.shape_cast %436 : vector<1x1x128xf32> to vector<128xf32>
      %438 = vector.shape_cast %437 : vector<128xf32> to vector<1x1x128xf32>
      %439 = vector.broadcast %438 : vector<1x1x128xf32> to vector<4x16x128xf32>
      %440 = arith.mulf %435, %439 : vector<4x16x128xf32>
      %441 = arith.addf %434, %440 : vector<4x16x128xf32>
      %442 = vector.extract_strided_slice %406 {offsets = [0, 10, 0], sizes = [4, 16, 128], strides = [1, 1, 1]} : vector<4x27x128xf32> to vector<4x16x128xf32>
      %443 = vector.extract_strided_slice %0 {offsets = [6, 5, 0], sizes = [1, 1, 128], strides = [1, 1, 1]} : vector<7x7x128xf32> to vector<1x1x128xf32>
      %444 = vector.shape_cast %443 : vector<1x1x128xf32> to vector<128xf32>
      %445 = vector.shape_cast %444 : vector<128xf32> to vector<1x1x128xf32>
      %446 = vector.broadcast %445 : vector<1x1x128xf32> to vector<4x16x128xf32>
      %447 = arith.mulf %442, %446 : vector<4x16x128xf32>
      %448 = arith.addf %441, %447 : vector<4x16x128xf32>
      %449 = vector.extract_strided_slice %406 {offsets = [0, 11, 0], sizes = [4, 16, 128], strides = [1, 1, 1]} : vector<4x27x128xf32> to vector<4x16x128xf32>
      %450 = vector.extract_strided_slice %0 {offsets = [6, 6, 0], sizes = [1, 1, 128], strides = [1, 1, 1]} : vector<7x7x128xf32> to vector<1x1x128xf32>
      %451 = vector.shape_cast %450 : vector<1x1x128xf32> to vector<128xf32>
      %452 = vector.shape_cast %451 : vector<128xf32> to vector<1x1x128xf32>
      %453 = vector.broadcast %452 : vector<1x1x128xf32> to vector<4x16x128xf32>
      %454 = arith.mulf %449, %453 : vector<4x16x128xf32>
      %455 = arith.addf %448, %454 : vector<4x16x128xf32>
      %456 = vector.shape_cast %2 : vector<128xf32> to vector<1x1x128xf32>
      %457 = vector.broadcast %456 : vector<1x1x128xf32> to vector<4x16x128xf32>
      %458 = arith.addf %455, %457 : vector<4x16x128xf32>
      %cst_72 = arith.constant dense<0.000000e+00> : vector<4x16xf32>
      %459 = vector.multi_reduction <add>, %458, %cst_72 [2] : vector<4x16x128xf32> to vector<4x16xf32>
      %460 = vector.shape_cast %459 : vector<4x16xf32> to vector<4x16x1xf32>
      %cst_73 = arith.constant 2.500000e-01 : f32
      %461 = vector.broadcast %cst_73 : f32 to vector<4x16x1xf32>
      %462 = arith.mulf %460, %461 : vector<4x16x1xf32>
      %463 = vector.broadcast %462 : vector<4x16x1xf32> to vector<4x16x128xf32>
      %464 = arith.subf %458, %463 : vector<4x16x128xf32>
      %465 = vector.broadcast %11 : vector<1x1x128xf32> to vector<4x16x128xf32>
      %466 = arith.mulf %464, %465 : vector<4x16x128xf32>
      %467 = arith.mulf %466, %466 : vector<4x16x128xf32>
      %cst_74 = arith.constant dense<0.000000e+00> : vector<4x16xf32>
      %468 = vector.multi_reduction <add>, %467, %cst_74 [2] : vector<4x16x128xf32> to vector<4x16xf32>
      %469 = vector.shape_cast %468 : vector<4x16xf32> to vector<4x16x1xf32>
      %cst_75 = arith.constant 2.500000e-01 : f32
      %470 = vector.broadcast %cst_75 : f32 to vector<4x16x1xf32>
      %471 = arith.mulf %469, %470 : vector<4x16x1xf32>
      %cst_76 = arith.constant 9.99999997E-7 : f32
      %472 = vector.broadcast %cst_76 : f32 to vector<4x16x1xf32>
      %473 = arith.addf %471, %472 : vector<4x16x1xf32>
      %474 = math.rsqrt %473 : vector<4x16x1xf32>
      %475 = vector.broadcast %474 : vector<4x16x1xf32> to vector<4x16x128xf32>
      %476 = arith.mulf %466, %475 : vector<4x16x128xf32>
      %477 = vector.shape_cast %4 : vector<128xf32> to vector<1x1x128xf32>
      %478 = vector.broadcast %477 : vector<1x1x128xf32> to vector<4x16x128xf32>
      %479 = arith.mulf %476, %478 : vector<4x16x128xf32>
      %480 = vector.shape_cast %6 : vector<128xf32> to vector<1x1x128xf32>
      %481 = vector.broadcast %480 : vector<1x1x128xf32> to vector<4x16x128xf32>
      %482 = arith.addf %479, %481 : vector<4x16x128xf32>
      %483 = arith.index_cast %83 : i32 to index
      %c0_77 = arith.constant 0 : index
      %c0_78 = arith.constant 0 : index
      %484 = vector.load %arg13[%483, %c0_77, %c0_78] : memref<16x16x128xf32, #tpu.memory_space<vmem>>, vector<4x16x128xf32>
      tpu.vector_store %arg13[%483, %c0_77, %c0_78], %482 {strides = array<i32>} : memref<16x16x128xf32, #tpu.memory_space<vmem>>, vector<4x16x128xf32>,
    }
    %c4_i32_9 = arith.constant 4 : i32
    %c0_10 = arith.constant 0 : index
    %c0_11 = arith.constant 0 : index
    %c0_12 = arith.constant 0 : index
    %13 = vector.load %arg13[%c0_10, %c0_11, %c0_12] : memref<16x16x128xf32, #tpu.memory_space<vmem>>, vector<16x16x128xf32>
    %14 = vector.shape_cast %13 : vector<16x16x128xf32> to vector<256x128xf32>
    %cst = arith.constant 0.000000e+00 : f32
    %15 = vector.broadcast %cst : f32 to vector<256x128xf32>
    %c0_13 = arith.constant 0 : index
    %c0_14 = arith.constant 0 : index
    %16 = vector.load %arg7[%c0_13, %c0_14] : memref<128x128xf32, #tpu.memory_space<vmem>>, vector<128x128xf32>
    %cst_15 = arith.constant dense<0.000000e+00> : vector<256x128xf32>
    %17 = tpu.matmul %14, %16, %cst_15 {dimension_numbers = #tpu.dot_dimension_numbers<[1], [0], [0], [1], [0, 0, 1, 1], [], []>} : vector<256x128xf32>, vector<128x128xf32>, vector<256x128xf32> -> vector<256x128xf32>
    %c0_16 = arith.constant 0 : index
    %c0_17 = arith.constant 0 : index
    %18 = vector.load %arg8[%c0_16, %c0_17] : memref<1x128xf32, #tpu.memory_space<vmem>>, vector<1x128xf32>
    %19 = vector.shape_cast %18 : vector<1x128xf32> to vector<128xf32>
    %20 = vector.shape_cast %19 : vector<128xf32> to vector<1x128xf32>
    %21 = vector.broadcast %20 : vector<1x128xf32> to vector<256x128xf32>
    %22 = arith.addf %17, %21 : vector<256x128xf32>
    %cst_18 = arith.constant 0.707106769 : f32
    %23 = vector.broadcast %cst_18 : f32 to vector<256x128xf32>
    %24 = arith.mulf %22, %23 : vector<256x128xf32>
    %25 = math.absf %24 : vector<256x128xf32>
    %cst_19 = arith.constant 0.327591091 : f32
    %26 = vector.broadcast %cst_19 : f32 to vector<256x128xf32>
    %27 = arith.mulf %26, %25 : vector<256x128xf32>
    %cst_20 = arith.constant 1.000000e+00 : f32
    %28 = vector.broadcast %cst_20 : f32 to vector<256x128xf32>
    %29 = arith.addf %28, %27 : vector<256x128xf32>
    %cst_21 = arith.constant 1.000000e+00 : f32
    %30 = vector.broadcast %cst_21 : f32 to vector<256x128xf32>
    %31 = arith.divf %30, %29 : vector<256x128xf32>
    %cst_22 = arith.constant 1.06140542 : f32
    %32 = vector.broadcast %cst_22 : f32 to vector<256x128xf32>
    %33 = arith.mulf %32, %31 : vector<256x128xf32>
    %cst_23 = arith.constant 1.45315206 : f32
    %34 = vector.broadcast %cst_23 : f32 to vector<256x128xf32>
    %35 = arith.subf %33, %34 : vector<256x128xf32>
    %36 = arith.mulf %35, %31 : vector<256x128xf32>
    %cst_24 = arith.constant 1.42141378 : f32
    %37 = vector.broadcast %cst_24 : f32 to vector<256x128xf32>
    %38 = arith.addf %36, %37 : vector<256x128xf32>
    %39 = arith.mulf %38, %31 : vector<256x128xf32>
    %cst_25 = arith.constant 0.284496725 : f32
    %40 = vector.broadcast %cst_25 : f32 to vector<256x128xf32>
    %41 = arith.subf %39, %40 : vector<256x128xf32>
    %42 = arith.mulf %41, %31 : vector<256x128xf32>
    %cst_26 = arith.constant 0.254829586 : f32
    %43 = vector.broadcast %cst_26 : f32 to vector<256x128xf32>
    %44 = arith.addf %42, %43 : vector<256x128xf32>
    %45 = arith.mulf %44, %31 : vector<256x128xf32>
    %cst_27 = arith.constant 0.000000e+00 : f32
    %46 = vector.broadcast %cst_27 : f32 to vector<256x128xf32>
    %47 = arith.subf %46, %25 : vector<256x128xf32>
    %48 = arith.mulf %47, %25 : vector<256x128xf32>
    %49 = math.exp %48 : vector<256x128xf32>
    %50 = arith.mulf %45, %49 : vector<256x128xf32>
    %cst_28 = arith.constant 1.000000e+00 : f32
    %51 = vector.broadcast %cst_28 : f32 to vector<256x128xf32>
    %52 = arith.subf %51, %50 : vector<256x128xf32>
    %cst_29 = arith.constant 0.000000e+00 : f32
    %53 = vector.broadcast %cst_29 : f32 to vector<256x128xf32>
    %54 = arith.cmpf olt, %24, %53 : vector<256x128xf32>
    %cst_30 = arith.constant 0.000000e+00 : f32
    %55 = vector.broadcast %cst_30 : f32 to vector<256x128xf32>
    %56 = arith.subf %55, %52 : vector<256x128xf32>
    %57 = arith.select %54, %56, %52 : vector<256x128xi1>, vector<256x128xf32>
    %cst_31 = arith.constant 5.000000e-01 : f32
    %58 = vector.broadcast %cst_31 : f32 to vector<256x128xf32>
    %59 = arith.mulf %58, %22 : vector<256x128xf32>
    %cst_32 = arith.constant 1.000000e+00 : f32
    %60 = vector.broadcast %cst_32 : f32 to vector<256x128xf32>
    %61 = arith.addf %60, %57 : vector<256x128xf32>
    %62 = arith.mulf %59, %61 : vector<256x128xf32>
    %c0_33 = arith.constant 0 : index
    %c0_34 = arith.constant 0 : index
    %63 = vector.load %arg9[%c0_33, %c0_34] : memref<128x128xf32, #tpu.memory_space<vmem>>, vector<128x128xf32>
    %cst_35 = arith.constant dense<0.000000e+00> : vector<256x128xf32>
    %64 = tpu.matmul %62, %63, %cst_35 {dimension_numbers = #tpu.dot_dimension_numbers<[1], [0], [0], [1], [0, 0, 1, 1], [], []>} : vector<256x128xf32>, vector<128x128xf32>, vector<256x128xf32> -> vector<256x128xf32>
    %65 = arith.addf %15, %64 : vector<256x128xf32>
    %c0_36 = arith.constant 0 : index
    %c0_37 = arith.constant 0 : index
    %66 = vector.load %arg10[%c0_36, %c0_37] : memref<1x128xf32, #tpu.memory_space<vmem>>, vector<1x128xf32>
    %67 = vector.shape_cast %66 : vector<1x128xf32> to vector<128xf32>
    %68 = vector.shape_cast %67 : vector<128xf32> to vector<1x128xf32>
    %69 = vector.broadcast %68 : vector<1x128xf32> to vector<256x128xf32>
    %70 = arith.addf %65, %69 : vector<256x128xf32>
    %c0_38 = arith.constant 0 : index
    %c0_39 = arith.constant 0 : index
    %71 = vector.load %arg11[%c0_38, %c0_39] : memref<1x128xf32, #tpu.memory_space<vmem>>, vector<1x128xf32>
    %72 = vector.shape_cast %71 : vector<1x128xf32> to vector<128xf32>
    %73 = vector.shape_cast %72 : vector<128xf32> to vector<1x128xf32>
    %74 = vector.broadcast %73 : vector<1x128xf32> to vector<256x128xf32>
    %75 = arith.mulf %70, %74 : vector<256x128xf32>
    %c0_40 = arith.constant 0 : index
    %c3 = arith.constant 3 : index
    %c8 = arith.constant 8 : index
    %c0_41 = arith.constant 0 : index
    %76 = vector.load %arg2[%c0_40, %c3, %c8, %c0_41] : memref<1x22x27x128xf32, #tpu.memory_space<vmem>>, vector<1x16x16x128xf32>
    %77 = vector.shape_cast %76 : vector<1x16x16x128xf32> to vector<16x16x128xf32>
    %78 = vector.shape_cast %75 : vector<256x128xf32> to vector<16x16x128xf32>
    %79 = arith.addf %77, %78 : vector<16x16x128xf32>
    %c0_42 = arith.constant 0 : index
    %c0_43 = arith.constant 0 : index
    %c0_44 = arith.constant 0 : index
    %c0_45 = arith.constant 0 : index
    %80 = vector.load %arg12[%c0_42, %c0_43, %c0_44, %c0_45] : memref<1x16x16x128xf32, #tpu.memory_space<vmem>>, vector<1x16x16x128xf32>
    %81 = vector.shape_cast %80 : vector<1x16x16x128xf32> to vector<16x16x128xf32>
    %82 = vector.shape_cast %79 : vector<16x16x128xf32> to vector<1x16x16x128xf32>
    tpu.vector_store %arg12[%c0_42, %c0_43, %c0_44, %c0_45], %82 {strides = array<i32>} : memref<1x16x16x128xf32, #tpu.memory_space<vmem>>, vector<1x16x16x128xf32>,
    return
  }
  func.func @transform_0(%arg0: i32, %arg1: i32) -> (i32, i32, i32, i32) {
    %c1_i32 = arith.constant 1 : i32
    %0 = arith.muli %arg0, %c1_i32 : i32
    %1 = arith.addi %0, %arg1 : i32
    %c0_i32 = arith.constant 0 : i32
    %c0_i32_0 = arith.constant 0 : i32
    %c0_i32_1 = arith.constant 0 : i32
    %c0_i32_2 = arith.constant 0 : i32
    return %1, %c0_i32, %c0_i32_0, %c0_i32_1 : i32, i32, i32, i32
  }
  func.func @transform_1(%arg0: i32, %arg1: i32) -> (i32, i32, i32) {
    %c0_i32 = arith.constant 0 : i32
    %c0_i32_0 = arith.constant 0 : i32
    %c0_i32_1 = arith.constant 0 : i32
    %c0_i32_2 = arith.constant 0 : i32
    return %c0_i32, %c0_i32_0, %c0_i32_1 : i32, i32, i32
  }
  func.func @transform_2(%arg0: i32, %arg1: i32) -> (i32, i32) {
    %c0_i32 = arith.constant 0 : i32
    %c0_i32_0 = arith.constant 0 : i32
    %c0_i32_1 = arith.constant 0 : i32
    return %c0_i32, %c0_i32_0 : i32, i32
  }
  func.func @transform_3(%arg0: i32, %arg1: i32) -> (i32, i32) {
    %c0_i32 = arith.constant 0 : i32
    %c0_i32_0 = arith.constant 0 : i32
    %c0_i32_1 = arith.constant 0 : i32
    return %c0_i32, %c0_i32_0 : i32, i32
  }
  func.func @transform_4(%arg0: i32, %arg1: i32) -> (i32, i32) {
    %c0_i32 = arith.constant 0 : i32
    %c0_i32_0 = arith.constant 0 : i32
    %c0_i32_1 = arith.constant 0 : i32
    return %c0_i32, %c0_i32_0 : i32, i32
  }
  func.func @transform_5(%arg0: i32, %arg1: i32) -> (i32, i32) {
    %c0_i32 = arith.constant 0 : i32
    %c0_i32_0 = arith.constant 0 : i32
    %c0_i32_1 = arith.constant 0 : i32
    return %c0_i32, %c0_i32_0 : i32, i32
  }
  func.func @transform_6(%arg0: i32, %arg1: i32) -> (i32, i32) {
    %c0_i32 = arith.constant 0 : i32
    %c0_i32_0 = arith.constant 0 : i32
    %c0_i32_1 = arith.constant 0 : i32
    return %c0_i32, %c0_i32_0 : i32, i32
  }
  func.func @transform_7(%arg0: i32, %arg1: i32) -> (i32, i32) {
    %c0_i32 = arith.constant 0 : i32
    %c0_i32_0 = arith.constant 0 : i32
    %c0_i32_1 = arith.constant 0 : i32
    return %c0_i32, %c0_i32_0 : i32, i32
  }
  func.func @transform_8(%arg0: i32, %arg1: i32) -> (i32, i32) {
    %c0_i32 = arith.constant 0 : i32
    %c0_i32_0 = arith.constant 0 : i32
    %c0_i32_1 = arith.constant 0 : i32
    return %c0_i32, %c0_i32_0 : i32, i32
  }
  func.func @transform_9(%arg0: i32, %arg1: i32) -> (i32, i32) {
    %c0_i32 = arith.constant 0 : i32
    %c0_i32_0 = arith.constant 0 : i32
    %c0_i32_1 = arith.constant 0 : i32
    return %c0_i32, %c0_i32_0 : i32, i32
  }
  func.func @transform_10(%arg0: i32, %arg1: i32) -> (i32, i32, i32, i32) {
    %c0_i32 = arith.constant 0 : i32
    %c0_i32_0 = arith.constant 0 : i32
    %c0_i32_1 = arith.constant 0 : i32
    return %arg0, %arg1, %c0_i32, %c0_i32_0 : i32, i32, i32, i32
  }
}

</mosaic_0001>

<llo_original>
// kernel: tpu_custom_call.1
$region0: #{tpu_custom_call.1}
  #allocation0 [shape = 'u32[]', space=smem, size = 0x4, offset = 0x4, fixed_abs, tag = 'smem constant byte address 0x4 - core index']
  #allocation1 [shape = 'u32[144,128]{1,0:T(1,128)}', space=vmem, size = 0x12000, scoped, tag = 'internal scratch']
  #allocation2 [shape = 'f32[16,16,128]{2,1,0:T(8,128)}', space=vmem, size = 0x20000, scoped, tag = 'scratch operand']
  %s0 = inlined_call_operand.vmem [shape: f32[2,22,27,128], index: 0, kind: input, shape index: {}]
  %s1 = inlined_call_operand.vmem [shape: f32[7,7,128], index: 1, kind: input, shape index: {}]
  %s2 = inlined_call_operand.vmem [shape: f32[1,128], index: 2, kind: input, shape index: {}]
  %s3 = inlined_call_operand.vmem [shape: f32[1,128], index: 3, kind: input, shape index: {}]
  %s4 = inlined_call_operand.vmem [shape: f32[1,128], index: 4, kind: input, shape index: {}]
  %s5 = inlined_call_operand.vmem [shape: f32[128,128], index: 5, kind: input, shape index: {}]
  %s6 = inlined_call_operand.vmem [shape: f32[1,128], index: 6, kind: input, shape index: {}]
  %s7 = inlined_call_operand.vmem [shape: f32[128,128], index: 7, kind: input, shape index: {}]
  %s8 = inlined_call_operand.vmem [shape: f32[1,128], index: 8, kind: input, shape index: {}]
  %s9 = inlined_call_operand.vmem [shape: f32[1,128], index: 9, kind: input, shape index: {}]
  %s10 = inlined_call_operand.hbm [shape: f32[2,16,16,128], index: 10, kind: output, shape index: {}]
  %s11 = sld [smem:[#allocation0]]
  $region80: #{tpu_custom_call.1} parent=0
    _
  %s13 = ssub.s32 1, %s11
  %s14 = scalar_select 0, %s13, %s11
  $region1: #{tpu_custom_call.1} parent=0
    #allocation3 [shape = 'u8[262144]{0}', space=vmem, size = 0x40000, scoped, tag = 'output window, operand 0']
    #allocation4 [shape = 's32[2]{0}', space=sflag, size = 0x8, scoped, tag = 'scoped memory for tpu_custom_call.1']
    %15 = vsyncpa [#allocation4], 0
    %s16 = scalar_lea.sflag [#allocation4], 1
    %17 = vsyncpa %s16, 0
    loop: start=0, step=1, limit=4
    $region2: #{tpu_custom_call.1} parent=1 // loop_pre_header
      _
    $region3: #{tpu_custom_call.1} parent=1 // loop_header
      %s19 = sphi 0, %s23
      %p20 = scmp.ge.s32.totalorder %s19, 4
      %s26 = sphi 0, %s38
      %s27 = sphi 0, %s34
      %s28 = sphi 0, %s26
      %s29 = sphi 0, %s27
      %s30 = sphi 0, %s28
      %s31 = sphi 0, %s29
      %s43 = sphi 0, %s45
      %s46 = sphi 0, %s43
      %s47 = sphi 0, %s46
      %s63 = sphi 0, %s47
      %s67 = sphi 0, %s67
      %s69 = sphi 0, %s67
      %s70 = sphi 0, %s69
      %s84 = sphi 0, %s70
      %s88 = sphi 0, %s88
      %s90 = sphi 0, %s88
      %s91 = sphi 0, %s90
      %s105 = sphi 0, %s91
      %s109 = sphi 0, %s109
      %s111 = sphi 0, %s109
      %s112 = sphi 0, %s111
      %s126 = sphi 0, %s112
      %s130 = sphi 0, %s130
      %s132 = sphi 0, %s130
      %s133 = sphi 0, %s132
      %s147 = sphi 0, %s133
      %s151 = sphi 0, %s151
      %s153 = sphi 0, %s151
      %s154 = sphi 0, %s153
      %s168 = sphi 0, %s154
      %s172 = sphi 0, %s172
      %s174 = sphi 0, %s172
      %s175 = sphi 0, %s174
      %s189 = sphi 0, %s175
      %s193 = sphi 0, %s193
      %s195 = sphi 0, %s193
      %s196 = sphi 0, %s195
      %s210 = sphi 0, %s196
      %s214 = sphi 0, %s214
      %s216 = sphi 0, %s214
      %s217 = sphi 0, %s216
      %s231 = sphi 0, %s217
      %s235 = sphi 0, %s235
      %s237 = sphi 0, %s235
      %s238 = sphi 0, %s237
      %s252 = sphi 0, %s238
      %s260 = sphi 0, %s262
      %s263 = sphi 0, %s260
      %s264 = sphi 0, %s263
      %s280 = sphi 0, %s264
    $region4: #{tpu_custom_call.1} parent=1 // loop_header_branch
      %22 = sbr.rel (%p20) target = $region8
    $region5: #{tpu_custom_call.1} parent=1 // loop_body
      %s24 = ssub.s32 %s19, 1
      %s25 = ssub.s32 %s19, 2
      %s32 = sadd.s32 1, %s27
      %p33 = scmp.ge.s32.totalorder %s32, 1
      %s34 = scalar_select %p33, 0, %s32
      %s35 = sadd.s32 1, %s26
      %s36 = scalar_select %p33, %s35, %s26
      %p37 = scmp.ge.s32.totalorder %s36, 2
      %s38 = scalar_select %p37, 0, %s36
      %s39 = sadd.s32 %s26, %s27
      %s40 = sadd.s32 %s38, %s34
      %s41 = ssub.s32 %s39, %s40
      %p42 = scmp.eq.s32.totalorder %s41, 0
      %s44 = sadd.s32 %s43, 1
      %s45 = scalar_select %p42, %s43, %s44
      %p48 = pneg %p42
      %p49 = scmp.eq.s32.totalorder %s19, 1
      %p50 = por %p48, %p49
      %p51 = scmp.ne.s32.totalorder %s43, %s46
      %p52 = scmp.eq.s32.totalorder %s19, 0
      %p53 = por %p51, %p52
      %p54 = scmp.ne.s32.totalorder %s43, %s46
      %p55 = scmp.eq.s32.totalorder %s24, 1
      %p56 = por %p54, %p55
      %p57 = scmp.ne.s32.totalorder %s46, %s47
      %p58 = scmp.eq.s32.totalorder %s24, 0
      %p59 = por %p57, %p58
      %p60 = scmp.ne.s32.totalorder %s46, %s47
      %p61 = scmp.eq.s32.totalorder %s25, 1
      %p62 = por %p60, %p61
      %p64 = scmp.ne.s32.totalorder %s47, %s63
      %p65 = scmp.eq.s32.totalorder %s25, 0
      %p66 = por %p64, %p65
      %s68 = sadd.s32 %s67, 1
      %p71 = scmp.eq.s32.totalorder %s19, 1
      %p72 = scmp.ne.s32.totalorder %s67, %s69
      %p73 = scmp.eq.s32.totalorder %s19, 0
      %p74 = por %p72, %p73
      %p75 = scmp.ne.s32.totalorder %s67, %s69
      %p76 = scmp.eq.s32.totalorder %s24, 1
      %p77 = por %p75, %p76
      %p78 = scmp.ne.s32.totalorder %s69, %s70
      %p79 = scmp.eq.s32.totalorder %s24, 0
      %p80 = por %p78, %p79
      %p81 = scmp.ne.s32.totalorder %s69, %s70
      %p82 = scmp.eq.s32.totalorder %s25, 1
      %p83 = por %p81, %p82
      %p85 = scmp.ne.s32.totalorder %s70, %s84
      %p86 = scmp.eq.s32.totalorder %s25, 0
      %p87 = por %p85, %p86
      %s89 = sadd.s32 %s88, 1
      %p92 = scmp.eq.s32.totalorder %s19, 1
      %p93 = scmp.ne.s32.totalorder %s88, %s90
      %p94 = scmp.eq.s32.totalorder %s19, 0
      %p95 = por %p93, %p94
      %p96 = scmp.ne.s32.totalorder %s88, %s90
      %p97 = scmp.eq.s32.totalorder %s24, 1
      %p98 = por %p96, %p97
      %p99 = scmp.ne.s32.totalorder %s90, %s91
      %p100 = scmp.eq.s32.totalorder %s24, 0
      %p101 = por %p99, %p100
      %p102 = scmp.ne.s32.totalorder %s90, %s91
      %p103 = scmp.eq.s32.totalorder %s25, 1
      %p104 = por %p102, %p103
      %p106 = scmp.ne.s32.totalorder %s91, %s105
      %p107 = scmp.eq.s32.totalorder %s25, 0
      %p108 = por %p106, %p107
      %s110 = sadd.s32 %s109, 1
      %p113 = scmp.eq.s32.totalorder %s19, 1
      %p114 = scmp.ne.s32.totalorder %s109, %s111
      %p115 = scmp.eq.s32.totalorder %s19, 0
      %p116 = por %p114, %p115
      %p117 = scmp.ne.s32.totalorder %s109, %s111
      %p118 = scmp.eq.s32.totalorder %s24, 1
      %p119 = por %p117, %p118
      %p120 = scmp.ne.s32.totalorder %s111, %s112
      %p121 = scmp.eq.s32.totalorder %s24, 0
      %p122 = por %p120, %p121
      %p123 = scmp.ne.s32.totalorder %s111, %s112
      %p124 = scmp.eq.s32.totalorder %s25, 1
      %p125 = por %p123, %p124
      %p127 = scmp.ne.s32.totalorder %s112, %s126
      %p128 = scmp.eq.s32.totalorder %s25, 0
      %p129 = por %p127, %p128
      %s131 = sadd.s32 %s130, 1
      %p134 = scmp.eq.s32.totalorder %s19, 1
      %p135 = scmp.ne.s32.totalorder %s130, %s132
      %p136 = scmp.eq.s32.totalorder %s19, 0
      %p137 = por %p135, %p136
      %p138 = scmp.ne.s32.totalorder %s130, %s132
      %p139 = scmp.eq.s32.totalorder %s24, 1
      %p140 = por %p138, %p139
      %p141 = scmp.ne.s32.totalorder %s132, %s133
      %p142 = scmp.eq.s32.totalorder %s24, 0
      %p143 = por %p141, %p142
      %p144 = scmp.ne.s32.totalorder %s132, %s133
      %p145 = scmp.eq.s32.totalorder %s25, 1
      %p146 = por %p144, %p145
      %p148 = scmp.ne.s32.totalorder %s133, %s147
      %p149 = scmp.eq.s32.totalorder %s25, 0
      %p150 = por %p148, %p149
      %s152 = sadd.s32 %s151, 1
      %p155 = scmp.eq.s32.totalorder %s19, 1
      %p156 = scmp.ne.s32.totalorder %s151, %s153
      %p157 = scmp.eq.s32.totalorder %s19, 0
      %p158 = por %p156, %p157
      %p159 = scmp.ne.s32.totalorder %s151, %s153
      %p160 = scmp.eq.s32.totalorder %s24, 1
      %p161 = por %p159, %p160
      %p162 = scmp.ne.s32.totalorder %s153, %s154
      %p163 = scmp.eq.s32.totalorder %s24, 0
      %p164 = por %p162, %p163
      %p165 = scmp.ne.s32.totalorder %s153, %s154
      %p166 = scmp.eq.s32.totalorder %s25, 1
      %p167 = por %p165, %p166
      %p169 = scmp.ne.s32.totalorder %s154, %s168
      %p170 = scmp.eq.s32.totalorder %s25, 0
      %p171 = por %p169, %p170
      %s173 = sadd.s32 %s172, 1
      %p176 = scmp.eq.s32.totalorder %s19, 1
      %p177 = scmp.ne.s32.totalorder %s172, %s174
      %p178 = scmp.eq.s32.totalorder %s19, 0
      %p179 = por %p177, %p178
      %p180 = scmp.ne.s32.totalorder %s172, %s174
      %p181 = scmp.eq.s32.totalorder %s24, 1
      %p182 = por %p180, %p181
      %p183 = scmp.ne.s32.totalorder %s174, %s175
      %p184 = scmp.eq.s32.totalorder %s24, 0
      %p185 = por %p183, %p184
      %p186 = scmp.ne.s32.totalorder %s174, %s175
      %p187 = scmp.eq.s32.totalorder %s25, 1
      %p188 = por %p186, %p187
      %p190 = scmp.ne.s32.totalorder %s175, %s189
      %p191 = scmp.eq.s32.totalorder %s25, 0
      %p192 = por %p190, %p191
      %s194 = sadd.s32 %s193, 1
      %p197 = scmp.eq.s32.totalorder %s19, 1
      %p198 = scmp.ne.s32.totalorder %s193, %s195
      %p199 = scmp.eq.s32.totalorder %s19, 0
      %p200 = por %p198, %p199
      %p201 = scmp.ne.s32.totalorder %s193, %s195
      %p202 = scmp.eq.s32.totalorder %s24, 1
      %p203 = por %p201, %p202
      %p204 = scmp.ne.s32.totalorder %s195, %s196
      %p205 = scmp.eq.s32.totalorder %s24, 0
      %p206 = por %p204, %p205
      %p207 = scmp.ne.s32.totalorder %s195, %s196
      %p208 = scmp.eq.s32.totalorder %s25, 1
      %p209 = por %p207, %p208
      %p211 = scmp.ne.s32.totalorder %s196, %s210
      %p212 = scmp.eq.s32.totalorder %s25, 0
      %p213 = por %p211, %p212
      %s215 = sadd.s32 %s214, 1
      %p218 = scmp.eq.s32.totalorder %s19, 1
      %p219 = scmp.ne.s32.totalorder %s214, %s216
      %p220 = scmp.eq.s32.totalorder %s19, 0
      %p221 = por %p219, %p220
      %p222 = scmp.ne.s32.totalorder %s214, %s216
      %p223 = scmp.eq.s32.totalorder %s24, 1
      %p224 = por %p222, %p223
      %p225 = scmp.ne.s32.totalorder %s216, %s217
      %p226 = scmp.eq.s32.totalorder %s24, 0
      %p227 = por %p225, %p226
      %p228 = scmp.ne.s32.totalorder %s216, %s217
      %p229 = scmp.eq.s32.totalorder %s25, 1
      %p230 = por %p228, %p229
      %p232 = scmp.ne.s32.totalorder %s217, %s231
      %p233 = scmp.eq.s32.totalorder %s25, 0
      %p234 = por %p232, %p233
      %s236 = sadd.s32 %s235, 1
      %p239 = scmp.eq.s32.totalorder %s19, 1
      %p240 = scmp.ne.s32.totalorder %s235, %s237
      %p241 = scmp.eq.s32.totalorder %s19, 0
      %p242 = por %p240, %p241
      %p243 = scmp.ne.s32.totalorder %s235, %s237
      %p244 = scmp.eq.s32.totalorder %s24, 1
      %p245 = por %p243, %p244
      %p246 = scmp.ne.s32.totalorder %s237, %s238
      %p247 = scmp.eq.s32.totalorder %s24, 0
      %p248 = por %p246, %p247
      %p249 = scmp.ne.s32.totalorder %s237, %s238
      %p250 = scmp.eq.s32.totalorder %s25, 1
      %p251 = por %p249, %p250
      %p253 = scmp.ne.s32.totalorder %s238, %s252
      %p254 = scmp.eq.s32.totalorder %s25, 0
      %p255 = por %p253, %p254
      %s256 = ssub.s32 %s26, %s38
      %s257 = ssub.s32 %s27, %s34
      %s258 = sor.u32 %s256, %s257
      %p259 = scmp.eq.s32.totalorder %s258, 0
      %s261 = sadd.s32 %s260, 1
      %s262 = scalar_select %p259, %s260, %s261
      %p265 = pneg %p259
      %p266 = scmp.eq.s32.totalorder %s19, 1
      %p267 = por %p265, %p266
      %p268 = scmp.ne.s32.totalorder %s260, %s263
      %p269 = scmp.eq.s32.totalorder %s19, 0
      %p270 = por %p268, %p269
      %p271 = scmp.ne.s32.totalorder %s260, %s263
      %p272 = scmp.eq.s32.totalorder %s24, 1
      %p273 = por %p271, %p272
      %p274 = scmp.ne.s32.totalorder %s263, %s264
      %p275 = scmp.eq.s32.totalorder %s24, 0
      %p276 = por %p274, %p275
      %p277 = scmp.ne.s32.totalorder %s263, %s264
      %p278 = scmp.eq.s32.totalorder %s25, 1
      %p279 = por %p277, %p278
      %p281 = scmp.ne.s32.totalorder %s264, %s280
      %p282 = scmp.eq.s32.totalorder %s25, 0
      %p283 = por %p281, %p282
      %p284 = scmp.le.s32.totalorder 1, %s19
      %p285 = scmp.lt.s32.totalorder %s19, 3
      %p286 = pnand %p284, %p285
      %p287 = pneg %p286
      // Predicated region
      $region9: #{tpu_custom_call.1} parent=5 // pred_check
        _
      $region10: #{tpu_custom_call.1} parent=5 // pred_check_branch
        %289 = sbr.rel (%p286) target = $region12
      $region11: #{tpu_custom_call.1} parent=5 // pred_region
        %s290 = ssub.s32 %s19, 1
        // Predicated region
        $region13: #{tpu_custom_call.1} parent=11 // pred_check
          %p291 = pneg %p80
        $region14: #{tpu_custom_call.1} parent=11 // pred_check_branch
          %293 = sbr.rel (%p291) target = $region16
        $region15: #{tpu_custom_call.1} parent=11 // pred_region
          _
        $region16: #{tpu_custom_call.1} parent=11 // pred_fallthru
          _
        // Predicated region
        $region17: #{tpu_custom_call.1} parent=11 // pred_check
          %p294 = pneg %p101
        $region18: #{tpu_custom_call.1} parent=11 // pred_check_branch
          %296 = sbr.rel (%p294) target = $region20
        $region19: #{tpu_custom_call.1} parent=11 // pred_region
          _
        $region20: #{tpu_custom_call.1} parent=11 // pred_fallthru
          _
        // Predicated region
        $region21: #{tpu_custom_call.1} parent=11 // pred_check
          %p297 = pneg %p122
        $region22: #{tpu_custom_call.1} parent=11 // pred_check_branch
          %299 = sbr.rel (%p297) target = $region24
        $region23: #{tpu_custom_call.1} parent=11 // pred_region
          _
        $region24: #{tpu_custom_call.1} parent=11 // pred_fallthru
          _
        // Predicated region
        $region25: #{tpu_custom_call.1} parent=11 // pred_check
          %p300 = pneg %p143
        $region26: #{tpu_custom_call.1} parent=11 // pred_check_branch
          %302 = sbr.rel (%p300) target = $region28
        $region27: #{tpu_custom_call.1} parent=11 // pred_region
          _
        $region28: #{tpu_custom_call.1} parent=11 // pred_fallthru
          _
        // Predicated region
        $region29: #{tpu_custom_call.1} parent=11 // pred_check
          %p303 = pneg %p164
        $region30: #{tpu_custom_call.1} parent=11 // pred_check_branch
          %305 = sbr.rel (%p303) target = $region32
        $region31: #{tpu_custom_call.1} parent=11 // pred_region
          _
        $region32: #{tpu_custom_call.1} parent=11 // pred_fallthru
          _
        // Predicated region
        $region33: #{tpu_custom_call.1} parent=11 // pred_check
          %p306 = pneg %p185
        $region34: #{tpu_custom_call.1} parent=11 // pred_check_branch
          %308 = sbr.rel (%p306) target = $region36
        $region35: #{tpu_custom_call.1} parent=11 // pred_region
          _
        $region36: #{tpu_custom_call.1} parent=11 // pred_fallthru
          _
        // Predicated region
        $region37: #{tpu_custom_call.1} parent=11 // pred_check
          %p309 = pneg %p206
        $region38: #{tpu_custom_call.1} parent=11 // pred_check_branch
          %311 = sbr.rel (%p309) target = $region40
        $region39: #{tpu_custom_call.1} parent=11 // pred_region
          _
        $region40: #{tpu_custom_call.1} parent=11 // pred_fallthru
          _
        // Predicated region
        $region41: #{tpu_custom_call.1} parent=11 // pred_check
          %p312 = pneg %p227
        $region42: #{tpu_custom_call.1} parent=11 // pred_check_branch
          %314 = sbr.rel (%p312) target = $region44
        $region43: #{tpu_custom_call.1} parent=11 // pred_region
          _
        $region44: #{tpu_custom_call.1} parent=11 // pred_fallthru
          _
        // Predicated region
        $region45: #{tpu_custom_call.1} parent=11 // pred_check
          %p315 = pneg %p248
        $region46: #{tpu_custom_call.1} parent=11 // pred_check_branch
          %317 = sbr.rel (%p315) target = $region48
        $region47: #{tpu_custom_call.1} parent=11 // pred_region
          _
        $region48: #{tpu_custom_call.1} parent=11 // pred_fallthru
          _
      $region12: #{tpu_custom_call.1} parent=5 // pred_fallthru
        _
      %p318 = scmp.lt.s32.totalorder %s19, 2
      // Predicated region
      $region49: #{tpu_custom_call.1} parent=5 // pred_check
        %p319 = pneg %p318
      $region50: #{tpu_custom_call.1} parent=5 // pred_check_branch
        %321 = sbr.rel (%p319) target = $region52
      $region51: #{tpu_custom_call.1} parent=5 // pred_region
        // Predicated region
        $region53: #{tpu_custom_call.1} parent=51 // pred_check
          %p322 = pneg %p53
        $region54: #{tpu_custom_call.1} parent=51 // pred_check_branch
          %324 = sbr.rel (%p322) target = $region56
        $region55: #{tpu_custom_call.1} parent=51 // pred_region
          %s325 = sadd.s32 %s26, %s27
          %p326 = scmp.lt.s32.totalorder %s325, 1
          %s327 = scalar_select %p326, %s325, 1
          %s328 = smul.addr %s327, 88
          %s329 = smul.addr %s328, 8
          %s330 = scalar_lea.vmem %s0, %s329
          %s331 = sadd.s32 %s26, %s27
        $region56: #{tpu_custom_call.1} parent=51 // pred_fallthru
          _
      $region52: #{tpu_custom_call.1} parent=5 // pred_fallthru
        _
      %p332 = scmp.le.s32.totalorder 1, %s19
      %p333 = scmp.lt.s32.totalorder %s19, 3
      %p334 = pnand %p332, %p333
      %p335 = pneg %p334
      // Predicated region
      $region57: #{tpu_custom_call.1} parent=5 // pred_check
        _
      $region58: #{tpu_custom_call.1} parent=5 // pred_check_branch
        %337 = sbr.rel (%p334) target = $region60
      $region59: #{tpu_custom_call.1} parent=5 // pred_region
        %s338 = ssub.s32 %s19, 1
        %s339 = sadd.s32 %s28, %s29
        %p340 = scmp.lt.s32.totalorder %s339, 1
        %s341 = scalar_select %p340, %s339, 1
        %s342 = smul.addr %s341, 88
        %s343 = smul.addr %s342, 8
        %s344 = scalar_lea.vmem %s0, %s343
        %p345 = pneg %p59
        %p346 = pneg %p56
        %p347 = pneg %p80
        %p348 = pneg %p77
        %p349 = pneg %p101
        %p350 = pneg %p98
        %p351 = pneg %p122
        %p352 = pneg %p119
        %p353 = pneg %p143
        %p354 = pneg %p140
        %p355 = pneg %p164
        %p356 = pneg %p161
        %p357 = pneg %p185
        %p358 = pneg %p182
        %p359 = pneg %p206
        %p360 = pneg %p203
        %p361 = pneg %p227
        %p362 = pneg %p224
        %p363 = pneg %p248
        %p364 = pneg %p245
        %p365 = pneg %p276
        %p366 = pneg %p273
        %s367 = sand.u32 %s263, 1
        %s368 = scalar_lea.sflag [#allocation4], %s367
        %s369 = sand.u32 %s263, 1
        %s370 = smul.addr %s369, 256
        %s371 = scalar_lea.vmem [#allocation3], %s370
        %s372 = sadd.s32 %s28, %s29
        %p373 = scmp.lt.s32.totalorder %s372, 1
        %s374 = scalar_select %p373, %s372, 1
        %s375 = smul.addr %s374, 88
        %s376 = smul.addr %s375, 8
        %s377 = scalar_lea.vmem %s0, %s376
        %s378 = sadd.s32 %s28, %s29
        %s379 = smul.u32 16, %s29
        %v380 = vld [vmem:[%s1] sm:$0x7f]
        %v381 = vld [vmem:[%s1 + $0x8] sm:$0x7f]
        %v382 = vld [vmem:[%s1 + $0x10] sm:$0x7f]
        %v383 = vld [vmem:[%s1 + $0x18] sm:$0x7f]
        %v384 = vld [vmem:[%s1 + $0x20] sm:$0x7f]
        %v385 = vld [vmem:[%s1 + $0x28] sm:$0x7f]
        %v386 = vld [vmem:[%s1 + $0x30] sm:$0x7f]
        %v387 = vld [vmem:[%s2] sm:$0x1]
        %v388 = vld [vmem:[%s3] sm:$0x1]
        %v389 = vld [vmem:[%s4] sm:$0x1]
        %v390 = vlaneseq
        %v391 = vand.u32 %v390, 127
        %vm392 = vcmp.lt.s32.totalorder %v391, 4
        %v393 = vsel %vm392, 1, 0
        %v394 = vcvt.s32.f32 %v393
        loop: start=0, step=1, limit=4
        $region61: #{tpu_custom_call.1} parent=59 // loop_pre_header
          _
        $region62: #{tpu_custom_call.1} parent=59 // loop_header
          %s396 = sphi 0, %s400
          %p397 = scmp.ge.s32.totalorder %s396, 4
        $region63: #{tpu_custom_call.1} parent=59 // loop_header_branch
          %399 = sbr.rel (%p397) target = $region67
        $region64: #{tpu_custom_call.1} parent=59 // loop_body
          %s401 = smul.u32 %s396, 4
          %s402 = smul.u32 %s401, 32
          %s403 = scalar_lea.vmem %s377, %s402
          %v404 = vld [vmem:[%s403] sm:$0xff]
          %v405 = vld [vmem:[%s403 + $0x8] sm:$0xff]
          %v406 = vld [vmem:[%s403 + $0x10] sm:$0xff]
          %v407 = vld [vmem:[%s403 + $0x18] sm:$0x7]
          %v408 = vld [vmem:[%s403 + $0x20] sm:$0xff]
          %v409 = vld [vmem:[%s403 + $0x28] sm:$0xff]
          %v410 = vld [vmem:[%s403 + $0x30] sm:$0xff]
          %v411 = vld [vmem:[%s403 + $0x38] sm:$0x7]
          %v412 = vld [vmem:[%s403 + $0x40] sm:$0xff]
          %v413 = vld [vmem:[%s403 + $0x48] sm:$0xff]
          %v414 = vld [vmem:[%s403 + $0x50] sm:$0xff]
          %v415 = vld [vmem:[%s403 + $0x58] sm:$0x7]
          %v416 = vld [vmem:[%s403 + $0x60] sm:$0xff]
          %v417 = vld [vmem:[%s403 + $0x68] sm:$0xff]
          %v418 = vld [vmem:[%s403 + $0x70] sm:$0xff]
          %v419 = vld [vmem:[%s403 + $0x78] sm:$0x7]
          %v420 = vlaneseq
          %v421 = vshrl.u32 %v420, 7
          %v422 = vsub.s32 0, %v421
          %v423 = vrot.slane %v380, %v422
          %v424 = vmul.f32 %v404, %v423
          %v425 = vmul.f32 %v405, %v423
          %v426 = vmul.f32 %v406, %v423
          %v427 = vmul.f32 %v408, %v423
          %v428 = vmul.f32 %v409, %v423
          %v429 = vmul.f32 %v410, %v423
          %v430 = vmul.f32 %v412, %v423
          %v431 = vmul.f32 %v413, %v423
          %v432 = vmul.f32 %v414, %v423
          %v433 = vmul.f32 %v416, %v423
          %v434 = vmul.f32 %v417, %v423
          %v435 = vmul.f32 %v418, %v423
          %v436 = vadd.f32 %v424, 0.0
          %v437 = vadd.f32 %v425, 0.0
          %v438 = vadd.f32 %v426, 0.0
          %v439 = vadd.f32 %v427, 0.0
          %v440 = vadd.f32 %v428, 0.0
          %v441 = vadd.f32 %v429, 0.0
          %v442 = vadd.f32 %v430, 0.0
          %v443 = vadd.f32 %v431, 0.0
          %v444 = vadd.f32 %v432, 0.0
          %v445 = vadd.f32 %v433, 0.0
          %v446 = vadd.f32 %v434, 0.0
          %v447 = vadd.f32 %v435, 0.0
          %v448 = vlaneseq
          %v449 = vshrl.u32 %v448, 7
          %v450 = vsub.s32 1, %v449
          %v451 = vrot.slane %v380, %v450
          %v452 = vmul.f32 %v404, %v451
          %v453 = vmul.f32 %v405, %v451
          %v454 = vmul.f32 %v406, %v451
          %v455 = vmul.f32 %v408, %v451
          %v456 = vmul.f32 %v409, %v451
          %v457 = vmul.f32 %v410, %v451
          %v458 = vmul.f32 %v412, %v451
          %v459 = vmul.f32 %v413, %v451
          %v460 = vmul.f32 %v414, %v451
          %v461 = vmul.f32 %v416, %v451
          %v462 = vmul.f32 %v417, %v451
          %v463 = vmul.f32 %v418, %v451
          %vm476 = vcmask 1046528
          %v477 = vrot.slane %v452, 1
          %v478 = vrot.slane %v453, 1
          %v479 = vsel %vm476, %v477, %v478
          %v480 = vrot.slane %v454, 1
          %v481 = vsel %vm476, %v478, %v480
          %v482 = vrot.slane %v455, 1
          %v483 = vrot.slane %v456, 1
          %v484 = vsel %vm476, %v482, %v483
          %v485 = vrot.slane %v457, 1
          %v486 = vsel %vm476, %v483, %v485
          %v487 = vrot.slane %v458, 1
          %v488 = vrot.slane %v459, 1
          %v489 = vsel %vm476, %v487, %v488
          %v490 = vrot.slane %v460, 1
          %v491 = vsel %vm476, %v488, %v490
          %v492 = vrot.slane %v461, 1
          %v493 = vrot.slane %v462, 1
          %v494 = vsel %vm476, %v492, %v493
          %v495 = vrot.slane %v463, 1
          %v496 = vsel %vm476, %v493, %v495
          %v509 = vadd.f32 %v436, %v479
          %v510 = vadd.f32 %v437, %v481
          %v511 = vadd.f32 %v438, %v480
          %v512 = vadd.f32 %v439, %v484
          %v513 = vadd.f32 %v440, %v486
          %v514 = vadd.f32 %v441, %v485
          %v515 = vadd.f32 %v442, %v489
          %v516 = vadd.f32 %v443, %v491
          %v517 = vadd.f32 %v444, %v490
          %v518 = vadd.f32 %v445, %v494
          %v519 = vadd.f32 %v446, %v496
          %v520 = vadd.f32 %v447, %v495
          %v521 = vlaneseq
          %v522 = vshrl.u32 %v521, 7
          %v523 = vsub.s32 2, %v522
          %v524 = vrot.slane %v380, %v523
          %v525 = vmul.f32 %v404, %v524
          %v526 = vmul.f32 %v405, %v524
          %v527 = vmul.f32 %v406, %v524
          %v528 = vmul.f32 %v408, %v524
          %v529 = vmul.f32 %v409, %v524
          %v530 = vmul.f32 %v410, %v524
          %v531 = vmul.f32 %v412, %v524
          %v532 = vmul.f32 %v413, %v524
          %v533 = vmul.f32 %v414, %v524
          %v534 = vmul.f32 %v416, %v524
          %v535 = vmul.f32 %v417, %v524
          %v536 = vmul.f32 %v418, %v524
          %vm549 = vcmask 1045504
          %v550 = vrot.slane %v525, 2
          %v551 = vrot.slane %v526, 2
          %v552 = vsel %vm549, %v550, %v551
          %v553 = vrot.slane %v527, 2
          %v554 = vsel %vm549, %v551, %v553
          %v555 = vrot.slane %v528, 2
          %v556 = vrot.slane %v529, 2
          %v557 = vsel %vm549, %v555, %v556
          %v558 = vrot.slane %v530, 2
          %v559 = vsel %vm549, %v556, %v558
          %v560 = vrot.slane %v531, 2
          %v561 = vrot.slane %v532, 2
          %v562 = vsel %vm549, %v560, %v561
          %v563 = vrot.slane %v533, 2
          %v564 = vsel %vm549, %v561, %v563
          %v565 = vrot.slane %v534, 2
          %v566 = vrot.slane %v535, 2
          %v567 = vsel %vm549, %v565, %v566
          %v568 = vrot.slane %v536, 2
          %v569 = vsel %vm549, %v566, %v568
          %v582 = vadd.f32 %v509, %v552
          %v583 = vadd.f32 %v510, %v554
          %v584 = vadd.f32 %v511, %v553
          %v585 = vadd.f32 %v512, %v557
          %v586 = vadd.f32 %v513, %v559
          %v587 = vadd.f32 %v514, %v558
          %v588 = vadd.f32 %v515, %v562
          %v589 = vadd.f32 %v516, %v564
          %v590 = vadd.f32 %v517, %v563
          %v591 = vadd.f32 %v518, %v567
          %v592 = vadd.f32 %v519, %v569
          %v593 = vadd.f32 %v520, %v568
          %v594 = vlaneseq
          %v595 = vshrl.u32 %v594, 7
          %v596 = vsub.s32 3, %v595
          %v597 = vrot.slane %v380, %v596
          %v598 = vmul.f32 %v405, %v597
          %v599 = vmul.f32 %v406, %v597
          %v600 = vmul.f32 %v409, %v597
          %v601 = vmul.f32 %v410, %v597
          %v602 = vmul.f32 %v413, %v597
          %v603 = vmul.f32 %v414, %v597
          %v604 = vmul.f32 %v417, %v597
          %v605 = vmul.f32 %v418, %v597
          %vm614 = vcmask 1044480
          %v615 = vrot.slane %v598, 3
          %v616 = vrot.slane %v599, 3
          %v617 = vsel %vm614, %v615, %v616
          %v618 = vrot.slane %v600, 3
          %v619 = vrot.slane %v601, 3
          %v620 = vsel %vm614, %v618, %v619
          %v621 = vrot.slane %v602, 3
          %v622 = vrot.slane %v603, 3
          %v623 = vsel %vm614, %v621, %v622
          %v624 = vrot.slane %v604, 3
          %v625 = vrot.slane %v605, 3
          %v626 = vsel %vm614, %v624, %v625
          %v639 = vadd.f32 %v582, %v615
          %v640 = vadd.f32 %v583, %v617
          %v641 = vadd.f32 %v584, %v616
          %v642 = vadd.f32 %v585, %v618
          %v643 = vadd.f32 %v586, %v620
          %v644 = vadd.f32 %v587, %v619
          %v645 = vadd.f32 %v588, %v621
          %v646 = vadd.f32 %v589, %v623
          %v647 = vadd.f32 %v590, %v622
          %v648 = vadd.f32 %v591, %v624
          %v649 = vadd.f32 %v592, %v626
          %v650 = vadd.f32 %v593, %v625
          %v651 = vlaneseq
          %v652 = vshrl.u32 %v651, 7
          %v653 = vsub.s32 4, %v652
          %v654 = vrot.slane %v380, %v653
          %v655 = vmul.f32 %v405, %v654
          %v656 = vmul.f32 %v406, %v654
          %v657 = vmul.f32 %v407, %v654
          %v658 = vmul.f32 %v409, %v654
          %v659 = vmul.f32 %v410, %v654
          %v660 = vmul.f32 %v411, %v654
          %v661 = vmul.f32 %v413, %v654
          %v662 = vmul.f32 %v414, %v654
          %v663 = vmul.f32 %v415, %v654
          %v664 = vmul.f32 %v417, %v654
          %v665 = vmul.f32 %v418, %v654
          %v666 = vmul.f32 %v419, %v654
          %vm679 = vcmask 1043456
          %v680 = vrot.slane %v655, 4
          %v681 = vrot.slane %v656, 4
          %v682 = vsel %vm679, %v680, %v681
          %v683 = vrot.slane %v657, 4
          %v684 = vsel %vm679, %v681, %v683
          %v685 = vrot.slane %v658, 4
          %v686 = vrot.slane %v659, 4
          %v687 = vsel %vm679, %v685, %v686
          %v688 = vrot.slane %v660, 4
          %v689 = vsel %vm679, %v686, %v688
          %v690 = vrot.slane %v661, 4
          %v691 = vrot.slane %v662, 4
          %v692 = vsel %vm679, %v690, %v691
          %v693 = vrot.slane %v663, 4
          %v694 = vsel %vm679, %v691, %v693
          %v695 = vrot.slane %v664, 4
          %v696 = vrot.slane %v665, 4
          %v697 = vsel %vm679, %v695, %v696
          %v698 = vrot.slane %v666, 4
          %v699 = vsel %vm679, %v696, %v698
          %v712 = vadd.f32 %v639, %v680
          %v713 = vadd.f32 %v640, %v682
          %v714 = vadd.f32 %v641, %v684
          %v715 = vadd.f32 %v642, %v685
          %v716 = vadd.f32 %v643, %v687
          %v717 = vadd.f32 %v644, %v689
          %v718 = vadd.f32 %v645, %v690
          %v719 = vadd.f32 %v646, %v692
          %v720 = vadd.f32 %v647, %v694
          %v721 = vadd.f32 %v648, %v695
          %v722 = vadd.f32 %v649, %v697
          %v723 = vadd.f32 %v650, %v699
          %v724 = vlaneseq
          %v725 = vshrl.u32 %v724, 7
          %v726 = vsub.s32 5, %v725
          %v727 = vrot.slane %v380, %v726
          %v728 = vmul.f32 %v405, %v727
          %v729 = vmul.f32 %v406, %v727
          %v730 = vmul.f32 %v407, %v727
          %v731 = vmul.f32 %v409, %v727
          %v732 = vmul.f32 %v410, %v727
          %v733 = vmul.f32 %v411, %v727
          %v734 = vmul.f32 %v413, %v727
          %v735 = vmul.f32 %v414, %v727
          %v736 = vmul.f32 %v415, %v727
          %v737 = vmul.f32 %v417, %v727
          %v738 = vmul.f32 %v418, %v727
          %v739 = vmul.f32 %v419, %v727
          %vm752 = vcmask 1042432
          %v753 = vrot.slane %v728, 5
          %v754 = vrot.slane %v729, 5
          %v755 = vsel %vm752, %v753, %v754
          %v756 = vrot.slane %v730, 5
          %v757 = vsel %vm752, %v754, %v756
          %v758 = vrot.slane %v731, 5
          %v759 = vrot.slane %v732, 5
          %v760 = vsel %vm752, %v758, %v759
          %v761 = vrot.slane %v733, 5
          %v762 = vsel %vm752, %v759, %v761
          %v763 = vrot.slane %v734, 5
          %v764 = vrot.slane %v735, 5
          %v765 = vsel %vm752, %v763, %v764
          %v766 = vrot.slane %v736, 5
          %v767 = vsel %vm752, %v764, %v766
          %v768 = vrot.slane %v737, 5
          %v769 = vrot.slane %v738, 5
          %v770 = vsel %vm752, %v768, %v769
          %v771 = vrot.slane %v739, 5
          %v772 = vsel %vm752, %v769, %v771
          %v785 = vadd.f32 %v712, %v753
          %v786 = vadd.f32 %v713, %v755
          %v787 = vadd.f32 %v714, %v757
          %v788 = vadd.f32 %v715, %v758
          %v789 = vadd.f32 %v716, %v760
          %v790 = vadd.f32 %v717, %v762
          %v791 = vadd.f32 %v718, %v763
          %v792 = vadd.f32 %v719, %v765
          %v793 = vadd.f32 %v720, %v767
          %v794 = vadd.f32 %v721, %v768
          %v795 = vadd.f32 %v722, %v770
          %v796 = vadd.f32 %v723, %v772
          %v797 = vlaneseq
          %v798 = vshrl.u32 %v797, 7
          %v799 = vsub.s32 6, %v798
          %v800 = vrot.slane %v380, %v799
          %v801 = vmul.f32 %v405, %v800
          %v802 = vmul.f32 %v406, %v800
          %v803 = vmul.f32 %v407, %v800
          %v804 = vmul.f32 %v409, %v800
          %v805 = vmul.f32 %v410, %v800
          %v806 = vmul.f32 %v411, %v800
          %v807 = vmul.f32 %v413, %v800
          %v808 = vmul.f32 %v414, %v800
          %v809 = vmul.f32 %v415, %v800
          %v810 = vmul.f32 %v417, %v800
          %v811 = vmul.f32 %v418, %v800
          %v812 = vmul.f32 %v419, %v800
          %vm825 = vcmask 1041408
          %v826 = vrot.slane %v801, 6
          %v827 = vrot.slane %v802, 6
          %v828 = vsel %vm825, %v826, %v827
          %v829 = vrot.slane %v803, 6
          %v830 = vsel %vm825, %v827, %v829
          %v831 = vrot.slane %v804, 6
          %v832 = vrot.slane %v805, 6
          %v833 = vsel %vm825, %v831, %v832
          %v834 = vrot.slane %v806, 6
          %v835 = vsel %vm825, %v832, %v834
          %v836 = vrot.slane %v807, 6
          %v837 = vrot.slane %v808, 6
          %v838 = vsel %vm825, %v836, %v837
          %v839 = vrot.slane %v809, 6
          %v840 = vsel %vm825, %v837, %v839
          %v841 = vrot.slane %v810, 6
          %v842 = vrot.slane %v811, 6
          %v843 = vsel %vm825, %v841, %v842
          %v844 = vrot.slane %v812, 6
          %v845 = vsel %vm825, %v842, %v844
          %v858 = vadd.f32 %v785, %v826
          %v859 = vadd.f32 %v786, %v828
          %v860 = vadd.f32 %v787, %v830
          %v861 = vadd.f32 %v788, %v831
          %v862 = vadd.f32 %v789, %v833
          %v863 = vadd.f32 %v790, %v835
          %v864 = vadd.f32 %v791, %v836
          %v865 = vadd.f32 %v792, %v838
          %v866 = vadd.f32 %v793, %v840
          %v867 = vadd.f32 %v794, %v841
          %v868 = vadd.f32 %v795, %v843
          %v869 = vadd.f32 %v796, %v845
          %s870 = sadd.s32 %s401, 1
          %s871 = smul.u32 %s870, 32
          %s872 = scalar_lea.vmem %s377, %s871
          %v873 = vld [vmem:[%s872] sm:$0xff]
          %v874 = vld [vmem:[%s872 + $0x8] sm:$0xff]
          %v875 = vld [vmem:[%s872 + $0x10] sm:$0xff]
          %v876 = vld [vmem:[%s872 + $0x18] sm:$0x7]
          %v877 = vld [vmem:[%s872 + $0x20] sm:$0xff]
          %v878 = vld [vmem:[%s872 + $0x28] sm:$0xff]
          %v879 = vld [vmem:[%s872 + $0x30] sm:$0xff]
          %v880 = vld [vmem:[%s872 + $0x38] sm:$0x7]
          %v881 = vld [vmem:[%s872 + $0x40] sm:$0xff]
          %v882 = vld [vmem:[%s872 + $0x48] sm:$0xff]
          %v883 = vld [vmem:[%s872 + $0x50] sm:$0xff]
          %v884 = vld [vmem:[%s872 + $0x58] sm:$0x7]
          %v885 = vld [vmem:[%s872 + $0x60] sm:$0xff]
          %v886 = vld [vmem:[%s872 + $0x68] sm:$0xff]
          %v887 = vld [vmem:[%s872 + $0x70] sm:$0xff]
          %v888 = vld [vmem:[%s872 + $0x78] sm:$0x7]
          %v889 = vlaneseq
          %v890 = vshrl.u32 %v889, 7
          %v891 = vsub.s32 0, %v890
          %v892 = vrot.slane %v381, %v891
          %v893 = vmul.f32 %v873, %v892
          %v894 = vmul.f32 %v874, %v892
          %v895 = vmul.f32 %v875, %v892
          %v896 = vmul.f32 %v877, %v892
          %v897 = vmul.f32 %v878, %v892
          %v898 = vmul.f32 %v879, %v892
          %v899 = vmul.f32 %v881, %v892
          %v900 = vmul.f32 %v882, %v892
          %v901 = vmul.f32 %v883, %v892
          %v902 = vmul.f32 %v885, %v892
          %v903 = vmul.f32 %v886, %v892
          %v904 = vmul.f32 %v887, %v892
          %v905 = vadd.f32 %v858, %v893
          %v906 = vadd.f32 %v859, %v894
          %v907 = vadd.f32 %v860, %v895
          %v908 = vadd.f32 %v861, %v896
          %v909 = vadd.f32 %v862, %v897
          %v910 = vadd.f32 %v863, %v898
          %v911 = vadd.f32 %v864, %v899
          %v912 = vadd.f32 %v865, %v900
          %v913 = vadd.f32 %v866, %v901
          %v914 = vadd.f32 %v867, %v902
          %v915 = vadd.f32 %v868, %v903
          %v916 = vadd.f32 %v869, %v904
          %v917 = vlaneseq
          %v918 = vshrl.u32 %v917, 7
          %v919 = vsub.s32 1, %v918
          %v920 = vrot.slane %v381, %v919
          %v921 = vmul.f32 %v873, %v920
          %v922 = vmul.f32 %v874, %v920
          %v923 = vmul.f32 %v875, %v920
          %v924 = vmul.f32 %v877, %v920
          %v925 = vmul.f32 %v878, %v920
          %v926 = vmul.f32 %v879, %v920
          %v927 = vmul.f32 %v881, %v920
          %v928 = vmul.f32 %v882, %v920
          %v929 = vmul.f32 %v883, %v920
          %v930 = vmul.f32 %v885, %v920
          %v931 = vmul.f32 %v886, %v920
          %v932 = vmul.f32 %v887, %v920
          %v945 = vrot.slane %v921, 1
          %v946 = vrot.slane %v922, 1
          %v947 = vsel %vm476, %v945, %v946
          %v948 = vrot.slane %v923, 1
          %v949 = vsel %vm476, %v946, %v948
          %v950 = vrot.slane %v924, 1
          %v951 = vrot.slane %v925, 1
          %v952 = vsel %vm476, %v950, %v951
          %v953 = vrot.slane %v926, 1
          %v954 = vsel %vm476, %v951, %v953
          %v955 = vrot.slane %v927, 1
          %v956 = vrot.slane %v928, 1
          %v957 = vsel %vm476, %v955, %v956
          %v958 = vrot.slane %v929, 1
          %v959 = vsel %vm476, %v956, %v958
          %v960 = vrot.slane %v930, 1
          %v961 = vrot.slane %v931, 1
          %v962 = vsel %vm476, %v960, %v961
          %v963 = vrot.slane %v932, 1
          %v964 = vsel %vm476, %v961, %v963
          %v977 = vadd.f32 %v905, %v947
          %v978 = vadd.f32 %v906, %v949
          %v979 = vadd.f32 %v907, %v948
          %v980 = vadd.f32 %v908, %v952
          %v981 = vadd.f32 %v909, %v954
          %v982 = vadd.f32 %v910, %v953
          %v983 = vadd.f32 %v911, %v957
          %v984 = vadd.f32 %v912, %v959
          %v985 = vadd.f32 %v913, %v958
          %v986 = vadd.f32 %v914, %v962
          %v987 = vadd.f32 %v915, %v964
          %v988 = vadd.f32 %v916, %v963
          %v989 = vlaneseq
          %v990 = vshrl.u32 %v989, 7
          %v991 = vsub.s32 2, %v990
          %v992 = vrot.slane %v381, %v991
          %v993 = vmul.f32 %v873, %v992
          %v994 = vmul.f32 %v874, %v992
          %v995 = vmul.f32 %v875, %v992
          %v996 = vmul.f32 %v877, %v992
          %v997 = vmul.f32 %v878, %v992
          %v998 = vmul.f32 %v879, %v992
          %v999 = vmul.f32 %v881, %v992
          %v1000 = vmul.f32 %v882, %v992
          %v1001 = vmul.f32 %v883, %v992
          %v1002 = vmul.f32 %v885, %v992
          %v1003 = vmul.f32 %v886, %v992
          %v1004 = vmul.f32 %v887, %v992
          %v1017 = vrot.slane %v993, 2
          %v1018 = vrot.slane %v994, 2
          %v1019 = vsel %vm549, %v1017, %v1018
          %v1020 = vrot.slane %v995, 2
          %v1021 = vsel %vm549, %v1018, %v1020
          %v1022 = vrot.slane %v996, 2
          %v1023 = vrot.slane %v997, 2
          %v1024 = vsel %vm549, %v1022, %v1023
          %v1025 = vrot.slane %v998, 2
          %v1026 = vsel %vm549, %v1023, %v1025
          %v1027 = vrot.slane %v999, 2
          %v1028 = vrot.slane %v1000, 2
          %v1029 = vsel %vm549, %v1027, %v1028
          %v1030 = vrot.slane %v1001, 2
          %v1031 = vsel %vm549, %v1028, %v1030
          %v1032 = vrot.slane %v1002, 2
          %v1033 = vrot.slane %v1003, 2
          %v1034 = vsel %vm549, %v1032, %v1033
          %v1035 = vrot.slane %v1004, 2
          %v1036 = vsel %vm549, %v1033, %v1035
          %v1049 = vadd.f32 %v977, %v1019
          %v1050 = vadd.f32 %v978, %v1021
          %v1051 = vadd.f32 %v979, %v1020
          %v1052 = vadd.f32 %v980, %v1024
          %v1053 = vadd.f32 %v981, %v1026
          %v1054 = vadd.f32 %v982, %v1025
          %v1055 = vadd.f32 %v983, %v1029
          %v1056 = vadd.f32 %v984, %v1031
          %v1057 = vadd.f32 %v985, %v1030
          %v1058 = vadd.f32 %v986, %v1034
          %v1059 = vadd.f32 %v987, %v1036
          %v1060 = vadd.f32 %v988, %v1035
          %v1061 = vlaneseq
          %v1062 = vshrl.u32 %v1061, 7
          %v1063 = vsub.s32 3, %v1062
          %v1064 = vrot.slane %v381, %v1063
          %v1065 = vmul.f32 %v874, %v1064
          %v1066 = vmul.f32 %v875, %v1064
          %v1067 = vmul.f32 %v878, %v1064
          %v1068 = vmul.f32 %v879, %v1064
          %v1069 = vmul.f32 %v882, %v1064
          %v1070 = vmul.f32 %v883, %v1064
          %v1071 = vmul.f32 %v886, %v1064
          %v1072 = vmul.f32 %v887, %v1064
          %v1081 = vrot.slane %v1065, 3
          %v1082 = vrot.slane %v1066, 3
          %v1083 = vsel %vm614, %v1081, %v1082
          %v1084 = vrot.slane %v1067, 3
          %v1085 = vrot.slane %v1068, 3
          %v1086 = vsel %vm614, %v1084, %v1085
          %v1087 = vrot.slane %v1069, 3
          %v1088 = vrot.slane %v1070, 3
          %v1089 = vsel %vm614, %v1087, %v1088
          %v1090 = vrot.slane %v1071, 3
          %v1091 = vrot.slane %v1072, 3
          %v1092 = vsel %vm614, %v1090, %v1091
          %v1105 = vadd.f32 %v1049, %v1081
          %v1106 = vadd.f32 %v1050, %v1083
          %v1107 = vadd.f32 %v1051, %v1082
          %v1108 = vadd.f32 %v1052, %v1084
          %v1109 = vadd.f32 %v1053, %v1086
          %v1110 = vadd.f32 %v1054, %v1085
          %v1111 = vadd.f32 %v1055, %v1087
          %v1112 = vadd.f32 %v1056, %v1089
          %v1113 = vadd.f32 %v1057, %v1088
          %v1114 = vadd.f32 %v1058, %v1090
          %v1115 = vadd.f32 %v1059, %v1092
          %v1116 = vadd.f32 %v1060, %v1091
          %v1117 = vlaneseq
          %v1118 = vshrl.u32 %v1117, 7
          %v1119 = vsub.s32 4, %v1118
          %v1120 = vrot.slane %v381, %v1119
          %v1121 = vmul.f32 %v874, %v1120
          %v1122 = vmul.f32 %v875, %v1120
          %v1123 = vmul.f32 %v876, %v1120
          %v1124 = vmul.f32 %v878, %v1120
          %v1125 = vmul.f32 %v879, %v1120
          %v1126 = vmul.f32 %v880, %v1120
          %v1127 = vmul.f32 %v882, %v1120
          %v1128 = vmul.f32 %v883, %v1120
          %v1129 = vmul.f32 %v884, %v1120
          %v1130 = vmul.f32 %v886, %v1120
          %v1131 = vmul.f32 %v887, %v1120
          %v1132 = vmul.f32 %v888, %v1120
          %v1145 = vrot.slane %v1121, 4
          %v1146 = vrot.slane %v1122, 4
          %v1147 = vsel %vm679, %v1145, %v1146
          %v1148 = vrot.slane %v1123, 4
          %v1149 = vsel %vm679, %v1146, %v1148
          %v1150 = vrot.slane %v1124, 4
          %v1151 = vrot.slane %v1125, 4
          %v1152 = vsel %vm679, %v1150, %v1151
          %v1153 = vrot.slane %v1126, 4
          %v1154 = vsel %vm679, %v1151, %v1153
          %v1155 = vrot.slane %v1127, 4
          %v1156 = vrot.slane %v1128, 4
          %v1157 = vsel %vm679, %v1155, %v1156
          %v1158 = vrot.slane %v1129, 4
          %v1159 = vsel %vm679, %v1156, %v1158
          %v1160 = vrot.slane %v1130, 4
          %v1161 = vrot.slane %v1131, 4
          %v1162 = vsel %vm679, %v1160, %v1161
          %v1163 = vrot.slane %v1132, 4
          %v1164 = vsel %vm679, %v1161, %v1163
          %v1177 = vadd.f32 %v1105, %v1145
          %v1178 = vadd.f32 %v1106, %v1147
          %v1179 = vadd.f32 %v1107, %v1149
          %v1180 = vadd.f32 %v1108, %v1150
          %v1181 = vadd.f32 %v1109, %v1152
          %v1182 = vadd.f32 %v1110, %v1154
          %v1183 = vadd.f32 %v1111, %v1155
          %v1184 = vadd.f32 %v1112, %v1157
          %v1185 = vadd.f32 %v1113, %v1159
          %v1186 = vadd.f32 %v1114, %v1160
          %v1187 = vadd.f32 %v1115, %v1162
          %v1188 = vadd.f32 %v1116, %v1164
          %v1189 = vlaneseq
          %v1190 = vshrl.u32 %v1189, 7
          %v1191 = vsub.s32 5, %v1190
          %v1192 = vrot.slane %v381, %v1191
          %v1193 = vmul.f32 %v874, %v1192
          %v1194 = vmul.f32 %v875, %v1192
          %v1195 = vmul.f32 %v876, %v1192
          %v1196 = vmul.f32 %v878, %v1192
          %v1197 = vmul.f32 %v879, %v1192
          %v1198 = vmul.f32 %v880, %v1192
          %v1199 = vmul.f32 %v882, %v1192
          %v1200 = vmul.f32 %v883, %v1192
          %v1201 = vmul.f32 %v884, %v1192
          %v1202 = vmul.f32 %v886, %v1192
          %v1203 = vmul.f32 %v887, %v1192
          %v1204 = vmul.f32 %v888, %v1192
          %v1217 = vrot.slane %v1193, 5
          %v1218 = vrot.slane %v1194, 5
          %v1219 = vsel %vm752, %v1217, %v1218
          %v1220 = vrot.slane %v1195, 5
          %v1221 = vsel %vm752, %v1218, %v1220
          %v1222 = vrot.slane %v1196, 5
          %v1223 = vrot.slane %v1197, 5
          %v1224 = vsel %vm752, %v1222, %v1223
          %v1225 = vrot.slane %v1198, 5
          %v1226 = vsel %vm752, %v1223, %v1225
          %v1227 = vrot.slane %v1199, 5
          %v1228 = vrot.slane %v1200, 5
          %v1229 = vsel %vm752, %v1227, %v1228
          %v1230 = vrot.slane %v1201, 5
          %v1231 = vsel %vm752, %v1228, %v1230
          %v1232 = vrot.slane %v1202, 5
          %v1233 = vrot.slane %v1203, 5
          %v1234 = vsel %vm752, %v1232, %v1233
          %v1235 = vrot.slane %v1204, 5
          %v1236 = vsel %vm752, %v1233, %v1235
          %v1249 = vadd.f32 %v1177, %v1217
          %v1250 = vadd.f32 %v1178, %v1219
          %v1251 = vadd.f32 %v1179, %v1221
          %v1252 = vadd.f32 %v1180, %v1222
          %v1253 = vadd.f32 %v1181, %v1224
          %v1254 = vadd.f32 %v1182, %v1226
          %v1255 = vadd.f32 %v1183, %v1227
          %v1256 = vadd.f32 %v1184, %v1229
          %v1257 = vadd.f32 %v1185, %v1231
          %v1258 = vadd.f32 %v1186, %v1232
          %v1259 = vadd.f32 %v1187, %v1234
          %v1260 = vadd.f32 %v1188, %v1236
          %v1261 = vlaneseq
          %v1262 = vshrl.u32 %v1261, 7
          %v1263 = vsub.s32 6, %v1262
          %v1264 = vrot.slane %v381, %v1263
          %v1265 = vmul.f32 %v874, %v1264
          %v1266 = vmul.f32 %v875, %v1264
          %v1267 = vmul.f32 %v876, %v1264
          %v1268 = vmul.f32 %v878, %v1264
          %v1269 = vmul.f32 %v879, %v1264
          %v1270 = vmul.f32 %v880, %v1264
          %v1271 = vmul.f32 %v882, %v1264
          %v1272 = vmul.f32 %v883, %v1264
          %v1273 = vmul.f32 %v884, %v1264
          %v1274 = vmul.f32 %v886, %v1264
          %v1275 = vmul.f32 %v887, %v1264
          %v1276 = vmul.f32 %v888, %v1264
          %v1289 = vrot.slane %v1265, 6
          %v1290 = vrot.slane %v1266, 6
          %v1291 = vsel %vm825, %v1289, %v1290
          %v1292 = vrot.slane %v1267, 6
          %v1293 = vsel %vm825, %v1290, %v1292
          %v1294 = vrot.slane %v1268, 6
          %v1295 = vrot.slane %v1269, 6
          %v1296 = vsel %vm825, %v1294, %v1295
          %v1297 = vrot.slane %v1270, 6
          %v1298 = vsel %vm825, %v1295, %v1297
          %v1299 = vrot.slane %v1271, 6
          %v1300 = vrot.slane %v1272, 6
          %v1301 = vsel %vm825, %v1299, %v1300
          %v1302 = vrot.slane %v1273, 6
          %v1303 = vsel %vm825, %v1300, %v1302
          %v1304 = vrot.slane %v1274, 6
          %v1305 = vrot.slane %v1275, 6
          %v1306 = vsel %vm825, %v1304, %v1305
          %v1307 = vrot.slane %v1276, 6
          %v1308 = vsel %vm825, %v1305, %v1307
          %v1321 = vadd.f32 %v1249, %v1289
          %v1322 = vadd.f32 %v1250, %v1291
          %v1323 = vadd.f32 %v1251, %v1293
          %v1324 = vadd.f32 %v1252, %v1294
          %v1325 = vadd.f32 %v1253, %v1296
          %v1326 = vadd.f32 %v1254, %v1298
          %v1327 = vadd.f32 %v1255, %v1299
          %v1328 = vadd.f32 %v1256, %v1301
          %v1329 = vadd.f32 %v1257, %v1303
          %v1330 = vadd.f32 %v1258, %v1304
          %v1331 = vadd.f32 %v1259, %v1306
          %v1332 = vadd.f32 %v1260, %v1308
          %s1333 = sadd.s32 %s401, 2
          %s1334 = smul.u32 %s1333, 32
          %s1335 = scalar_lea.vmem %s377, %s1334
          %v1336 = vld [vmem:[%s1335] sm:$0xff]
          %v1337 = vld [vmem:[%s1335 + $0x8] sm:$0xff]
          %v1338 = vld [vmem:[%s1335 + $0x10] sm:$0xff]
          %v1339 = vld [vmem:[%s1335 + $0x18] sm:$0x7]
          %v1340 = vld [vmem:[%s1335 + $0x20] sm:$0xff]
          %v1341 = vld [vmem:[%s1335 + $0x28] sm:$0xff]
          %v1342 = vld [vmem:[%s1335 + $0x30] sm:$0xff]
          %v1343 = vld [vmem:[%s1335 + $0x38] sm:$0x7]
          %v1344 = vld [vmem:[%s1335 + $0x40] sm:$0xff]
          %v1345 = vld [vmem:[%s1335 + $0x48] sm:$0xff]
          %v1346 = vld [vmem:[%s1335 + $0x50] sm:$0xff]
          %v1347 = vld [vmem:[%s1335 + $0x58] sm:$0x7]
          %v1348 = vld [vmem:[%s1335 + $0x60] sm:$0xff]
          %v1349 = vld [vmem:[%s1335 + $0x68] sm:$0xff]
          %v1350 = vld [vmem:[%s1335 + $0x70] sm:$0xff]
          %v1351 = vld [vmem:[%s1335 + $0x78] sm:$0x7]
          %v1352 = vlaneseq
          %v1353 = vshrl.u32 %v1352, 7
          %v1354 = vsub.s32 0, %v1353
          %v1355 = vrot.slane %v382, %v1354
          %v1356 = vmul.f32 %v1336, %v1355
          %v1357 = vmul.f32 %v1337, %v1355
          %v1358 = vmul.f32 %v1338, %v1355
          %v1359 = vmul.f32 %v1340, %v1355
          %v1360 = vmul.f32 %v1341, %v1355
          %v1361 = vmul.f32 %v1342, %v1355
          %v1362 = vmul.f32 %v1344, %v1355
          %v1363 = vmul.f32 %v1345, %v1355
          %v1364 = vmul.f32 %v1346, %v1355
          %v1365 = vmul.f32 %v1348, %v1355
          %v1366 = vmul.f32 %v1349, %v1355
          %v1367 = vmul.f32 %v1350, %v1355
          %v1368 = vadd.f32 %v1321, %v1356
          %v1369 = vadd.f32 %v1322, %v1357
          %v1370 = vadd.f32 %v1323, %v1358
          %v1371 = vadd.f32 %v1324, %v1359
          %v1372 = vadd.f32 %v1325, %v1360
          %v1373 = vadd.f32 %v1326, %v1361
          %v1374 = vadd.f32 %v1327, %v1362
          %v1375 = vadd.f32 %v1328, %v1363
          %v1376 = vadd.f32 %v1329, %v1364
          %v1377 = vadd.f32 %v1330, %v1365
          %v1378 = vadd.f32 %v1331, %v1366
          %v1379 = vadd.f32 %v1332, %v1367
          %v1380 = vlaneseq
          %v1381 = vshrl.u32 %v1380, 7
          %v1382 = vsub.s32 1, %v1381
          %v1383 = vrot.slane %v382, %v1382
          %v1384 = vmul.f32 %v1336, %v1383
          %v1385 = vmul.f32 %v1337, %v1383
          %v1386 = vmul.f32 %v1338, %v1383
          %v1387 = vmul.f32 %v1340, %v1383
          %v1388 = vmul.f32 %v1341, %v1383
          %v1389 = vmul.f32 %v1342, %v1383
          %v1390 = vmul.f32 %v1344, %v1383
          %v1391 = vmul.f32 %v1345, %v1383
          %v1392 = vmul.f32 %v1346, %v1383
          %v1393 = vmul.f32 %v1348, %v1383
          %v1394 = vmul.f32 %v1349, %v1383
          %v1395 = vmul.f32 %v1350, %v1383
          %v1408 = vrot.slane %v1384, 1
          %v1409 = vrot.slane %v1385, 1
          %v1410 = vsel %vm476, %v1408, %v1409
          %v1411 = vrot.slane %v1386, 1
          %v1412 = vsel %vm476, %v1409, %v1411
          %v1413 = vrot.slane %v1387, 1
          %v1414 = vrot.slane %v1388, 1
          %v1415 = vsel %vm476, %v1413, %v1414
          %v1416 = vrot.slane %v1389, 1
          %v1417 = vsel %vm476, %v1414, %v1416
          %v1418 = vrot.slane %v1390, 1
          %v1419 = vrot.slane %v1391, 1
          %v1420 = vsel %vm476, %v1418, %v1419
          %v1421 = vrot.slane %v1392, 1
          %v1422 = vsel %vm476, %v1419, %v1421
          %v1423 = vrot.slane %v1393, 1
          %v1424 = vrot.slane %v1394, 1
          %v1425 = vsel %vm476, %v1423, %v1424
          %v1426 = vrot.slane %v1395, 1
          %v1427 = vsel %vm476, %v1424, %v1426
          %v1440 = vadd.f32 %v1368, %v1410
          %v1441 = vadd.f32 %v1369, %v1412
          %v1442 = vadd.f32 %v1370, %v1411
          %v1443 = vadd.f32 %v1371, %v1415
          %v1444 = vadd.f32 %v1372, %v1417
          %v1445 = vadd.f32 %v1373, %v1416
          %v1446 = vadd.f32 %v1374, %v1420
          %v1447 = vadd.f32 %v1375, %v1422
          %v1448 = vadd.f32 %v1376, %v1421
          %v1449 = vadd.f32 %v1377, %v1425
          %v1450 = vadd.f32 %v1378, %v1427
          %v1451 = vadd.f32 %v1379, %v1426
          %v1452 = vlaneseq
          %v1453 = vshrl.u32 %v1452, 7
          %v1454 = vsub.s32 2, %v1453
          %v1455 = vrot.slane %v382, %v1454
          %v1456 = vmul.f32 %v1336, %v1455
          %v1457 = vmul.f32 %v1337, %v1455
          %v1458 = vmul.f32 %v1338, %v1455
          %v1459 = vmul.f32 %v1340, %v1455
          %v1460 = vmul.f32 %v1341, %v1455
          %v1461 = vmul.f32 %v1342, %v1455
          %v1462 = vmul.f32 %v1344, %v1455
          %v1463 = vmul.f32 %v1345, %v1455
          %v1464 = vmul.f32 %v1346, %v1455
          %v1465 = vmul.f32 %v1348, %v1455
          %v1466 = vmul.f32 %v1349, %v1455
          %v1467 = vmul.f32 %v1350, %v1455
          %v1480 = vrot.slane %v1456, 2
          %v1481 = vrot.slane %v1457, 2
          %v1482 = vsel %vm549, %v1480, %v1481
          %v1483 = vrot.slane %v1458, 2
          %v1484 = vsel %vm549, %v1481, %v1483
          %v1485 = vrot.slane %v1459, 2
          %v1486 = vrot.slane %v1460, 2
          %v1487 = vsel %vm549, %v1485, %v1486
          %v1488 = vrot.slane %v1461, 2
          %v1489 = vsel %vm549, %v1486, %v1488
          %v1490 = vrot.slane %v1462, 2
          %v1491 = vrot.slane %v1463, 2
          %v1492 = vsel %vm549, %v1490, %v1491
          %v1493 = vrot.slane %v1464, 2
          %v1494 = vsel %vm549, %v1491, %v1493
          %v1495 = vrot.slane %v1465, 2
          %v1496 = vrot.slane %v1466, 2
          %v1497 = vsel %vm549, %v1495, %v1496
          %v1498 = vrot.slane %v1467, 2
          %v1499 = vsel %vm549, %v1496, %v1498
          %v1512 = vadd.f32 %v1440, %v1482
          %v1513 = vadd.f32 %v1441, %v1484
          %v1514 = vadd.f32 %v1442, %v1483
          %v1515 = vadd.f32 %v1443, %v1487
          %v1516 = vadd.f32 %v1444, %v1489
          %v1517 = vadd.f32 %v1445, %v1488
          %v1518 = vadd.f32 %v1446, %v1492
          %v1519 = vadd.f32 %v1447, %v1494
          %v1520 = vadd.f32 %v1448, %v1493
          %v1521 = vadd.f32 %v1449, %v1497
          %v1522 = vadd.f32 %v1450, %v1499
          %v1523 = vadd.f32 %v1451, %v1498
          %v1524 = vlaneseq
          %v1525 = vshrl.u32 %v1524, 7
          %v1526 = vsub.s32 3, %v1525
          %v1527 = vrot.slane %v382, %v1526
          %v1528 = vmul.f32 %v1337, %v1527
          %v1529 = vmul.f32 %v1338, %v1527
          %v1530 = vmul.f32 %v1341, %v1527
          %v1531 = vmul.f32 %v1342, %v1527
          %v1532 = vmul.f32 %v1345, %v1527
          %v1533 = vmul.f32 %v1346, %v1527
          %v1534 = vmul.f32 %v1349, %v1527
          %v1535 = vmul.f32 %v1350, %v1527
          %v1544 = vrot.slane %v1528, 3
          %v1545 = vrot.slane %v1529, 3
          %v1546 = vsel %vm614, %v1544, %v1545
          %v1547 = vrot.slane %v1530, 3
          %v1548 = vrot.slane %v1531, 3
          %v1549 = vsel %vm614, %v1547, %v1548
          %v1550 = vrot.slane %v1532, 3
          %v1551 = vrot.slane %v1533, 3
          %v1552 = vsel %vm614, %v1550, %v1551
          %v1553 = vrot.slane %v1534, 3
          %v1554 = vrot.slane %v1535, 3
          %v1555 = vsel %vm614, %v1553, %v1554
          %v1568 = vadd.f32 %v1512, %v1544
          %v1569 = vadd.f32 %v1513, %v1546
          %v1570 = vadd.f32 %v1514, %v1545
          %v1571 = vadd.f32 %v1515, %v1547
          %v1572 = vadd.f32 %v1516, %v1549
          %v1573 = vadd.f32 %v1517, %v1548
          %v1574 = vadd.f32 %v1518, %v1550
          %v1575 = vadd.f32 %v1519, %v1552
          %v1576 = vadd.f32 %v1520, %v1551
          %v1577 = vadd.f32 %v1521, %v1553
          %v1578 = vadd.f32 %v1522, %v1555
          %v1579 = vadd.f32 %v1523, %v1554
          %v1580 = vlaneseq
          %v1581 = vshrl.u32 %v1580, 7
          %v1582 = vsub.s32 4, %v1581
          %v1583 = vrot.slane %v382, %v1582
          %v1584 = vmul.f32 %v1337, %v1583
          %v1585 = vmul.f32 %v1338, %v1583
          %v1586 = vmul.f32 %v1339, %v1583
          %v1587 = vmul.f32 %v1341, %v1583
          %v1588 = vmul.f32 %v1342, %v1583
          %v1589 = vmul.f32 %v1343, %v1583
          %v1590 = vmul.f32 %v1345, %v1583
          %v1591 = vmul.f32 %v1346, %v1583
          %v1592 = vmul.f32 %v1347, %v1583
          %v1593 = vmul.f32 %v1349, %v1583
          %v1594 = vmul.f32 %v1350, %v1583
          %v1595 = vmul.f32 %v1351, %v1583
          %v1608 = vrot.slane %v1584, 4
          %v1609 = vrot.slane %v1585, 4
          %v1610 = vsel %vm679, %v1608, %v1609
          %v1611 = vrot.slane %v1586, 4
          %v1612 = vsel %vm679, %v1609, %v1611
          %v1613 = vrot.slane %v1587, 4
          %v1614 = vrot.slane %v1588, 4
          %v1615 = vsel %vm679, %v1613, %v1614
          %v1616 = vrot.slane %v1589, 4
          %v1617 = vsel %vm679, %v1614, %v1616
          %v1618 = vrot.slane %v1590, 4
          %v1619 = vrot.slane %v1591, 4
          %v1620 = vsel %vm679, %v1618, %v1619
          %v1621 = vrot.slane %v1592, 4
          %v1622 = vsel %vm679, %v1619, %v1621
          %v1623 = vrot.slane %v1593, 4
          %v1624 = vrot.slane %v1594, 4
          %v1625 = vsel %vm679, %v1623, %v1624
          %v1626 = vrot.slane %v1595, 4
          %v1627 = vsel %vm679, %v1624, %v1626
          %v1640 = vadd.f32 %v1568, %v1608
          %v1641 = vadd.f32 %v1569, %v1610
          %v1642 = vadd.f32 %v1570, %v1612
          %v1643 = vadd.f32 %v1571, %v1613
          %v1644 = vadd.f32 %v1572, %v1615
          %v1645 = vadd.f32 %v1573, %v1617
          %v1646 = vadd.f32 %v1574, %v1618
          %v1647 = vadd.f32 %v1575, %v1620
          %v1648 = vadd.f32 %v1576, %v1622
          %v1649 = vadd.f32 %v1577, %v1623
          %v1650 = vadd.f32 %v1578, %v1625
          %v1651 = vadd.f32 %v1579, %v1627
          %v1652 = vlaneseq
          %v1653 = vshrl.u32 %v1652, 7
          %v1654 = vsub.s32 5, %v1653
          %v1655 = vrot.slane %v382, %v1654
          %v1656 = vmul.f32 %v1337, %v1655
          %v1657 = vmul.f32 %v1338, %v1655
          %v1658 = vmul.f32 %v1339, %v1655
          %v1659 = vmul.f32 %v1341, %v1655
          %v1660 = vmul.f32 %v1342, %v1655
          %v1661 = vmul.f32 %v1343, %v1655
          %v1662 = vmul.f32 %v1345, %v1655
          %v1663 = vmul.f32 %v1346, %v1655
          %v1664 = vmul.f32 %v1347, %v1655
          %v1665 = vmul.f32 %v1349, %v1655
          %v1666 = vmul.f32 %v1350, %v1655
          %v1667 = vmul.f32 %v1351, %v1655
          %v1680 = vrot.slane %v1656, 5
          %v1681 = vrot.slane %v1657, 5
          %v1682 = vsel %vm752, %v1680, %v1681
          %v1683 = vrot.slane %v1658, 5
          %v1684 = vsel %vm752, %v1681, %v1683
          %v1685 = vrot.slane %v1659, 5
          %v1686 = vrot.slane %v1660, 5
          %v1687 = vsel %vm752, %v1685, %v1686
          %v1688 = vrot.slane %v1661, 5
          %v1689 = vsel %vm752, %v1686, %v1688
          %v1690 = vrot.slane %v1662, 5
          %v1691 = vrot.slane %v1663, 5
          %v1692 = vsel %vm752, %v1690, %v1691
          %v1693 = vrot.slane %v1664, 5
          %v1694 = vsel %vm752, %v1691, %v1693
          %v1695 = vrot.slane %v1665, 5
          %v1696 = vrot.slane %v1666, 5
          %v1697 = vsel %vm752, %v1695, %v1696
          %v1698 = vrot.slane %v1667, 5
          %v1699 = vsel %vm752, %v1696, %v1698
          %v1712 = vadd.f32 %v1640, %v1680
          %v1713 = vadd.f32 %v1641, %v1682
          %v1714 = vadd.f32 %v1642, %v1684
          %v1715 = vadd.f32 %v1643, %v1685
          %v1716 = vadd.f32 %v1644, %v1687
          %v1717 = vadd.f32 %v1645, %v1689
          %v1718 = vadd.f32 %v1646, %v1690
          %v1719 = vadd.f32 %v1647, %v1692
          %v1720 = vadd.f32 %v1648, %v1694
          %v1721 = vadd.f32 %v1649, %v1695
          %v1722 = vadd.f32 %v1650, %v1697
          %v1723 = vadd.f32 %v1651, %v1699
          %v1724 = vlaneseq
          %v1725 = vshrl.u32 %v1724, 7
          %v1726 = vsub.s32 6, %v1725
          %v1727 = vrot.slane %v382, %v1726
          %v1728 = vmul.f32 %v1337, %v1727
          %v1729 = vmul.f32 %v1338, %v1727
          %v1730 = vmul.f32 %v1339, %v1727
          %v1731 = vmul.f32 %v1341, %v1727
          %v1732 = vmul.f32 %v1342, %v1727
          %v1733 = vmul.f32 %v1343, %v1727
          %v1734 = vmul.f32 %v1345, %v1727
          %v1735 = vmul.f32 %v1346, %v1727
          %v1736 = vmul.f32 %v1347, %v1727
          %v1737 = vmul.f32 %v1349, %v1727
          %v1738 = vmul.f32 %v1350, %v1727
          %v1739 = vmul.f32 %v1351, %v1727
          %v1752 = vrot.slane %v1728, 6
          %v1753 = vrot.slane %v1729, 6
          %v1754 = vsel %vm825, %v1752, %v1753
          %v1755 = vrot.slane %v1730, 6
          %v1756 = vsel %vm825, %v1753, %v1755
          %v1757 = vrot.slane %v1731, 6
          %v1758 = vrot.slane %v1732, 6
          %v1759 = vsel %vm825, %v1757, %v1758
          %v1760 = vrot.slane %v1733, 6
          %v1761 = vsel %vm825, %v1758, %v1760
          %v1762 = vrot.slane %v1734, 6
          %v1763 = vrot.slane %v1735, 6
          %v1764 = vsel %vm825, %v1762, %v1763
          %v1765 = vrot.slane %v1736, 6
          %v1766 = vsel %vm825, %v1763, %v1765
          %v1767 = vrot.slane %v1737, 6
          %v1768 = vrot.slane %v1738, 6
          %v1769 = vsel %vm825, %v1767, %v1768
          %v1770 = vrot.slane %v1739, 6
          %v1771 = vsel %vm825, %v1768, %v1770
          %v1784 = vadd.f32 %v1712, %v1752
          %v1785 = vadd.f32 %v1713, %v1754
          %v1786 = vadd.f32 %v1714, %v1756
          %v1787 = vadd.f32 %v1715, %v1757
          %v1788 = vadd.f32 %v1716, %v1759
          %v1789 = vadd.f32 %v1717, %v1761
          %v1790 = vadd.f32 %v1718, %v1762
          %v1791 = vadd.f32 %v1719, %v1764
          %v1792 = vadd.f32 %v1720, %v1766
          %v1793 = vadd.f32 %v1721, %v1767
          %v1794 = vadd.f32 %v1722, %v1769
          %v1795 = vadd.f32 %v1723, %v1771
          %s1796 = sadd.s32 %s401, 3
          %s1797 = smul.u32 %s1796, 32
          %s1798 = scalar_lea.vmem %s377, %s1797
          %v1799 = vld [vmem:[%s1798] sm:$0xff]
          %v1800 = vld [vmem:[%s1798 + $0x8] sm:$0xff]
          %v1801 = vld [vmem:[%s1798 + $0x10] sm:$0xff]
          %v1802 = vld [vmem:[%s1798 + $0x18] sm:$0x7]
          %v1803 = vld [vmem:[%s1798 + $0x20] sm:$0xff]
          %v1804 = vld [vmem:[%s1798 + $0x28] sm:$0xff]
          %v1805 = vld [vmem:[%s1798 + $0x30] sm:$0xff]
          %v1806 = vld [vmem:[%s1798 + $0x38] sm:$0x7]
          %v1807 = vld [vmem:[%s1798 + $0x40] sm:$0xff]
          %v1808 = vld [vmem:[%s1798 + $0x48] sm:$0xff]
          %v1809 = vld [vmem:[%s1798 + $0x50] sm:$0xff]
          %v1810 = vld [vmem:[%s1798 + $0x58] sm:$0x7]
          %v1811 = vld [vmem:[%s1798 + $0x60] sm:$0xff]
          %v1812 = vld [vmem:[%s1798 + $0x68] sm:$0xff]
          %v1813 = vld [vmem:[%s1798 + $0x70] sm:$0xff]
          %v1814 = vld [vmem:[%s1798 + $0x78] sm:$0x7]
          %v1815 = vlaneseq
          %v1816 = vshrl.u32 %v1815, 7
          %v1817 = vsub.s32 0, %v1816
          %v1818 = vrot.slane %v383, %v1817
          %v1819 = vmul.f32 %v1799, %v1818
          %v1820 = vmul.f32 %v1800, %v1818
          %v1821 = vmul.f32 %v1801, %v1818
          %v1822 = vmul.f32 %v1803, %v1818
          %v1823 = vmul.f32 %v1804, %v1818
          %v1824 = vmul.f32 %v1805, %v1818
          %v1825 = vmul.f32 %v1807, %v1818
          %v1826 = vmul.f32 %v1808, %v1818
          %v1827 = vmul.f32 %v1809, %v1818
          %v1828 = vmul.f32 %v1811, %v1818
          %v1829 = vmul.f32 %v1812, %v1818
          %v1830 = vmul.f32 %v1813, %v1818
          %v1831 = vadd.f32 %v1784, %v1819
          %v1832 = vadd.f32 %v1785, %v1820
          %v1833 = vadd.f32 %v1786, %v1821
          %v1834 = vadd.f32 %v1787, %v1822
          %v1835 = vadd.f32 %v1788, %v1823
          %v1836 = vadd.f32 %v1789, %v1824
          %v1837 = vadd.f32 %v1790, %v1825
          %v1838 = vadd.f32 %v1791, %v1826
          %v1839 = vadd.f32 %v1792, %v1827
          %v1840 = vadd.f32 %v1793, %v1828
          %v1841 = vadd.f32 %v1794, %v1829
          %v1842 = vadd.f32 %v1795, %v1830
          %v1843 = vlaneseq
          %v1844 = vshrl.u32 %v1843, 7
          %v1845 = vsub.s32 1, %v1844
          %v1846 = vrot.slane %v383, %v1845
          %v1847 = vmul.f32 %v1799, %v1846
          %v1848 = vmul.f32 %v1800, %v1846
          %v1849 = vmul.f32 %v1801, %v1846
          %v1850 = vmul.f32 %v1803, %v1846
          %v1851 = vmul.f32 %v1804, %v1846
          %v1852 = vmul.f32 %v1805, %v1846
          %v1853 = vmul.f32 %v1807, %v1846
          %v1854 = vmul.f32 %v1808, %v1846
          %v1855 = vmul.f32 %v1809, %v1846
          %v1856 = vmul.f32 %v1811, %v1846
          %v1857 = vmul.f32 %v1812, %v1846
          %v1858 = vmul.f32 %v1813, %v1846
          %v1871 = vrot.slane %v1847, 1
          %v1872 = vrot.slane %v1848, 1
          %v1873 = vsel %vm476, %v1871, %v1872
          %v1874 = vrot.slane %v1849, 1
          %v1875 = vsel %vm476, %v1872, %v1874
          %v1876 = vrot.slane %v1850, 1
          %v1877 = vrot.slane %v1851, 1
          %v1878 = vsel %vm476, %v1876, %v1877
          %v1879 = vrot.slane %v1852, 1
          %v1880 = vsel %vm476, %v1877, %v1879
          %v1881 = vrot.slane %v1853, 1
          %v1882 = vrot.slane %v1854, 1
          %v1883 = vsel %vm476, %v1881, %v1882
          %v1884 = vrot.slane %v1855, 1
          %v1885 = vsel %vm476, %v1882, %v1884
          %v1886 = vrot.slane %v1856, 1
          %v1887 = vrot.slane %v1857, 1
          %v1888 = vsel %vm476, %v1886, %v1887
          %v1889 = vrot.slane %v1858, 1
          %v1890 = vsel %vm476, %v1887, %v1889
          %v1903 = vadd.f32 %v1831, %v1873
          %v1904 = vadd.f32 %v1832, %v1875
          %v1905 = vadd.f32 %v1833, %v1874
          %v1906 = vadd.f32 %v1834, %v1878
          %v1907 = vadd.f32 %v1835, %v1880
          %v1908 = vadd.f32 %v1836, %v1879
          %v1909 = vadd.f32 %v1837, %v1883
          %v1910 = vadd.f32 %v1838, %v1885
          %v1911 = vadd.f32 %v1839, %v1884
          %v1912 = vadd.f32 %v1840, %v1888
          %v1913 = vadd.f32 %v1841, %v1890
          %v1914 = vadd.f32 %v1842, %v1889
          %v1915 = vlaneseq
          %v1916 = vshrl.u32 %v1915, 7
          %v1917 = vsub.s32 2, %v1916
          %v1918 = vrot.slane %v383, %v1917
          %v1919 = vmul.f32 %v1799, %v1918
          %v1920 = vmul.f32 %v1800, %v1918
          %v1921 = vmul.f32 %v1801, %v1918
          %v1922 = vmul.f32 %v1803, %v1918
          %v1923 = vmul.f32 %v1804, %v1918
          %v1924 = vmul.f32 %v1805, %v1918
          %v1925 = vmul.f32 %v1807, %v1918
          %v1926 = vmul.f32 %v1808, %v1918
          %v1927 = vmul.f32 %v1809, %v1918
          %v1928 = vmul.f32 %v1811, %v1918
          %v1929 = vmul.f32 %v1812, %v1918
          %v1930 = vmul.f32 %v1813, %v1918
          %v1943 = vrot.slane %v1919, 2
          %v1944 = vrot.slane %v1920, 2
          %v1945 = vsel %vm549, %v1943, %v1944
          %v1946 = vrot.slane %v1921, 2
          %v1947 = vsel %vm549, %v1944, %v1946
          %v1948 = vrot.slane %v1922, 2
          %v1949 = vrot.slane %v1923, 2
          %v1950 = vsel %vm549, %v1948, %v1949
          %v1951 = vrot.slane %v1924, 2
          %v1952 = vsel %vm549, %v1949, %v1951
          %v1953 = vrot.slane %v1925, 2
          %v1954 = vrot.slane %v1926, 2
          %v1955 = vsel %vm549, %v1953, %v1954
          %v1956 = vrot.slane %v1927, 2
          %v1957 = vsel %vm549, %v1954, %v1956
          %v1958 = vrot.slane %v1928, 2
          %v1959 = vrot.slane %v1929, 2
          %v1960 = vsel %vm549, %v1958, %v1959
          %v1961 = vrot.slane %v1930, 2
          %v1962 = vsel %vm549, %v1959, %v1961
          %v1975 = vadd.f32 %v1903, %v1945
          %v1976 = vadd.f32 %v1904, %v1947
          %v1977 = vadd.f32 %v1905, %v1946
          %v1978 = vadd.f32 %v1906, %v1950
          %v1979 = vadd.f32 %v1907, %v1952
          %v1980 = vadd.f32 %v1908, %v1951
          %v1981 = vadd.f32 %v1909, %v1955
          %v1982 = vadd.f32 %v1910, %v1957
          %v1983 = vadd.f32 %v1911, %v1956
          %v1984 = vadd.f32 %v1912, %v1960
          %v1985 = vadd.f32 %v1913, %v1962
          %v1986 = vadd.f32 %v1914, %v1961
          %v1987 = vlaneseq
          %v1988 = vshrl.u32 %v1987, 7
          %v1989 = vsub.s32 3, %v1988
          %v1990 = vrot.slane %v383, %v1989
          %v1991 = vmul.f32 %v1800, %v1990
          %v1992 = vmul.f32 %v1801, %v1990
          %v1993 = vmul.f32 %v1804, %v1990
          %v1994 = vmul.f32 %v1805, %v1990
          %v1995 = vmul.f32 %v1808, %v1990
          %v1996 = vmul.f32 %v1809, %v1990
          %v1997 = vmul.f32 %v1812, %v1990
          %v1998 = vmul.f32 %v1813, %v1990
          %v2007 = vrot.slane %v1991, 3
          %v2008 = vrot.slane %v1992, 3
          %v2009 = vsel %vm614, %v2007, %v2008
          %v2010 = vrot.slane %v1993, 3
          %v2011 = vrot.slane %v1994, 3
          %v2012 = vsel %vm614, %v2010, %v2011
          %v2013 = vrot.slane %v1995, 3
          %v2014 = vrot.slane %v1996, 3
          %v2015 = vsel %vm614, %v2013, %v2014
          %v2016 = vrot.slane %v1997, 3
          %v2017 = vrot.slane %v1998, 3
          %v2018 = vsel %vm614, %v2016, %v2017
          %v2031 = vadd.f32 %v1975, %v2007
          %v2032 = vadd.f32 %v1976, %v2009
          %v2033 = vadd.f32 %v1977, %v2008
          %v2034 = vadd.f32 %v1978, %v2010
          %v2035 = vadd.f32 %v1979, %v2012
          %v2036 = vadd.f32 %v1980, %v2011
          %v2037 = vadd.f32 %v1981, %v2013
          %v2038 = vadd.f32 %v1982, %v2015
          %v2039 = vadd.f32 %v1983, %v2014
          %v2040 = vadd.f32 %v1984, %v2016
          %v2041 = vadd.f32 %v1985, %v2018
          %v2042 = vadd.f32 %v1986, %v2017
          %v2043 = vlaneseq
          %v2044 = vshrl.u32 %v2043, 7
          %v2045 = vsub.s32 4, %v2044
          %v2046 = vrot.slane %v383, %v2045
          %v2047 = vmul.f32 %v1800, %v2046
          %v2048 = vmul.f32 %v1801, %v2046
          %v2049 = vmul.f32 %v1802, %v2046
          %v2050 = vmul.f32 %v1804, %v2046
          %v2051 = vmul.f32 %v1805, %v2046
          %v2052 = vmul.f32 %v1806, %v2046
          %v2053 = vmul.f32 %v1808, %v2046
          %v2054 = vmul.f32 %v1809, %v2046
          %v2055 = vmul.f32 %v1810, %v2046
          %v2056 = vmul.f32 %v1812, %v2046
          %v2057 = vmul.f32 %v1813, %v2046
          %v2058 = vmul.f32 %v1814, %v2046
          %v2071 = vrot.slane %v2047, 4
          %v2072 = vrot.slane %v2048, 4
          %v2073 = vsel %vm679, %v2071, %v2072
          %v2074 = vrot.slane %v2049, 4
          %v2075 = vsel %vm679, %v2072, %v2074
          %v2076 = vrot.slane %v2050, 4
          %v2077 = vrot.slane %v2051, 4
          %v2078 = vsel %vm679, %v2076, %v2077
          %v2079 = vrot.slane %v2052, 4
          %v2080 = vsel %vm679, %v2077, %v2079
          %v2081 = vrot.slane %v2053, 4
          %v2082 = vrot.slane %v2054, 4
          %v2083 = vsel %vm679, %v2081, %v2082
          %v2084 = vrot.slane %v2055, 4
          %v2085 = vsel %vm679, %v2082, %v2084
          %v2086 = vrot.slane %v2056, 4
          %v2087 = vrot.slane %v2057, 4
          %v2088 = vsel %vm679, %v2086, %v2087
          %v2089 = vrot.slane %v2058, 4
          %v2090 = vsel %vm679, %v2087, %v2089
          %v2103 = vadd.f32 %v2031, %v2071
          %v2104 = vadd.f32 %v2032, %v2073
          %v2105 = vadd.f32 %v2033, %v2075
          %v2106 = vadd.f32 %v2034, %v2076
          %v2107 = vadd.f32 %v2035, %v2078
          %v2108 = vadd.f32 %v2036, %v2080
          %v2109 = vadd.f32 %v2037, %v2081
          %v2110 = vadd.f32 %v2038, %v2083
          %v2111 = vadd.f32 %v2039, %v2085
          %v2112 = vadd.f32 %v2040, %v2086
          %v2113 = vadd.f32 %v2041, %v2088
          %v2114 = vadd.f32 %v2042, %v2090
          %v2115 = vlaneseq
          %v2116 = vshrl.u32 %v2115, 7
          %v2117 = vsub.s32 5, %v2116
          %v2118 = vrot.slane %v383, %v2117
          %v2119 = vmul.f32 %v1800, %v2118
          %v2120 = vmul.f32 %v1801, %v2118
          %v2121 = vmul.f32 %v1802, %v2118
          %v2122 = vmul.f32 %v1804, %v2118
          %v2123 = vmul.f32 %v1805, %v2118
          %v2124 = vmul.f32 %v1806, %v2118
          %v2125 = vmul.f32 %v1808, %v2118
          %v2126 = vmul.f32 %v1809, %v2118
          %v2127 = vmul.f32 %v1810, %v2118
          %v2128 = vmul.f32 %v1812, %v2118
          %v2129 = vmul.f32 %v1813, %v2118
          %v2130 = vmul.f32 %v1814, %v2118
          %v2143 = vrot.slane %v2119, 5
          %v2144 = vrot.slane %v2120, 5
          %v2145 = vsel %vm752, %v2143, %v2144
          %v2146 = vrot.slane %v2121, 5
          %v2147 = vsel %vm752, %v2144, %v2146
          %v2148 = vrot.slane %v2122, 5
          %v2149 = vrot.slane %v2123, 5
          %v2150 = vsel %vm752, %v2148, %v2149
          %v2151 = vrot.slane %v2124, 5
          %v2152 = vsel %vm752, %v2149, %v2151
          %v2153 = vrot.slane %v2125, 5
          %v2154 = vrot.slane %v2126, 5
          %v2155 = vsel %vm752, %v2153, %v2154
          %v2156 = vrot.slane %v2127, 5
          %v2157 = vsel %vm752, %v2154, %v2156
          %v2158 = vrot.slane %v2128, 5
          %v2159 = vrot.slane %v2129, 5
          %v2160 = vsel %vm752, %v2158, %v2159
          %v2161 = vrot.slane %v2130, 5
          %v2162 = vsel %vm752, %v2159, %v2161
          %v2175 = vadd.f32 %v2103, %v2143
          %v2176 = vadd.f32 %v2104, %v2145
          %v2177 = vadd.f32 %v2105, %v2147
          %v2178 = vadd.f32 %v2106, %v2148
          %v2179 = vadd.f32 %v2107, %v2150
          %v2180 = vadd.f32 %v2108, %v2152
          %v2181 = vadd.f32 %v2109, %v2153
          %v2182 = vadd.f32 %v2110, %v2155
          %v2183 = vadd.f32 %v2111, %v2157
          %v2184 = vadd.f32 %v2112, %v2158
          %v2185 = vadd.f32 %v2113, %v2160
          %v2186 = vadd.f32 %v2114, %v2162
          %v2187 = vlaneseq
          %v2188 = vshrl.u32 %v2187, 7
          %v2189 = vsub.s32 6, %v2188
          %v2190 = vrot.slane %v383, %v2189
          %v2191 = vmul.f32 %v1800, %v2190
          %v2192 = vmul.f32 %v1801, %v2190
          %v2193 = vmul.f32 %v1802, %v2190
          %v2194 = vmul.f32 %v1804, %v2190
          %v2195 = vmul.f32 %v1805, %v2190
          %v2196 = vmul.f32 %v1806, %v2190
          %v2197 = vmul.f32 %v1808, %v2190
          %v2198 = vmul.f32 %v1809, %v2190
          %v2199 = vmul.f32 %v1810, %v2190
          %v2200 = vmul.f32 %v1812, %v2190
          %v2201 = vmul.f32 %v1813, %v2190
          %v2202 = vmul.f32 %v1814, %v2190
          %v2215 = vrot.slane %v2191, 6
          %v2216 = vrot.slane %v2192, 6
          %v2217 = vsel %vm825, %v2215, %v2216
          %v2218 = vrot.slane %v2193, 6
          %v2219 = vsel %vm825, %v2216, %v2218
          %v2220 = vrot.slane %v2194, 6
          %v2221 = vrot.slane %v2195, 6
          %v2222 = vsel %vm825, %v2220, %v2221
          %v2223 = vrot.slane %v2196, 6
          %v2224 = vsel %vm825, %v2221, %v2223
          %v2225 = vrot.slane %v2197, 6
          %v2226 = vrot.slane %v2198, 6
          %v2227 = vsel %vm825, %v2225, %v2226
          %v2228 = vrot.slane %v2199, 6
          %v2229 = vsel %vm825, %v2226, %v2228
          %v2230 = vrot.slane %v2200, 6
          %v2231 = vrot.slane %v2201, 6
          %v2232 = vsel %vm825, %v2230, %v2231
          %v2233 = vrot.slane %v2202, 6
          %v2234 = vsel %vm825, %v2231, %v2233
          %v2247 = vadd.f32 %v2175, %v2215
          %v2248 = vadd.f32 %v2176, %v2217
          %v2249 = vadd.f32 %v2177, %v2219
          %v2250 = vadd.f32 %v2178, %v2220
          %v2251 = vadd.f32 %v2179, %v2222
          %v2252 = vadd.f32 %v2180, %v2224
          %v2253 = vadd.f32 %v2181, %v2225
          %v2254 = vadd.f32 %v2182, %v2227
          %v2255 = vadd.f32 %v2183, %v2229
          %v2256 = vadd.f32 %v2184, %v2230
          %v2257 = vadd.f32 %v2185, %v2232
          %v2258 = vadd.f32 %v2186, %v2234
          %s2259 = sadd.s32 %s401, 4
          %s2260 = smul.u32 %s2259, 32
          %s2261 = scalar_lea.vmem %s377, %s2260
          %v2262 = vld [vmem:[%s2261] sm:$0xff]
          %v2263 = vld [vmem:[%s2261 + $0x8] sm:$0xff]
          %v2264 = vld [vmem:[%s2261 + $0x10] sm:$0xff]
          %v2265 = vld [vmem:[%s2261 + $0x18] sm:$0x7]
          %v2266 = vld [vmem:[%s2261 + $0x20] sm:$0xff]
          %v2267 = vld [vmem:[%s2261 + $0x28] sm:$0xff]
          %v2268 = vld [vmem:[%s2261 + $0x30] sm:$0xff]
          %v2269 = vld [vmem:[%s2261 + $0x38] sm:$0x7]
          %v2270 = vld [vmem:[%s2261 + $0x40] sm:$0xff]
          %v2271 = vld [vmem:[%s2261 + $0x48] sm:$0xff]
          %v2272 = vld [vmem:[%s2261 + $0x50] sm:$0xff]
          %v2273 = vld [vmem:[%s2261 + $0x58] sm:$0x7]
          %v2274 = vld [vmem:[%s2261 + $0x60] sm:$0xff]
          %v2275 = vld [vmem:[%s2261 + $0x68] sm:$0xff]
          %v2276 = vld [vmem:[%s2261 + $0x70] sm:$0xff]
          %v2277 = vld [vmem:[%s2261 + $0x78] sm:$0x7]
          %v2278 = vlaneseq
          %v2279 = vshrl.u32 %v2278, 7
          %v2280 = vsub.s32 0, %v2279
          %v2281 = vrot.slane %v384, %v2280
          %v2282 = vmul.f32 %v2262, %v2281
          %v2283 = vmul.f32 %v2263, %v2281
          %v2284 = vmul.f32 %v2264, %v2281
          %v2285 = vmul.f32 %v2266, %v2281
          %v2286 = vmul.f32 %v2267, %v2281
          %v2287 = vmul.f32 %v2268, %v2281
          %v2288 = vmul.f32 %v2270, %v2281
          %v2289 = vmul.f32 %v2271, %v2281
          %v2290 = vmul.f32 %v2272, %v2281
          %v2291 = vmul.f32 %v2274, %v2281
          %v2292 = vmul.f32 %v2275, %v2281
          %v2293 = vmul.f32 %v2276, %v2281
          %v2294 = vadd.f32 %v2247, %v2282
          %v2295 = vadd.f32 %v2248, %v2283
          %v2296 = vadd.f32 %v2249, %v2284
          %v2297 = vadd.f32 %v2250, %v2285
          %v2298 = vadd.f32 %v2251, %v2286
          %v2299 = vadd.f32 %v2252, %v2287
          %v2300 = vadd.f32 %v2253, %v2288
          %v2301 = vadd.f32 %v2254, %v2289
          %v2302 = vadd.f32 %v2255, %v2290
          %v2303 = vadd.f32 %v2256, %v2291
          %v2304 = vadd.f32 %v2257, %v2292
          %v2305 = vadd.f32 %v2258, %v2293
          %v2306 = vlaneseq
          %v2307 = vshrl.u32 %v2306, 7
          %v2308 = vsub.s32 1, %v2307
          %v2309 = vrot.slane %v384, %v2308
          %v2310 = vmul.f32 %v2262, %v2309
          %v2311 = vmul.f32 %v2263, %v2309
          %v2312 = vmul.f32 %v2264, %v2309
          %v2313 = vmul.f32 %v2266, %v2309
          %v2314 = vmul.f32 %v2267, %v2309
          %v2315 = vmul.f32 %v2268, %v2309
          %v2316 = vmul.f32 %v2270, %v2309
          %v2317 = vmul.f32 %v2271, %v2309
          %v2318 = vmul.f32 %v2272, %v2309
          %v2319 = vmul.f32 %v2274, %v2309
          %v2320 = vmul.f32 %v2275, %v2309
          %v2321 = vmul.f32 %v2276, %v2309
          %v2334 = vrot.slane %v2310, 1
          %v2335 = vrot.slane %v2311, 1
          %v2336 = vsel %vm476, %v2334, %v2335
          %v2337 = vrot.slane %v2312, 1
          %v2338 = vsel %vm476, %v2335, %v2337
          %v2339 = vrot.slane %v2313, 1
          %v2340 = vrot.slane %v2314, 1
          %v2341 = vsel %vm476, %v2339, %v2340
          %v2342 = vrot.slane %v2315, 1
          %v2343 = vsel %vm476, %v2340, %v2342
          %v2344 = vrot.slane %v2316, 1
          %v2345 = vrot.slane %v2317, 1
          %v2346 = vsel %vm476, %v2344, %v2345
          %v2347 = vrot.slane %v2318, 1
          %v2348 = vsel %vm476, %v2345, %v2347
          %v2349 = vrot.slane %v2319, 1
          %v2350 = vrot.slane %v2320, 1
          %v2351 = vsel %vm476, %v2349, %v2350
          %v2352 = vrot.slane %v2321, 1
          %v2353 = vsel %vm476, %v2350, %v2352
          %v2366 = vadd.f32 %v2294, %v2336
          %v2367 = vadd.f32 %v2295, %v2338
          %v2368 = vadd.f32 %v2296, %v2337
          %v2369 = vadd.f32 %v2297, %v2341
          %v2370 = vadd.f32 %v2298, %v2343
          %v2371 = vadd.f32 %v2299, %v2342
          %v2372 = vadd.f32 %v2300, %v2346
          %v2373 = vadd.f32 %v2301, %v2348
          %v2374 = vadd.f32 %v2302, %v2347
          %v2375 = vadd.f32 %v2303, %v2351
          %v2376 = vadd.f32 %v2304, %v2353
          %v2377 = vadd.f32 %v2305, %v2352
          %v2378 = vlaneseq
          %v2379 = vshrl.u32 %v2378, 7
          %v2380 = vsub.s32 2, %v2379
          %v2381 = vrot.slane %v384, %v2380
          %v2382 = vmul.f32 %v2262, %v2381
          %v2383 = vmul.f32 %v2263, %v2381
          %v2384 = vmul.f32 %v2264, %v2381
          %v2385 = vmul.f32 %v2266, %v2381
          %v2386 = vmul.f32 %v2267, %v2381
          %v2387 = vmul.f32 %v2268, %v2381
          %v2388 = vmul.f32 %v2270, %v2381
          %v2389 = vmul.f32 %v2271, %v2381
          %v2390 = vmul.f32 %v2272, %v2381
          %v2391 = vmul.f32 %v2274, %v2381
          %v2392 = vmul.f32 %v2275, %v2381
          %v2393 = vmul.f32 %v2276, %v2381
          %v2406 = vrot.slane %v2382, 2
          %v2407 = vrot.slane %v2383, 2
          %v2408 = vsel %vm549, %v2406, %v2407
          %v2409 = vrot.slane %v2384, 2
          %v2410 = vsel %vm549, %v2407, %v2409
          %v2411 = vrot.slane %v2385, 2
          %v2412 = vrot.slane %v2386, 2
          %v2413 = vsel %vm549, %v2411, %v2412
          %v2414 = vrot.slane %v2387, 2
          %v2415 = vsel %vm549, %v2412, %v2414
          %v2416 = vrot.slane %v2388, 2
          %v2417 = vrot.slane %v2389, 2
          %v2418 = vsel %vm549, %v2416, %v2417
          %v2419 = vrot.slane %v2390, 2
          %v2420 = vsel %vm549, %v2417, %v2419
          %v2421 = vrot.slane %v2391, 2
          %v2422 = vrot.slane %v2392, 2
          %v2423 = vsel %vm549, %v2421, %v2422
          %v2424 = vrot.slane %v2393, 2
          %v2425 = vsel %vm549, %v2422, %v2424
          %v2438 = vadd.f32 %v2366, %v2408
          %v2439 = vadd.f32 %v2367, %v2410
          %v2440 = vadd.f32 %v2368, %v2409
          %v2441 = vadd.f32 %v2369, %v2413
          %v2442 = vadd.f32 %v2370, %v2415
          %v2443 = vadd.f32 %v2371, %v2414
          %v2444 = vadd.f32 %v2372, %v2418
          %v2445 = vadd.f32 %v2373, %v2420
          %v2446 = vadd.f32 %v2374, %v2419
          %v2447 = vadd.f32 %v2375, %v2423
          %v2448 = vadd.f32 %v2376, %v2425
          %v2449 = vadd.f32 %v2377, %v2424
          %v2450 = vlaneseq
          %v2451 = vshrl.u32 %v2450, 7
          %v2452 = vsub.s32 3, %v2451
          %v2453 = vrot.slane %v384, %v2452
          %v2454 = vmul.f32 %v2263, %v2453
          %v2455 = vmul.f32 %v2264, %v2453
          %v2456 = vmul.f32 %v2267, %v2453
          %v2457 = vmul.f32 %v2268, %v2453
          %v2458 = vmul.f32 %v2271, %v2453
          %v2459 = vmul.f32 %v2272, %v2453
          %v2460 = vmul.f32 %v2275, %v2453
          %v2461 = vmul.f32 %v2276, %v2453
          %v2470 = vrot.slane %v2454, 3
          %v2471 = vrot.slane %v2455, 3
          %v2472 = vsel %vm614, %v2470, %v2471
          %v2473 = vrot.slane %v2456, 3
          %v2474 = vrot.slane %v2457, 3
          %v2475 = vsel %vm614, %v2473, %v2474
          %v2476 = vrot.slane %v2458, 3
          %v2477 = vrot.slane %v2459, 3
          %v2478 = vsel %vm614, %v2476, %v2477
          %v2479 = vrot.slane %v2460, 3
          %v2480 = vrot.slane %v2461, 3
          %v2481 = vsel %vm614, %v2479, %v2480
          %v2494 = vadd.f32 %v2438, %v2470
          %v2495 = vadd.f32 %v2439, %v2472
          %v2496 = vadd.f32 %v2440, %v2471
          %v2497 = vadd.f32 %v2441, %v2473
          %v2498 = vadd.f32 %v2442, %v2475
          %v2499 = vadd.f32 %v2443, %v2474
          %v2500 = vadd.f32 %v2444, %v2476
          %v2501 = vadd.f32 %v2445, %v2478
          %v2502 = vadd.f32 %v2446, %v2477
          %v2503 = vadd.f32 %v2447, %v2479
          %v2504 = vadd.f32 %v2448, %v2481
          %v2505 = vadd.f32 %v2449, %v2480
          %v2506 = vlaneseq
          %v2507 = vshrl.u32 %v2506, 7
          %v2508 = vsub.s32 4, %v2507
          %v2509 = vrot.slane %v384, %v2508
          %v2510 = vmul.f32 %v2263, %v2509
          %v2511 = vmul.f32 %v2264, %v2509
          %v2512 = vmul.f32 %v2265, %v2509
          %v2513 = vmul.f32 %v2267, %v2509
          %v2514 = vmul.f32 %v2268, %v2509
          %v2515 = vmul.f32 %v2269, %v2509
          %v2516 = vmul.f32 %v2271, %v2509
          %v2517 = vmul.f32 %v2272, %v2509
          %v2518 = vmul.f32 %v2273, %v2509
          %v2519 = vmul.f32 %v2275, %v2509
          %v2520 = vmul.f32 %v2276, %v2509
          %v2521 = vmul.f32 %v2277, %v2509
          %v2534 = vrot.slane %v2510, 4
          %v2535 = vrot.slane %v2511, 4
          %v2536 = vsel %vm679, %v2534, %v2535
          %v2537 = vrot.slane %v2512, 4
          %v2538 = vsel %vm679, %v2535, %v2537
          %v2539 = vrot.slane %v2513, 4
          %v2540 = vrot.slane %v2514, 4
          %v2541 = vsel %vm679, %v2539, %v2540
          %v2542 = vrot.slane %v2515, 4
          %v2543 = vsel %vm679, %v2540, %v2542
          %v2544 = vrot.slane %v2516, 4
          %v2545 = vrot.slane %v2517, 4
          %v2546 = vsel %vm679, %v2544, %v2545
          %v2547 = vrot.slane %v2518, 4
          %v2548 = vsel %vm679, %v2545, %v2547
          %v2549 = vrot.slane %v2519, 4
          %v2550 = vrot.slane %v2520, 4
          %v2551 = vsel %vm679, %v2549, %v2550
          %v2552 = vrot.slane %v2521, 4
          %v2553 = vsel %vm679, %v2550, %v2552
          %v2566 = vadd.f32 %v2494, %v2534
          %v2567 = vadd.f32 %v2495, %v2536
          %v2568 = vadd.f32 %v2496, %v2538
          %v2569 = vadd.f32 %v2497, %v2539
          %v2570 = vadd.f32 %v2498, %v2541
          %v2571 = vadd.f32 %v2499, %v2543
          %v2572 = vadd.f32 %v2500, %v2544
          %v2573 = vadd.f32 %v2501, %v2546
          %v2574 = vadd.f32 %v2502, %v2548
          %v2575 = vadd.f32 %v2503, %v2549
          %v2576 = vadd.f32 %v2504, %v2551
          %v2577 = vadd.f32 %v2505, %v2553
          %v2578 = vlaneseq
          %v2579 = vshrl.u32 %v2578, 7
          %v2580 = vsub.s32 5, %v2579
          %v2581 = vrot.slane %v384, %v2580
          %v2582 = vmul.f32 %v2263, %v2581
          %v2583 = vmul.f32 %v2264, %v2581
          %v2584 = vmul.f32 %v2265, %v2581
          %v2585 = vmul.f32 %v2267, %v2581
          %v2586 = vmul.f32 %v2268, %v2581
          %v2587 = vmul.f32 %v2269, %v2581
          %v2588 = vmul.f32 %v2271, %v2581
          %v2589 = vmul.f32 %v2272, %v2581
          %v2590 = vmul.f32 %v2273, %v2581
          %v2591 = vmul.f32 %v2275, %v2581
          %v2592 = vmul.f32 %v2276, %v2581
          %v2593 = vmul.f32 %v2277, %v2581
          %v2606 = vrot.slane %v2582, 5
          %v2607 = vrot.slane %v2583, 5
          %v2608 = vsel %vm752, %v2606, %v2607
          %v2609 = vrot.slane %v2584, 5
          %v2610 = vsel %vm752, %v2607, %v2609
          %v2611 = vrot.slane %v2585, 5
          %v2612 = vrot.slane %v2586, 5
          %v2613 = vsel %vm752, %v2611, %v2612
          %v2614 = vrot.slane %v2587, 5
          %v2615 = vsel %vm752, %v2612, %v2614
          %v2616 = vrot.slane %v2588, 5
          %v2617 = vrot.slane %v2589, 5
          %v2618 = vsel %vm752, %v2616, %v2617
          %v2619 = vrot.slane %v2590, 5
          %v2620 = vsel %vm752, %v2617, %v2619
          %v2621 = vrot.slane %v2591, 5
          %v2622 = vrot.slane %v2592, 5
          %v2623 = vsel %vm752, %v2621, %v2622
          %v2624 = vrot.slane %v2593, 5
          %v2625 = vsel %vm752, %v2622, %v2624
          %v2638 = vadd.f32 %v2566, %v2606
          %v2639 = vadd.f32 %v2567, %v2608
          %v2640 = vadd.f32 %v2568, %v2610
          %v2641 = vadd.f32 %v2569, %v2611
          %v2642 = vadd.f32 %v2570, %v2613
          %v2643 = vadd.f32 %v2571, %v2615
          %v2644 = vadd.f32 %v2572, %v2616
          %v2645 = vadd.f32 %v2573, %v2618
          %v2646 = vadd.f32 %v2574, %v2620
          %v2647 = vadd.f32 %v2575, %v2621
          %v2648 = vadd.f32 %v2576, %v2623
          %v2649 = vadd.f32 %v2577, %v2625
          %v2650 = vlaneseq
          %v2651 = vshrl.u32 %v2650, 7
          %v2652 = vsub.s32 6, %v2651
          %v2653 = vrot.slane %v384, %v2652
          %v2654 = vmul.f32 %v2263, %v2653
          %v2655 = vmul.f32 %v2264, %v2653
          %v2656 = vmul.f32 %v2265, %v2653
          %v2657 = vmul.f32 %v2267, %v2653
          %v2658 = vmul.f32 %v2268, %v2653
          %v2659 = vmul.f32 %v2269, %v2653
          %v2660 = vmul.f32 %v2271, %v2653
          %v2661 = vmul.f32 %v2272, %v2653
          %v2662 = vmul.f32 %v2273, %v2653
          %v2663 = vmul.f32 %v2275, %v2653
          %v2664 = vmul.f32 %v2276, %v2653
          %v2665 = vmul.f32 %v2277, %v2653
          %v2678 = vrot.slane %v2654, 6
          %v2679 = vrot.slane %v2655, 6
          %v2680 = vsel %vm825, %v2678, %v2679
          %v2681 = vrot.slane %v2656, 6
          %v2682 = vsel %vm825, %v2679, %v2681
          %v2683 = vrot.slane %v2657, 6
          %v2684 = vrot.slane %v2658, 6
          %v2685 = vsel %vm825, %v2683, %v2684
          %v2686 = vrot.slane %v2659, 6
          %v2687 = vsel %vm825, %v2684, %v2686
          %v2688 = vrot.slane %v2660, 6
          %v2689 = vrot.slane %v2661, 6
          %v2690 = vsel %vm825, %v2688, %v2689
          %v2691 = vrot.slane %v2662, 6
          %v2692 = vsel %vm825, %v2689, %v2691
          %v2693 = vrot.slane %v2663, 6
          %v2694 = vrot.slane %v2664, 6
          %v2695 = vsel %vm825, %v2693, %v2694
          %v2696 = vrot.slane %v2665, 6
          %v2697 = vsel %vm825, %v2694, %v2696
          %v2710 = vadd.f32 %v2638, %v2678
          %v2711 = vadd.f32 %v2639, %v2680
          %v2712 = vadd.f32 %v2640, %v2682
          %v2713 = vadd.f32 %v2641, %v2683
          %v2714 = vadd.f32 %v2642, %v2685
          %v2715 = vadd.f32 %v2643, %v2687
          %v2716 = vadd.f32 %v2644, %v2688
          %v2717 = vadd.f32 %v2645, %v2690
          %v2718 = vadd.f32 %v2646, %v2692
          %v2719 = vadd.f32 %v2647, %v2693
          %v2720 = vadd.f32 %v2648, %v2695
          %v2721 = vadd.f32 %v2649, %v2697
          %s2722 = sadd.s32 %s401, 5
          %s2723 = smul.u32 %s2722, 32
          %s2724 = scalar_lea.vmem %s377, %s2723
          %v2725 = vld [vmem:[%s2724] sm:$0xff]
          %v2726 = vld [vmem:[%s2724 + $0x8] sm:$0xff]
          %v2727 = vld [vmem:[%s2724 + $0x10] sm:$0xff]
          %v2728 = vld [vmem:[%s2724 + $0x18] sm:$0x7]
          %v2729 = vld [vmem:[%s2724 + $0x20] sm:$0xff]
          %v2730 = vld [vmem:[%s2724 + $0x28] sm:$0xff]
          %v2731 = vld [vmem:[%s2724 + $0x30] sm:$0xff]
          %v2732 = vld [vmem:[%s2724 + $0x38] sm:$0x7]
          %v2733 = vld [vmem:[%s2724 + $0x40] sm:$0xff]
          %v2734 = vld [vmem:[%s2724 + $0x48] sm:$0xff]
          %v2735 = vld [vmem:[%s2724 + $0x50] sm:$0xff]
          %v2736 = vld [vmem:[%s2724 + $0x58] sm:$0x7]
          %v2737 = vld [vmem:[%s2724 + $0x60] sm:$0xff]
          %v2738 = vld [vmem:[%s2724 + $0x68] sm:$0xff]
          %v2739 = vld [vmem:[%s2724 + $0x70] sm:$0xff]
          %v2740 = vld [vmem:[%s2724 + $0x78] sm:$0x7]
          %v2741 = vlaneseq
          %v2742 = vshrl.u32 %v2741, 7
          %v2743 = vsub.s32 0, %v2742
          %v2744 = vrot.slane %v385, %v2743
          %v2745 = vmul.f32 %v2725, %v2744
          %v2746 = vmul.f32 %v2726, %v2744
          %v2747 = vmul.f32 %v2727, %v2744
          %v2748 = vmul.f32 %v2729, %v2744
          %v2749 = vmul.f32 %v2730, %v2744
          %v2750 = vmul.f32 %v2731, %v2744
          %v2751 = vmul.f32 %v2733, %v2744
          %v2752 = vmul.f32 %v2734, %v2744
          %v2753 = vmul.f32 %v2735, %v2744
          %v2754 = vmul.f32 %v2737, %v2744
          %v2755 = vmul.f32 %v2738, %v2744
          %v2756 = vmul.f32 %v2739, %v2744
          %v2757 = vadd.f32 %v2710, %v2745
          %v2758 = vadd.f32 %v2711, %v2746
          %v2759 = vadd.f32 %v2712, %v2747
          %v2760 = vadd.f32 %v2713, %v2748
          %v2761 = vadd.f32 %v2714, %v2749
          %v2762 = vadd.f32 %v2715, %v2750
          %v2763 = vadd.f32 %v2716, %v2751
          %v2764 = vadd.f32 %v2717, %v2752
          %v2765 = vadd.f32 %v2718, %v2753
          %v2766 = vadd.f32 %v2719, %v2754
          %v2767 = vadd.f32 %v2720, %v2755
          %v2768 = vadd.f32 %v2721, %v2756
          %v2769 = vlaneseq
          %v2770 = vshrl.u32 %v2769, 7
          %v2771 = vsub.s32 1, %v2770
          %v2772 = vrot.slane %v385, %v2771
          %v2773 = vmul.f32 %v2725, %v2772
          %v2774 = vmul.f32 %v2726, %v2772
          %v2775 = vmul.f32 %v2727, %v2772
          %v2776 = vmul.f32 %v2729, %v2772
          %v2777 = vmul.f32 %v2730, %v2772
          %v2778 = vmul.f32 %v2731, %v2772
          %v2779 = vmul.f32 %v2733, %v2772
          %v2780 = vmul.f32 %v2734, %v2772
          %v2781 = vmul.f32 %v2735, %v2772
          %v2782 = vmul.f32 %v2737, %v2772
          %v2783 = vmul.f32 %v2738, %v2772
          %v2784 = vmul.f32 %v2739, %v2772
          %v2797 = vrot.slane %v2773, 1
          %v2798 = vrot.slane %v2774, 1
          %v2799 = vsel %vm476, %v2797, %v2798
          %v2800 = vrot.slane %v2775, 1
          %v2801 = vsel %vm476, %v2798, %v2800
          %v2802 = vrot.slane %v2776, 1
          %v2803 = vrot.slane %v2777, 1
          %v2804 = vsel %vm476, %v2802, %v2803
          %v2805 = vrot.slane %v2778, 1
          %v2806 = vsel %vm476, %v2803, %v2805
          %v2807 = vrot.slane %v2779, 1
          %v2808 = vrot.slane %v2780, 1
          %v2809 = vsel %vm476, %v2807, %v2808
          %v2810 = vrot.slane %v2781, 1
          %v2811 = vsel %vm476, %v2808, %v2810
          %v2812 = vrot.slane %v2782, 1
          %v2813 = vrot.slane %v2783, 1
          %v2814 = vsel %vm476, %v2812, %v2813
          %v2815 = vrot.slane %v2784, 1
          %v2816 = vsel %vm476, %v2813, %v2815
          %v2829 = vadd.f32 %v2757, %v2799
          %v2830 = vadd.f32 %v2758, %v2801
          %v2831 = vadd.f32 %v2759, %v2800
          %v2832 = vadd.f32 %v2760, %v2804
          %v2833 = vadd.f32 %v2761, %v2806
          %v2834 = vadd.f32 %v2762, %v2805
          %v2835 = vadd.f32 %v2763, %v2809
          %v2836 = vadd.f32 %v2764, %v2811
          %v2837 = vadd.f32 %v2765, %v2810
          %v2838 = vadd.f32 %v2766, %v2814
          %v2839 = vadd.f32 %v2767, %v2816
          %v2840 = vadd.f32 %v2768, %v2815
          %v2841 = vlaneseq
          %v2842 = vshrl.u32 %v2841, 7
          %v2843 = vsub.s32 2, %v2842
          %v2844 = vrot.slane %v385, %v2843
          %v2845 = vmul.f32 %v2725, %v2844
          %v2846 = vmul.f32 %v2726, %v2844
          %v2847 = vmul.f32 %v2727, %v2844
          %v2848 = vmul.f32 %v2729, %v2844
          %v2849 = vmul.f32 %v2730, %v2844
          %v2850 = vmul.f32 %v2731, %v2844
          %v2851 = vmul.f32 %v2733, %v2844
          %v2852 = vmul.f32 %v2734, %v2844
          %v2853 = vmul.f32 %v2735, %v2844
          %v2854 = vmul.f32 %v2737, %v2844
          %v2855 = vmul.f32 %v2738, %v2844
          %v2856 = vmul.f32 %v2739, %v2844
          %v2869 = vrot.slane %v2845, 2
          %v2870 = vrot.slane %v2846, 2
          %v2871 = vsel %vm549, %v2869, %v2870
          %v2872 = vrot.slane %v2847, 2
          %v2873 = vsel %vm549, %v2870, %v2872
          %v2874 = vrot.slane %v2848, 2
          %v2875 = vrot.slane %v2849, 2
          %v2876 = vsel %vm549, %v2874, %v2875
          %v2877 = vrot.slane %v2850, 2
          %v2878 = vsel %vm549, %v2875, %v2877
          %v2879 = vrot.slane %v2851, 2
          %v2880 = vrot.slane %v2852, 2
          %v2881 = vsel %vm549, %v2879, %v2880
          %v2882 = vrot.slane %v2853, 2
          %v2883 = vsel %vm549, %v2880, %v2882
          %v2884 = vrot.slane %v2854, 2
          %v2885 = vrot.slane %v2855, 2
          %v2886 = vsel %vm549, %v2884, %v2885
          %v2887 = vrot.slane %v2856, 2
          %v2888 = vsel %vm549, %v2885, %v2887
          %v2901 = vadd.f32 %v2829, %v2871
          %v2902 = vadd.f32 %v2830, %v2873
          %v2903 = vadd.f32 %v2831, %v2872
          %v2904 = vadd.f32 %v2832, %v2876
          %v2905 = vadd.f32 %v2833, %v2878
          %v2906 = vadd.f32 %v2834, %v2877
          %v2907 = vadd.f32 %v2835, %v2881
          %v2908 = vadd.f32 %v2836, %v2883
          %v2909 = vadd.f32 %v2837, %v2882
          %v2910 = vadd.f32 %v2838, %v2886
          %v2911 = vadd.f32 %v2839, %v2888
          %v2912 = vadd.f32 %v2840, %v2887
          %v2913 = vlaneseq
          %v2914 = vshrl.u32 %v2913, 7
          %v2915 = vsub.s32 3, %v2914
          %v2916 = vrot.slane %v385, %v2915
          %v2917 = vmul.f32 %v2726, %v2916
          %v2918 = vmul.f32 %v2727, %v2916
          %v2919 = vmul.f32 %v2730, %v2916
          %v2920 = vmul.f32 %v2731, %v2916
          %v2921 = vmul.f32 %v2734, %v2916
          %v2922 = vmul.f32 %v2735, %v2916
          %v2923 = vmul.f32 %v2738, %v2916
          %v2924 = vmul.f32 %v2739, %v2916
          %v2933 = vrot.slane %v2917, 3
          %v2934 = vrot.slane %v2918, 3
          %v2935 = vsel %vm614, %v2933, %v2934
          %v2936 = vrot.slane %v2919, 3
          %v2937 = vrot.slane %v2920, 3
          %v2938 = vsel %vm614, %v2936, %v2937
          %v2939 = vrot.slane %v2921, 3
          %v2940 = vrot.slane %v2922, 3
          %v2941 = vsel %vm614, %v2939, %v2940
          %v2942 = vrot.slane %v2923, 3
          %v2943 = vrot.slane %v2924, 3
          %v2944 = vsel %vm614, %v2942, %v2943
          %v2957 = vadd.f32 %v2901, %v2933
          %v2958 = vadd.f32 %v2902, %v2935
          %v2959 = vadd.f32 %v2903, %v2934
          %v2960 = vadd.f32 %v2904, %v2936
          %v2961 = vadd.f32 %v2905, %v2938
          %v2962 = vadd.f32 %v2906, %v2937
          %v2963 = vadd.f32 %v2907, %v2939
          %v2964 = vadd.f32 %v2908, %v2941
          %v2965 = vadd.f32 %v2909, %v2940
          %v2966 = vadd.f32 %v2910, %v2942
          %v2967 = vadd.f32 %v2911, %v2944
          %v2968 = vadd.f32 %v2912, %v2943
          %v2969 = vlaneseq
          %v2970 = vshrl.u32 %v2969, 7
          %v2971 = vsub.s32 4, %v2970
          %v2972 = vrot.slane %v385, %v2971
          %v2973 = vmul.f32 %v2726, %v2972
          %v2974 = vmul.f32 %v2727, %v2972
          %v2975 = vmul.f32 %v2728, %v2972
          %v2976 = vmul.f32 %v2730, %v2972
          %v2977 = vmul.f32 %v2731, %v2972
          %v2978 = vmul.f32 %v2732, %v2972
          %v2979 = vmul.f32 %v2734, %v2972
          %v2980 = vmul.f32 %v2735, %v2972
          %v2981 = vmul.f32 %v2736, %v2972
          %v2982 = vmul.f32 %v2738, %v2972
          %v2983 = vmul.f32 %v2739, %v2972
          %v2984 = vmul.f32 %v2740, %v2972
          %v2997 = vrot.slane %v2973, 4
          %v2998 = vrot.slane %v2974, 4
          %v2999 = vsel %vm679, %v2997, %v2998
          %v3000 = vrot.slane %v2975, 4
          %v3001 = vsel %vm679, %v2998, %v3000
          %v3002 = vrot.slane %v2976, 4
          %v3003 = vrot.slane %v2977, 4
          %v3004 = vsel %vm679, %v3002, %v3003
          %v3005 = vrot.slane %v2978, 4
          %v3006 = vsel %vm679, %v3003, %v3005
          %v3007 = vrot.slane %v2979, 4
          %v3008 = vrot.slane %v2980, 4
          %v3009 = vsel %vm679, %v3007, %v3008
          %v3010 = vrot.slane %v2981, 4
          %v3011 = vsel %vm679, %v3008, %v3010
          %v3012 = vrot.slane %v2982, 4
          %v3013 = vrot.slane %v2983, 4
          %v3014 = vsel %vm679, %v3012, %v3013
          %v3015 = vrot.slane %v2984, 4
          %v3016 = vsel %vm679, %v3013, %v3015
          %v3029 = vadd.f32 %v2957, %v2997
          %v3030 = vadd.f32 %v2958, %v2999
          %v3031 = vadd.f32 %v2959, %v3001
          %v3032 = vadd.f32 %v2960, %v3002
          %v3033 = vadd.f32 %v2961, %v3004
          %v3034 = vadd.f32 %v2962, %v3006
          %v3035 = vadd.f32 %v2963, %v3007
          %v3036 = vadd.f32 %v2964, %v3009
          %v3037 = vadd.f32 %v2965, %v3011
          %v3038 = vadd.f32 %v2966, %v3012
          %v3039 = vadd.f32 %v2967, %v3014
          %v3040 = vadd.f32 %v2968, %v3016
          %v3041 = vlaneseq
          %v3042 = vshrl.u32 %v3041, 7
          %v3043 = vsub.s32 5, %v3042
          %v3044 = vrot.slane %v385, %v3043
          %v3045 = vmul.f32 %v2726, %v3044
          %v3046 = vmul.f32 %v2727, %v3044
          %v3047 = vmul.f32 %v2728, %v3044
          %v3048 = vmul.f32 %v2730, %v3044
          %v3049 = vmul.f32 %v2731, %v3044
          %v3050 = vmul.f32 %v2732, %v3044
          %v3051 = vmul.f32 %v2734, %v3044
          %v3052 = vmul.f32 %v2735, %v3044
          %v3053 = vmul.f32 %v2736, %v3044
          %v3054 = vmul.f32 %v2738, %v3044
          %v3055 = vmul.f32 %v2739, %v3044
          %v3056 = vmul.f32 %v2740, %v3044
          %v3069 = vrot.slane %v3045, 5
          %v3070 = vrot.slane %v3046, 5
          %v3071 = vsel %vm752, %v3069, %v3070
          %v3072 = vrot.slane %v3047, 5
          %v3073 = vsel %vm752, %v3070, %v3072
          %v3074 = vrot.slane %v3048, 5
          %v3075 = vrot.slane %v3049, 5
          %v3076 = vsel %vm752, %v3074, %v3075
          %v3077 = vrot.slane %v3050, 5
          %v3078 = vsel %vm752, %v3075, %v3077
          %v3079 = vrot.slane %v3051, 5
          %v3080 = vrot.slane %v3052, 5
          %v3081 = vsel %vm752, %v3079, %v3080
          %v3082 = vrot.slane %v3053, 5
          %v3083 = vsel %vm752, %v3080, %v3082
          %v3084 = vrot.slane %v3054, 5
          %v3085 = vrot.slane %v3055, 5
          %v3086 = vsel %vm752, %v3084, %v3085
          %v3087 = vrot.slane %v3056, 5
          %v3088 = vsel %vm752, %v3085, %v3087
          %v3101 = vadd.f32 %v3029, %v3069
          %v3102 = vadd.f32 %v3030, %v3071
          %v3103 = vadd.f32 %v3031, %v3073
          %v3104 = vadd.f32 %v3032, %v3074
          %v3105 = vadd.f32 %v3033, %v3076
          %v3106 = vadd.f32 %v3034, %v3078
          %v3107 = vadd.f32 %v3035, %v3079
          %v3108 = vadd.f32 %v3036, %v3081
          %v3109 = vadd.f32 %v3037, %v3083
          %v3110 = vadd.f32 %v3038, %v3084
          %v3111 = vadd.f32 %v3039, %v3086
          %v3112 = vadd.f32 %v3040, %v3088
          %v3113 = vlaneseq
          %v3114 = vshrl.u32 %v3113, 7
          %v3115 = vsub.s32 6, %v3114
          %v3116 = vrot.slane %v385, %v3115
          %v3117 = vmul.f32 %v2726, %v3116
          %v3118 = vmul.f32 %v2727, %v3116
          %v3119 = vmul.f32 %v2728, %v3116
          %v3120 = vmul.f32 %v2730, %v3116
          %v3121 = vmul.f32 %v2731, %v3116
          %v3122 = vmul.f32 %v2732, %v3116
          %v3123 = vmul.f32 %v2734, %v3116
          %v3124 = vmul.f32 %v2735, %v3116
          %v3125 = vmul.f32 %v2736, %v3116
          %v3126 = vmul.f32 %v2738, %v3116
          %v3127 = vmul.f32 %v2739, %v3116
          %v3128 = vmul.f32 %v2740, %v3116
          %v3141 = vrot.slane %v3117, 6
          %v3142 = vrot.slane %v3118, 6
          %v3143 = vsel %vm825, %v3141, %v3142
          %v3144 = vrot.slane %v3119, 6
          %v3145 = vsel %vm825, %v3142, %v3144
          %v3146 = vrot.slane %v3120, 6
          %v3147 = vrot.slane %v3121, 6
          %v3148 = vsel %vm825, %v3146, %v3147
          %v3149 = vrot.slane %v3122, 6
          %v3150 = vsel %vm825, %v3147, %v3149
          %v3151 = vrot.slane %v3123, 6
          %v3152 = vrot.slane %v3124, 6
          %v3153 = vsel %vm825, %v3151, %v3152
          %v3154 = vrot.slane %v3125, 6
          %v3155 = vsel %vm825, %v3152, %v3154
          %v3156 = vrot.slane %v3126, 6
          %v3157 = vrot.slane %v3127, 6
          %v3158 = vsel %vm825, %v3156, %v3157
          %v3159 = vrot.slane %v3128, 6
          %v3160 = vsel %vm825, %v3157, %v3159
          %v3173 = vadd.f32 %v3101, %v3141
          %v3174 = vadd.f32 %v3102, %v3143
          %v3175 = vadd.f32 %v3103, %v3145
          %v3176 = vadd.f32 %v3104, %v3146
          %v3177 = vadd.f32 %v3105, %v3148
          %v3178 = vadd.f32 %v3106, %v3150
          %v3179 = vadd.f32 %v3107, %v3151
          %v3180 = vadd.f32 %v3108, %v3153
          %v3181 = vadd.f32 %v3109, %v3155
          %v3182 = vadd.f32 %v3110, %v3156
          %v3183 = vadd.f32 %v3111, %v3158
          %v3184 = vadd.f32 %v3112, %v3160
          %s3185 = sadd.s32 %s401, 6
          %s3186 = smul.u32 %s3185, 32
          %s3187 = scalar_lea.vmem %s377, %s3186
          %v3188 = vld [vmem:[%s3187] sm:$0xff]
          %v3189 = vld [vmem:[%s3187 + $0x8] sm:$0xff]
          %v3190 = vld [vmem:[%s3187 + $0x10] sm:$0xff]
          %v3191 = vld [vmem:[%s3187 + $0x18] sm:$0x7]
          %v3192 = vld [vmem:[%s3187 + $0x20] sm:$0xff]
          %v3193 = vld [vmem:[%s3187 + $0x28] sm:$0xff]
          %v3194 = vld [vmem:[%s3187 + $0x30] sm:$0xff]
          %v3195 = vld [vmem:[%s3187 + $0x38] sm:$0x7]
          %v3196 = vld [vmem:[%s3187 + $0x40] sm:$0xff]
          %v3197 = vld [vmem:[%s3187 + $0x48] sm:$0xff]
          %v3198 = vld [vmem:[%s3187 + $0x50] sm:$0xff]
          %v3199 = vld [vmem:[%s3187 + $0x58] sm:$0x7]
          %v3200 = vld [vmem:[%s3187 + $0x60] sm:$0xff]
          %v3201 = vld [vmem:[%s3187 + $0x68] sm:$0xff]
          %v3202 = vld [vmem:[%s3187 + $0x70] sm:$0xff]
          %v3203 = vld [vmem:[%s3187 + $0x78] sm:$0x7]
          %v3204 = vlaneseq
          %v3205 = vshrl.u32 %v3204, 7
          %v3206 = vsub.s32 0, %v3205
          %v3207 = vrot.slane %v386, %v3206
          %v3208 = vmul.f32 %v3188, %v3207
          %v3209 = vmul.f32 %v3189, %v3207
          %v3210 = vmul.f32 %v3190, %v3207
          %v3211 = vmul.f32 %v3192, %v3207
          %v3212 = vmul.f32 %v3193, %v3207
          %v3213 = vmul.f32 %v3194, %v3207
          %v3214 = vmul.f32 %v3196, %v3207
          %v3215 = vmul.f32 %v3197, %v3207
          %v3216 = vmul.f32 %v3198, %v3207
          %v3217 = vmul.f32 %v3200, %v3207
          %v3218 = vmul.f32 %v3201, %v3207
          %v3219 = vmul.f32 %v3202, %v3207
          %v3220 = vadd.f32 %v3173, %v3208
          %v3221 = vadd.f32 %v3174, %v3209
          %v3222 = vadd.f32 %v3175, %v3210
          %v3223 = vadd.f32 %v3176, %v3211
          %v3224 = vadd.f32 %v3177, %v3212
          %v3225 = vadd.f32 %v3178, %v3213
          %v3226 = vadd.f32 %v3179, %v3214
          %v3227 = vadd.f32 %v3180, %v3215
          %v3228 = vadd.f32 %v3181, %v3216
          %v3229 = vadd.f32 %v3182, %v3217
          %v3230 = vadd.f32 %v3183, %v3218
          %v3231 = vadd.f32 %v3184, %v3219
          %v3232 = vlaneseq
          %v3233 = vshrl.u32 %v3232, 7
          %v3234 = vsub.s32 1, %v3233
          %v3235 = vrot.slane %v386, %v3234
          %v3236 = vmul.f32 %v3188, %v3235
          %v3237 = vmul.f32 %v3189, %v3235
          %v3238 = vmul.f32 %v3190, %v3235
          %v3239 = vmul.f32 %v3192, %v3235
          %v3240 = vmul.f32 %v3193, %v3235
          %v3241 = vmul.f32 %v3194, %v3235
          %v3242 = vmul.f32 %v3196, %v3235
          %v3243 = vmul.f32 %v3197, %v3235
          %v3244 = vmul.f32 %v3198, %v3235
          %v3245 = vmul.f32 %v3200, %v3235
          %v3246 = vmul.f32 %v3201, %v3235
          %v3247 = vmul.f32 %v3202, %v3235
          %v3260 = vrot.slane %v3236, 1
          %v3261 = vrot.slane %v3237, 1
          %v3262 = vsel %vm476, %v3260, %v3261
          %v3263 = vrot.slane %v3238, 1
          %v3264 = vsel %vm476, %v3261, %v3263
          %v3265 = vrot.slane %v3239, 1
          %v3266 = vrot.slane %v3240, 1
          %v3267 = vsel %vm476, %v3265, %v3266
          %v3268 = vrot.slane %v3241, 1
          %v3269 = vsel %vm476, %v3266, %v3268
          %v3270 = vrot.slane %v3242, 1
          %v3271 = vrot.slane %v3243, 1
          %v3272 = vsel %vm476, %v3270, %v3271
          %v3273 = vrot.slane %v3244, 1
          %v3274 = vsel %vm476, %v3271, %v3273
          %v3275 = vrot.slane %v3245, 1
          %v3276 = vrot.slane %v3246, 1
          %v3277 = vsel %vm476, %v3275, %v3276
          %v3278 = vrot.slane %v3247, 1
          %v3279 = vsel %vm476, %v3276, %v3278
          %v3292 = vadd.f32 %v3220, %v3262
          %v3293 = vadd.f32 %v3221, %v3264
          %v3294 = vadd.f32 %v3222, %v3263
          %v3295 = vadd.f32 %v3223, %v3267
          %v3296 = vadd.f32 %v3224, %v3269
          %v3297 = vadd.f32 %v3225, %v3268
          %v3298 = vadd.f32 %v3226, %v3272
          %v3299 = vadd.f32 %v3227, %v3274
          %v3300 = vadd.f32 %v3228, %v3273
          %v3301 = vadd.f32 %v3229, %v3277
          %v3302 = vadd.f32 %v3230, %v3279
          %v3303 = vadd.f32 %v3231, %v3278
          %v3304 = vlaneseq
          %v3305 = vshrl.u32 %v3304, 7
          %v3306 = vsub.s32 2, %v3305
          %v3307 = vrot.slane %v386, %v3306
          %v3308 = vmul.f32 %v3188, %v3307
          %v3309 = vmul.f32 %v3189, %v3307
          %v3310 = vmul.f32 %v3190, %v3307
          %v3311 = vmul.f32 %v3192, %v3307
          %v3312 = vmul.f32 %v3193, %v3307
          %v3313 = vmul.f32 %v3194, %v3307
          %v3314 = vmul.f32 %v3196, %v3307
          %v3315 = vmul.f32 %v3197, %v3307
          %v3316 = vmul.f32 %v3198, %v3307
          %v3317 = vmul.f32 %v3200, %v3307
          %v3318 = vmul.f32 %v3201, %v3307
          %v3319 = vmul.f32 %v3202, %v3307
          %v3332 = vrot.slane %v3308, 2
          %v3333 = vrot.slane %v3309, 2
          %v3334 = vsel %vm549, %v3332, %v3333
          %v3335 = vrot.slane %v3310, 2
          %v3336 = vsel %vm549, %v3333, %v3335
          %v3337 = vrot.slane %v3311, 2
          %v3338 = vrot.slane %v3312, 2
          %v3339 = vsel %vm549, %v3337, %v3338
          %v3340 = vrot.slane %v3313, 2
          %v3341 = vsel %vm549, %v3338, %v3340
          %v3342 = vrot.slane %v3314, 2
          %v3343 = vrot.slane %v3315, 2
          %v3344 = vsel %vm549, %v3342, %v3343
          %v3345 = vrot.slane %v3316, 2
          %v3346 = vsel %vm549, %v3343, %v3345
          %v3347 = vrot.slane %v3317, 2
          %v3348 = vrot.slane %v3318, 2
          %v3349 = vsel %vm549, %v3347, %v3348
          %v3350 = vrot.slane %v3319, 2
          %v3351 = vsel %vm549, %v3348, %v3350
          %v3364 = vadd.f32 %v3292, %v3334
          %v3365 = vadd.f32 %v3293, %v3336
          %v3366 = vadd.f32 %v3294, %v3335
          %v3367 = vadd.f32 %v3295, %v3339
          %v3368 = vadd.f32 %v3296, %v3341
          %v3369 = vadd.f32 %v3297, %v3340
          %v3370 = vadd.f32 %v3298, %v3344
          %v3371 = vadd.f32 %v3299, %v3346
          %v3372 = vadd.f32 %v3300, %v3345
          %v3373 = vadd.f32 %v3301, %v3349
          %v3374 = vadd.f32 %v3302, %v3351
          %v3375 = vadd.f32 %v3303, %v3350
          %v3376 = vlaneseq
          %v3377 = vshrl.u32 %v3376, 7
          %v3378 = vsub.s32 3, %v3377
          %v3379 = vrot.slane %v386, %v3378
          %v3380 = vmul.f32 %v3189, %v3379
          %v3381 = vmul.f32 %v3190, %v3379
          %v3382 = vmul.f32 %v3193, %v3379
          %v3383 = vmul.f32 %v3194, %v3379
          %v3384 = vmul.f32 %v3197, %v3379
          %v3385 = vmul.f32 %v3198, %v3379
          %v3386 = vmul.f32 %v3201, %v3379
          %v3387 = vmul.f32 %v3202, %v3379
          %v3396 = vrot.slane %v3380, 3
          %v3397 = vrot.slane %v3381, 3
          %v3398 = vsel %vm614, %v3396, %v3397
          %v3399 = vrot.slane %v3382, 3
          %v3400 = vrot.slane %v3383, 3
          %v3401 = vsel %vm614, %v3399, %v3400
          %v3402 = vrot.slane %v3384, 3
          %v3403 = vrot.slane %v3385, 3
          %v3404 = vsel %vm614, %v3402, %v3403
          %v3405 = vrot.slane %v3386, 3
          %v3406 = vrot.slane %v3387, 3
          %v3407 = vsel %vm614, %v3405, %v3406
          %v3420 = vadd.f32 %v3364, %v3396
          %v3421 = vadd.f32 %v3365, %v3398
          %v3422 = vadd.f32 %v3366, %v3397
          %v3423 = vadd.f32 %v3367, %v3399
          %v3424 = vadd.f32 %v3368, %v3401
          %v3425 = vadd.f32 %v3369, %v3400
          %v3426 = vadd.f32 %v3370, %v3402
          %v3427 = vadd.f32 %v3371, %v3404
          %v3428 = vadd.f32 %v3372, %v3403
          %v3429 = vadd.f32 %v3373, %v3405
          %v3430 = vadd.f32 %v3374, %v3407
          %v3431 = vadd.f32 %v3375, %v3406
          %v3432 = vlaneseq
          %v3433 = vshrl.u32 %v3432, 7
          %v3434 = vsub.s32 4, %v3433
          %v3435 = vrot.slane %v386, %v3434
          %v3436 = vmul.f32 %v3189, %v3435
          %v3437 = vmul.f32 %v3190, %v3435
          %v3438 = vmul.f32 %v3191, %v3435
          %v3439 = vmul.f32 %v3193, %v3435
          %v3440 = vmul.f32 %v3194, %v3435
          %v3441 = vmul.f32 %v3195, %v3435
          %v3442 = vmul.f32 %v3197, %v3435
          %v3443 = vmul.f32 %v3198, %v3435
          %v3444 = vmul.f32 %v3199, %v3435
          %v3445 = vmul.f32 %v3201, %v3435
          %v3446 = vmul.f32 %v3202, %v3435
          %v3447 = vmul.f32 %v3203, %v3435
          %v3460 = vrot.slane %v3436, 4
          %v3461 = vrot.slane %v3437, 4
          %v3462 = vsel %vm679, %v3460, %v3461
          %v3463 = vrot.slane %v3438, 4
          %v3464 = vsel %vm679, %v3461, %v3463
          %v3465 = vrot.slane %v3439, 4
          %v3466 = vrot.slane %v3440, 4
          %v3467 = vsel %vm679, %v3465, %v3466
          %v3468 = vrot.slane %v3441, 4
          %v3469 = vsel %vm679, %v3466, %v3468
          %v3470 = vrot.slane %v3442, 4
          %v3471 = vrot.slane %v3443, 4
          %v3472 = vsel %vm679, %v3470, %v3471
          %v3473 = vrot.slane %v3444, 4
          %v3474 = vsel %vm679, %v3471, %v3473
          %v3475 = vrot.slane %v3445, 4
          %v3476 = vrot.slane %v3446, 4
          %v3477 = vsel %vm679, %v3475, %v3476
          %v3478 = vrot.slane %v3447, 4
          %v3479 = vsel %vm679, %v3476, %v3478
          %v3492 = vadd.f32 %v3420, %v3460
          %v3493 = vadd.f32 %v3421, %v3462
          %v3494 = vadd.f32 %v3422, %v3464
          %v3495 = vadd.f32 %v3423, %v3465
          %v3496 = vadd.f32 %v3424, %v3467
          %v3497 = vadd.f32 %v3425, %v3469
          %v3498 = vadd.f32 %v3426, %v3470
          %v3499 = vadd.f32 %v3427, %v3472
          %v3500 = vadd.f32 %v3428, %v3474
          %v3501 = vadd.f32 %v3429, %v3475
          %v3502 = vadd.f32 %v3430, %v3477
          %v3503 = vadd.f32 %v3431, %v3479
          %v3504 = vlaneseq
          %v3505 = vshrl.u32 %v3504, 7
          %v3506 = vsub.s32 5, %v3505
          %v3507 = vrot.slane %v386, %v3506
          %v3508 = vmul.f32 %v3189, %v3507
          %v3509 = vmul.f32 %v3190, %v3507
          %v3510 = vmul.f32 %v3191, %v3507
          %v3511 = vmul.f32 %v3193, %v3507
          %v3512 = vmul.f32 %v3194, %v3507
          %v3513 = vmul.f32 %v3195, %v3507
          %v3514 = vmul.f32 %v3197, %v3507
          %v3515 = vmul.f32 %v3198, %v3507
          %v3516 = vmul.f32 %v3199, %v3507
          %v3517 = vmul.f32 %v3201, %v3507
          %v3518 = vmul.f32 %v3202, %v3507
          %v3519 = vmul.f32 %v3203, %v3507
          %v3532 = vrot.slane %v3508, 5
          %v3533 = vrot.slane %v3509, 5
          %v3534 = vsel %vm752, %v3532, %v3533
          %v3535 = vrot.slane %v3510, 5
          %v3536 = vsel %vm752, %v3533, %v3535
          %v3537 = vrot.slane %v3511, 5
          %v3538 = vrot.slane %v3512, 5
          %v3539 = vsel %vm752, %v3537, %v3538
          %v3540 = vrot.slane %v3513, 5
          %v3541 = vsel %vm752, %v3538, %v3540
          %v3542 = vrot.slane %v3514, 5
          %v3543 = vrot.slane %v3515, 5
          %v3544 = vsel %vm752, %v3542, %v3543
          %v3545 = vrot.slane %v3516, 5
          %v3546 = vsel %vm752, %v3543, %v3545
          %v3547 = vrot.slane %v3517, 5
          %v3548 = vrot.slane %v3518, 5
          %v3549 = vsel %vm752, %v3547, %v3548
          %v3550 = vrot.slane %v3519, 5
          %v3551 = vsel %vm752, %v3548, %v3550
          %v3564 = vadd.f32 %v3492, %v3532
          %v3565 = vadd.f32 %v3493, %v3534
          %v3566 = vadd.f32 %v3494, %v3536
          %v3567 = vadd.f32 %v3495, %v3537
          %v3568 = vadd.f32 %v3496, %v3539
          %v3569 = vadd.f32 %v3497, %v3541
          %v3570 = vadd.f32 %v3498, %v3542
          %v3571 = vadd.f32 %v3499, %v3544
          %v3572 = vadd.f32 %v3500, %v3546
          %v3573 = vadd.f32 %v3501, %v3547
          %v3574 = vadd.f32 %v3502, %v3549
          %v3575 = vadd.f32 %v3503, %v3551
          %v3576 = vlaneseq
          %v3577 = vshrl.u32 %v3576, 7
          %v3578 = vsub.s32 6, %v3577
          %v3579 = vrot.slane %v386, %v3578
          %v3580 = vmul.f32 %v3189, %v3579
          %v3581 = vmul.f32 %v3190, %v3579
          %v3582 = vmul.f32 %v3191, %v3579
          %v3583 = vmul.f32 %v3193, %v3579
          %v3584 = vmul.f32 %v3194, %v3579
          %v3585 = vmul.f32 %v3195, %v3579
          %v3586 = vmul.f32 %v3197, %v3579
          %v3587 = vmul.f32 %v3198, %v3579
          %v3588 = vmul.f32 %v3199, %v3579
          %v3589 = vmul.f32 %v3201, %v3579
          %v3590 = vmul.f32 %v3202, %v3579
          %v3591 = vmul.f32 %v3203, %v3579
          %v3604 = vrot.slane %v3580, 6
          %v3605 = vrot.slane %v3581, 6
          %v3606 = vsel %vm825, %v3604, %v3605
          %v3607 = vrot.slane %v3582, 6
          %v3608 = vsel %vm825, %v3605, %v3607
          %v3609 = vrot.slane %v3583, 6
          %v3610 = vrot.slane %v3584, 6
          %v3611 = vsel %vm825, %v3609, %v3610
          %v3612 = vrot.slane %v3585, 6
          %v3613 = vsel %vm825, %v3610, %v3612
          %v3614 = vrot.slane %v3586, 6
          %v3615 = vrot.slane %v3587, 6
          %v3616 = vsel %vm825, %v3614, %v3615
          %v3617 = vrot.slane %v3588, 6
          %v3618 = vsel %vm825, %v3615, %v3617
          %v3619 = vrot.slane %v3589, 6
          %v3620 = vrot.slane %v3590, 6
          %v3621 = vsel %vm825, %v3619, %v3620
          %v3622 = vrot.slane %v3591, 6
          %v3623 = vsel %vm825, %v3620, %v3622
          %v3636 = vadd.f32 %v3564, %v3604
          %v3637 = vadd.f32 %v3565, %v3606
          %v3638 = vadd.f32 %v3566, %v3608
          %v3639 = vadd.f32 %v3567, %v3609
          %v3640 = vadd.f32 %v3568, %v3611
          %v3641 = vadd.f32 %v3569, %v3613
          %v3642 = vadd.f32 %v3570, %v3614
          %v3643 = vadd.f32 %v3571, %v3616
          %v3644 = vadd.f32 %v3572, %v3618
          %v3645 = vadd.f32 %v3573, %v3619
          %v3646 = vadd.f32 %v3574, %v3621
          %v3647 = vadd.f32 %v3575, %v3623
          %v3649 = vlaneseq
          %v3650 = vshrl.u32 %v3649, 7
          %v3651 = vsub.s32 0, %v3650
          %v3652 = vrot.slane %v387, %v3651
          %v3654 = vadd.f32 %v3636, %v3652
          %v3655 = vadd.f32 %v3637, %v3652
          %v3656 = vadd.f32 %v3638, %v3652
          %v3657 = vadd.f32 %v3639, %v3652
          %v3658 = vadd.f32 %v3640, %v3652
          %v3659 = vadd.f32 %v3641, %v3652
          %v3660 = vadd.f32 %v3642, %v3652
          %v3661 = vadd.f32 %v3643, %v3652
          %v3662 = vadd.f32 %v3644, %v3652
          %v3663 = vadd.f32 %v3645, %v3652
          %v3664 = vadd.f32 %v3646, %v3652
          %v3665 = vadd.f32 %v3647, %v3652
          %vm3666 = vcmask 1047557
          %v3667 = vsel %vm3666, %v3654, 0.0
          %3668 = vadd.xlane.f32.xlu0 %v3667
          %v3669 = vpop.xlane.xlu0 %3668
          %3670 = vadd.xlane.f32.xlu0 %v3655
          %v3671 = vpop.xlane.xlu0 %3670
          %v3672 = vsel %vm614, %v3656, 0.0
          %3673 = vadd.xlane.f32.xlu0 %v3672
          %v3674 = vpop.xlane.xlu0 %3673
          %v3675 = vsel %vm3666, %v3657, 0.0
          %3676 = vadd.xlane.f32.xlu0 %v3675
          %v3677 = vpop.xlane.xlu0 %3676
          %3678 = vadd.xlane.f32.xlu0 %v3658
          %v3679 = vpop.xlane.xlu0 %3678
          %v3680 = vsel %vm614, %v3659, 0.0
          %3681 = vadd.xlane.f32.xlu0 %v3680
          %v3682 = vpop.xlane.xlu0 %3681
          %v3683 = vsel %vm3666, %v3660, 0.0
          %3684 = vadd.xlane.f32.xlu0 %v3683
          %v3685 = vpop.xlane.xlu0 %3684
          %3686 = vadd.xlane.f32.xlu0 %v3661
          %v3687 = vpop.xlane.xlu0 %3686
          %v3688 = vsel %vm614, %v3662, 0.0
          %3689 = vadd.xlane.f32.xlu0 %v3688
          %v3690 = vpop.xlane.xlu0 %3689
          %v3691 = vsel %vm3666, %v3663, 0.0
          %3692 = vadd.xlane.f32.xlu0 %v3691
          %v3693 = vpop.xlane.xlu0 %3692
          %3694 = vadd.xlane.f32.xlu0 %v3664
          %v3695 = vpop.xlane.xlu0 %3694
          %v3696 = vsel %vm614, %v3665, 0.0
          %3697 = vadd.xlane.f32.xlu0 %v3696
          %v3698 = vpop.xlane.xlu0 %3697
          %v3699 = vmul.f32 %v3669, 0.25
          %v3700 = vmul.f32 %v3671, 0.25
          %v3701 = vmul.f32 %v3674, 0.25
          %v3702 = vmul.f32 %v3677, 0.25
          %v3703 = vmul.f32 %v3679, 0.25
          %v3704 = vmul.f32 %v3682, 0.25
          %v3705 = vmul.f32 %v3685, 0.25
          %v3706 = vmul.f32 %v3687, 0.25
          %v3707 = vmul.f32 %v3690, 0.25
          %v3708 = vmul.f32 %v3693, 0.25
          %v3709 = vmul.f32 %v3695, 0.25
          %v3710 = vmul.f32 %v3698, 0.25
          %v3711 = vsub.f32 %v3654, %v3699
          %v3712 = vsub.f32 %v3655, %v3700
          %v3713 = vsub.f32 %v3656, %v3701
          %v3714 = vsub.f32 %v3657, %v3702
          %v3715 = vsub.f32 %v3658, %v3703
          %v3716 = vsub.f32 %v3659, %v3704
          %v3717 = vsub.f32 %v3660, %v3705
          %v3718 = vsub.f32 %v3661, %v3706
          %v3719 = vsub.f32 %v3662, %v3707
          %v3720 = vsub.f32 %v3663, %v3708
          %v3721 = vsub.f32 %v3664, %v3709
          %v3722 = vsub.f32 %v3665, %v3710
          %v3723 = vmul.f32 %v3711, %v394
          %v3724 = vmul.f32 %v3712, %v394
          %v3725 = vmul.f32 %v3713, %v394
          %v3726 = vmul.f32 %v3714, %v394
          %v3727 = vmul.f32 %v3715, %v394
          %v3728 = vmul.f32 %v3716, %v394
          %v3729 = vmul.f32 %v3717, %v394
          %v3730 = vmul.f32 %v3718, %v394
          %v3731 = vmul.f32 %v3719, %v394
          %v3732 = vmul.f32 %v3720, %v394
          %v3733 = vmul.f32 %v3721, %v394
          %v3734 = vmul.f32 %v3722, %v394
          %v3735 = vmul.f32 %v3723, %v3723
          %v3736 = vmul.f32 %v3724, %v3724
          %v3737 = vmul.f32 %v3725, %v3725
          %v3738 = vmul.f32 %v3726, %v3726
          %v3739 = vmul.f32 %v3727, %v3727
          %v3740 = vmul.f32 %v3728, %v3728
          %v3741 = vmul.f32 %v3729, %v3729
          %v3742 = vmul.f32 %v3730, %v3730
          %v3743 = vmul.f32 %v3731, %v3731
          %v3744 = vmul.f32 %v3732, %v3732
          %v3745 = vmul.f32 %v3733, %v3733
          %v3746 = vmul.f32 %v3734, %v3734
          %v3747 = vsel %vm3666, %v3735, 0.0
          %3748 = vadd.xlane.f32.xlu0 %v3747
          %v3749 = vpop.xlane.xlu0 %3748
          %3750 = vadd.xlane.f32.xlu0 %v3736
          %v3751 = vpop.xlane.xlu0 %3750
          %v3752 = vsel %vm614, %v3737, 0.0
          %3753 = vadd.xlane.f32.xlu0 %v3752
          %v3754 = vpop.xlane.xlu0 %3753
          %v3755 = vsel %vm3666, %v3738, 0.0
          %3756 = vadd.xlane.f32.xlu0 %v3755
          %v3757 = vpop.xlane.xlu0 %3756
          %3758 = vadd.xlane.f32.xlu0 %v3739
          %v3759 = vpop.xlane.xlu0 %3758
          %v3760 = vsel %vm614, %v3740, 0.0
          %3761 = vadd.xlane.f32.xlu0 %v3760
          %v3762 = vpop.xlane.xlu0 %3761
          %v3763 = vsel %vm3666, %v3741, 0.0
          %3764 = vadd.xlane.f32.xlu0 %v3763
          %v3765 = vpop.xlane.xlu0 %3764
          %3766 = vadd.xlane.f32.xlu0 %v3742
          %v3767 = vpop.xlane.xlu0 %3766
          %v3768 = vsel %vm614, %v3743, 0.0
          %3769 = vadd.xlane.f32.xlu0 %v3768
          %v3770 = vpop.xlane.xlu0 %3769
          %v3771 = vsel %vm3666, %v3744, 0.0
          %3772 = vadd.xlane.f32.xlu0 %v3771
          %v3773 = vpop.xlane.xlu0 %3772
          %3774 = vadd.xlane.f32.xlu0 %v3745
          %v3775 = vpop.xlane.xlu0 %3774
          %v3776 = vsel %vm614, %v3746, 0.0
          %3777 = vadd.xlane.f32.xlu0 %v3776
          %v3778 = vpop.xlane.xlu0 %3777
          %v3779 = vmul.f32 %v3749, 0.25
          %v3780 = vmul.f32 %v3751, 0.25
          %v3781 = vmul.f32 %v3754, 0.25
          %v3782 = vmul.f32 %v3757, 0.25
          %v3783 = vmul.f32 %v3759, 0.25
          %v3784 = vmul.f32 %v3762, 0.25
          %v3785 = vmul.f32 %v3765, 0.25
          %v3786 = vmul.f32 %v3767, 0.25
          %v3787 = vmul.f32 %v3770, 0.25
          %v3788 = vmul.f32 %v3773, 0.25
          %v3789 = vmul.f32 %v3775, 0.25
          %v3790 = vmul.f32 %v3778, 0.25
          %v3791 = vadd.f32 %v3779, 1e-06
          %v3792 = vadd.f32 %v3780, 1e-06
          %v3793 = vadd.f32 %v3781, 1e-06
          %v3794 = vadd.f32 %v3782, 1e-06
          %v3795 = vadd.f32 %v3783, 1e-06
          %v3796 = vadd.f32 %v3784, 1e-06
          %v3797 = vadd.f32 %v3785, 1e-06
          %v3798 = vadd.f32 %v3786, 1e-06
          %v3799 = vadd.f32 %v3787, 1e-06
          %v3800 = vadd.f32 %v3788, 1e-06
          %v3801 = vadd.f32 %v3789, 1e-06
          %v3802 = vadd.f32 %v3790, 1e-06
          %v3803 = vrsqrt.pop %v3791
          %v3804 = vrsqrt.pop %v3792
          %v3805 = vrsqrt.pop %v3793
          %v3806 = vrsqrt.pop %v3794
          %v3807 = vrsqrt.pop %v3795
          %v3808 = vrsqrt.pop %v3796
          %v3809 = vrsqrt.pop %v3797
          %v3810 = vrsqrt.pop %v3798
          %v3811 = vrsqrt.pop %v3799
          %v3812 = vrsqrt.pop %v3800
          %v3813 = vrsqrt.pop %v3801
          %v3814 = vrsqrt.pop %v3802
          %v3815 = vmul.f32 %v3723, %v3803
          %v3816 = vmul.f32 %v3724, %v3804
          %v3817 = vmul.f32 %v3725, %v3805
          %v3818 = vmul.f32 %v3726, %v3806
          %v3819 = vmul.f32 %v3727, %v3807
          %v3820 = vmul.f32 %v3728, %v3808
          %v3821 = vmul.f32 %v3729, %v3809
          %v3822 = vmul.f32 %v3730, %v3810
          %v3823 = vmul.f32 %v3731, %v3811
          %v3824 = vmul.f32 %v3732, %v3812
          %v3825 = vmul.f32 %v3733, %v3813
          %v3826 = vmul.f32 %v3734, %v3814
          %v3828 = vlaneseq
          %v3829 = vshrl.u32 %v3828, 7
          %v3830 = vsub.s32 0, %v3829
          %v3831 = vrot.slane %v388, %v3830
          %v3833 = vmul.f32 %v3815, %v3831
          %v3834 = vmul.f32 %v3816, %v3831
          %v3835 = vmul.f32 %v3817, %v3831
          %v3836 = vmul.f32 %v3818, %v3831
          %v3837 = vmul.f32 %v3819, %v3831
          %v3838 = vmul.f32 %v3820, %v3831
          %v3839 = vmul.f32 %v3821, %v3831
          %v3840 = vmul.f32 %v3822, %v3831
          %v3841 = vmul.f32 %v3823, %v3831
          %v3842 = vmul.f32 %v3824, %v3831
          %v3843 = vmul.f32 %v3825, %v3831
          %v3844 = vmul.f32 %v3826, %v3831
          %v3846 = vlaneseq
          %v3847 = vshrl.u32 %v3846, 7
          %v3848 = vsub.s32 0, %v3847
          %v3849 = vrot.slane %v389, %v3848
          %v3851 = vadd.f32 %v3833, %v3849
          %v3852 = vadd.f32 %v3834, %v3849
          %v3853 = vadd.f32 %v3835, %v3849
          %v3854 = vadd.f32 %v3836, %v3849
          %v3855 = vadd.f32 %v3837, %v3849
          %v3856 = vadd.f32 %v3838, %v3849
          %v3857 = vadd.f32 %v3839, %v3849
          %v3858 = vadd.f32 %v3840, %v3849
          %v3859 = vadd.f32 %v3841, %v3849
          %v3860 = vadd.f32 %v3842, %v3849
          %v3861 = vadd.f32 %v3843, %v3849
          %v3862 = vadd.f32 %v3844, %v3849
          %s3863 = smul.u32 %s401, 16
          %s3864 = scalar_lea.vmem [#allocation2], %s3863
          %3865 = vst [vmem:[%s3864 - $0x5] sm:$0xe0] %v3851
          %3866 = vst [vmem:[%s3864 + $0x3] sm:$0xff] %v3852
          %3867 = vst [vmem:[%s3864 + $0xb] sm:$0x1f] %v3853
          %3868 = vst [vmem:[%s3864 + $0xb] sm:$0xe0] %v3854
          %3869 = vst [vmem:[%s3864 + $0x13] sm:$0xff] %v3855
          %3870 = vst [vmem:[%s3864 + $0x1b] sm:$0x1f] %v3856
          %3871 = vst [vmem:[%s3864 + $0x1b] sm:$0xe0] %v3857
          %3872 = vst [vmem:[%s3864 + $0x23] sm:$0xff] %v3858
          %3873 = vst [vmem:[%s3864 + $0x2b] sm:$0x1f] %v3859
          %3874 = vst [vmem:[%s3864 + $0x2b] sm:$0xe0] %v3860
          %3875 = vst [vmem:[%s3864 + $0x33] sm:$0xff] %v3861
          %3876 = vst [vmem:[%s3864 + $0x3b] sm:$0x1f] %v3862
        $region65: #{tpu_custom_call.1} parent=59 // loop_footer
          %s400 = sadd.s32 1, %s396
        $region66: #{tpu_custom_call.1} parent=59 // loop_footer_branch
          %395 = sbr.rel target = $region62
        $region67: #{tpu_custom_call.1} parent=59 // loop_exit
          _
        %v3877 = vld [vmem:[#allocation2] sm:$0xff]
        %v3878 = vld [vmem:[#allocation2 + $0x8] sm:$0xff]
        %v3879 = vld [vmem:[#allocation2 + $0x10] sm:$0xff]
        %v3880 = vld [vmem:[#allocation2 + $0x18] sm:$0xff]
        %v3881 = vld [vmem:[#allocation2 + $0x20] sm:$0xff]
        %v3882 = vld [vmem:[#allocation2 + $0x28] sm:$0xff]
        %v3883 = vld [vmem:[#allocation2 + $0x30] sm:$0xff]
        %v3884 = vld [vmem:[#allocation2 + $0x38] sm:$0xff]
        %v3885 = vld [vmem:[#allocation2 + $0x40] sm:$0xff]
        %v3886 = vld [vmem:[#allocation2 + $0x48] sm:$0xff]
        %v3887 = vld [vmem:[#allocation2 + $0x50] sm:$0xff]
        %v3888 = vld [vmem:[#allocation2 + $0x58] sm:$0xff]
        %v3889 = vld [vmem:[#allocation2 + $0x60] sm:$0xff]
        %v3890 = vld [vmem:[#allocation2 + $0x68] sm:$0xff]
        %v3891 = vld [vmem:[#allocation2 + $0x70] sm:$0xff]
        %v3892 = vld [vmem:[#allocation2 + $0x78] sm:$0xff]
        %v3893 = vld [vmem:[#allocation2 + $0x80] sm:$0xff]
        %v3894 = vld [vmem:[#allocation2 + $0x88] sm:$0xff]
        %v3895 = vld [vmem:[#allocation2 + $0x90] sm:$0xff]
        %v3896 = vld [vmem:[#allocation2 + $0x98] sm:$0xff]
        %v3897 = vld [vmem:[#allocation2 + $0xa0] sm:$0xff]
        %v3898 = vld [vmem:[#allocation2 + $0xa8] sm:$0xff]
        %v3899 = vld [vmem:[#allocation2 + $0xb0] sm:$0xff]
        %v3900 = vld [vmem:[#allocation2 + $0xb8] sm:$0xff]
        %v3901 = vld [vmem:[#allocation2 + $0xc0] sm:$0xff]
        %v3902 = vld [vmem:[#allocation2 + $0xc8] sm:$0xff]
        %v3903 = vld [vmem:[#allocation2 + $0xd0] sm:$0xff]
        %v3904 = vld [vmem:[#allocation2 + $0xd8] sm:$0xff]
        %v3905 = vld [vmem:[#allocation2 + $0xe0] sm:$0xff]
        %v3906 = vld [vmem:[#allocation2 + $0xe8] sm:$0xff]
        %v3907 = vld [vmem:[#allocation2 + $0xf0] sm:$0xff]
        %v3908 = vld [vmem:[#allocation2 + $0xf8] sm:$0xff]
        %v3909 = vld [vmem:[%s5] sm:$0xff]
        %v3910 = vld [vmem:[%s5 + $0x8] sm:$0xff]
        %v3911 = vld [vmem:[%s5 + $0x10] sm:$0xff]
        %v3912 = vld [vmem:[%s5 + $0x18] sm:$0xff]
        %v3913 = vld [vmem:[%s5 + $0x20] sm:$0xff]
        %v3914 = vld [vmem:[%s5 + $0x28] sm:$0xff]
        %v3915 = vld [vmem:[%s5 + $0x30] sm:$0xff]
        %v3916 = vld [vmem:[%s5 + $0x38] sm:$0xff]
        %v3917 = vld [vmem:[%s5 + $0x40] sm:$0xff]
        %v3918 = vld [vmem:[%s5 + $0x48] sm:$0xff]
        %v3919 = vld [vmem:[%s5 + $0x50] sm:$0xff]
        %v3920 = vld [vmem:[%s5 + $0x58] sm:$0xff]
        %v3921 = vld [vmem:[%s5 + $0x60] sm:$0xff]
        %v3922 = vld [vmem:[%s5 + $0x68] sm:$0xff]
        %v3923 = vld [vmem:[%s5 + $0x70] sm:$0xff]
        %v3924 = vld [vmem:[%s5 + $0x78] sm:$0xff]
        %v3925 = vld [vmem:[%s6] sm:$0x1]
        %v3927 = vlaneseq
        %v3928 = vshrl.u32 %v3927, 7
        %v3929 = vsub.s32 0, %v3928
        %v3930 = vrot.slane %v3925, %v3929
        %3932 = vmatprep.subr.mxu0 0.0
        %3933 = vmatpush1.msra.mxu0 %v3924
        %3934 = vmatprep.subr.mxu0 0.0
        %3935 = vmatpush1.msra.mxu0 %v3923
        %3936 = vmatprep.subr.mxu0 0.0
        %3937 = vmatpush1.msra.mxu0 %v3922
        %3938 = vmatprep.subr.mxu0 0.0
        %3939 = vmatpush1.msra.mxu0 %v3921
        %3940 = vmatprep.subr.mxu0 0.0
        %3941 = vmatpush1.msra.mxu0 %v3920
        %3942 = vmatprep.subr.mxu0 0.0
        %3943 = vmatpush1.msra.mxu0 %v3919
        %3944 = vmatprep.subr.mxu0 0.0
        %3945 = vmatpush1.msra.mxu0 %v3918
        %3946 = vmatprep.subr.mxu0 0.0
        %3947 = vmatpush1.msra.mxu0 %v3917
        %3948 = vmatprep.subr.mxu0 0.0
        %3949 = vmatpush1.msra.mxu0 %v3916
        %3950 = vmatprep.subr.mxu0 0.0
        %3951 = vmatpush1.msra.mxu0 %v3915
        %3952 = vmatprep.subr.mxu0 0.0
        %3953 = vmatpush1.msra.mxu0 %v3914
        %3954 = vmatprep.subr.mxu0 0.0
        %3955 = vmatpush1.msra.mxu0 %v3913
        %3956 = vmatprep.subr.mxu0 0.0
        %3957 = vmatpush1.msra.mxu0 %v3912
        %3958 = vmatprep.subr.mxu0 0.0
        %3959 = vmatpush1.msra.mxu0 %v3911
        %3960 = vmatprep.subr.mxu0 0.0
        %3961 = vmatpush1.msra.mxu0 %v3910
        %3962 = vmatprep.subr.mxu0 0.0
        %3963 = vmatpush1.msra.mxu0 %v3909
        %3964 = vmatprep.subr.mxu0 0.0
        %3965 = vmatpush2.msra.mxu0 0.0
        %3966 = vmatprep.subr.mxu0 0.0
        %3967 = vmatpush2.msra.mxu0 0.0
        %3968 = vmatprep.subr.mxu0 0.0
        %3969 = vmatpush2.msra.mxu0 0.0
        %3970 = vmatprep.subr.mxu0 0.0
        %3971 = vmatpush2.msra.mxu0 0.0
        %3972 = vmatprep.subr.mxu0 0.0
        %3973 = vmatpush2.msra.mxu0 0.0
        %3974 = vmatprep.subr.mxu0 0.0
        %3975 = vmatpush2.msra.mxu0 0.0
        %3976 = vmatprep.subr.mxu0 0.0
        %3977 = vmatpush2.msra.mxu0 0.0
        %3978 = vmatprep.subr.mxu0 0.0
        %3979 = vmatpush2.msra.mxu0 0.0
        %3980 = vmatprep.subr.mxu0 0.0
        %3981 = vmatpush2.msra.mxu0 0.0
        %3982 = vmatprep.subr.mxu0 0.0
        %3983 = vmatpush2.msra.mxu0 0.0
        %3984 = vmatprep.subr.mxu0 0.0
        %3985 = vmatpush2.msra.mxu0 0.0
        %3986 = vmatprep.subr.mxu0 0.0
        %3987 = vmatpush2.msra.mxu0 0.0
        %3988 = vmatprep.subr.mxu0 0.0
        %3989 = vmatpush2.msra.mxu0 0.0
        %3990 = vmatprep.subr.mxu0 0.0
        %3991 = vmatpush2.msra.mxu0 0.0
        %3992 = vmatprep.subr.mxu0 0.0
        %3993 = vmatpush2.msra.mxu0 0.0
        %3994 = vmatprep.subr.mxu0 0.0
        %3995 = vmatpush2.msra.mxu0 0.0
        %3996 = vmatprep.mubr.f32.mxu0 0.0
        %3997 = vmatmul.mubr.f32.gmra.mxu0 %v3877
        %v3998 = vpop.f32.mrf.mxu0
        %v3999 = vadd.f32 %v3930, %v3998
        %v4000 = vpop.f32.mrf.mxu0
        %4001 = vmatprep.mubr.f32.mxu0 0.0
        %4002 = vmatmul.mubr.f32.gmra.mxu0 %v3878
        %v4003 = vpop.f32.mrf.mxu0
        %v4004 = vadd.f32 %v3930, %v4003
        %v4005 = vpop.f32.mrf.mxu0
        %4006 = vmatprep.mubr.f32.mxu0 0.0
        %4007 = vmatmul.mubr.f32.gmra.mxu0 %v3879
        %v4008 = vpop.f32.mrf.mxu0
        %v4009 = vadd.f32 %v3930, %v4008
        %v4010 = vpop.f32.mrf.mxu0
        %4011 = vmatprep.mubr.f32.mxu0 0.0
        %4012 = vmatmul.mubr.f32.gmra.mxu0 %v3880
        %v4013 = vpop.f32.mrf.mxu0
        %v4014 = vadd.f32 %v3930, %v4013
        %v4015 = vpop.f32.mrf.mxu0
        %4016 = vmatprep.mubr.f32.mxu0 0.0
        %4017 = vmatmul.mubr.f32.gmra.mxu0 %v3881
        %v4018 = vpop.f32.mrf.mxu0
        %v4019 = vadd.f32 %v3930, %v4018
        %v4020 = vpop.f32.mrf.mxu0
        %4021 = vmatprep.mubr.f32.mxu0 0.0
        %4022 = vmatmul.mubr.f32.gmra.mxu0 %v3882
        %v4023 = vpop.f32.mrf.mxu0
        %v4024 = vadd.f32 %v3930, %v4023
        %v4025 = vpop.f32.mrf.mxu0
        %4026 = vmatprep.mubr.f32.mxu0 0.0
        %4027 = vmatmul.mubr.f32.gmra.mxu0 %v3883
        %v4028 = vpop.f32.mrf.mxu0
        %v4029 = vadd.f32 %v3930, %v4028
        %v4030 = vpop.f32.mrf.mxu0
        %4031 = vmatprep.mubr.f32.mxu0 0.0
        %4032 = vmatmul.mubr.f32.gmra.mxu0 %v3884
        %v4033 = vpop.f32.mrf.mxu0
        %v4034 = vadd.f32 %v3930, %v4033
        %v4035 = vpop.f32.mrf.mxu0
        %4036 = vmatprep.mubr.f32.mxu0 0.0
        %4037 = vmatmul.mubr.f32.gmra.mxu0 %v3885
        %v4038 = vpop.f32.mrf.mxu0
        %v4039 = vadd.f32 %v3930, %v4038
        %v4040 = vpop.f32.mrf.mxu0
        %4041 = vmatprep.mubr.f32.mxu0 0.0
        %4042 = vmatmul.mubr.f32.gmra.mxu0 %v3886
        %v4043 = vpop.f32.mrf.mxu0
        %v4044 = vadd.f32 %v3930, %v4043
        %v4045 = vpop.f32.mrf.mxu0
        %4046 = vmatprep.mubr.f32.mxu0 0.0
        %4047 = vmatmul.mubr.f32.gmra.mxu0 %v3887
        %v4048 = vpop.f32.mrf.mxu0
        %v4049 = vadd.f32 %v3930, %v4048
        %v4050 = vpop.f32.mrf.mxu0
        %4051 = vmatprep.mubr.f32.mxu0 0.0
        %4052 = vmatmul.mubr.f32.gmra.mxu0 %v3888
        %v4053 = vpop.f32.mrf.mxu0
        %v4054 = vadd.f32 %v3930, %v4053
        %v4055 = vpop.f32.mrf.mxu0
        %4056 = vmatprep.mubr.f32.mxu0 0.0
        %4057 = vmatmul.mubr.f32.gmra.mxu0 %v3889
        %v4058 = vpop.f32.mrf.mxu0
        %v4059 = vadd.f32 %v3930, %v4058
        %v4060 = vpop.f32.mrf.mxu0
        %4061 = vmatprep.mubr.f32.mxu0 0.0
        %4062 = vmatmul.mubr.f32.gmra.mxu0 %v3890
        %v4063 = vpop.f32.mrf.mxu0
        %v4064 = vadd.f32 %v3930, %v4063
        %v4065 = vpop.f32.mrf.mxu0
        %4066 = vmatprep.mubr.f32.mxu0 0.0
        %4067 = vmatmul.mubr.f32.gmra.mxu0 %v3891
        %v4068 = vpop.f32.mrf.mxu0
        %v4069 = vadd.f32 %v3930, %v4068
        %v4070 = vpop.f32.mrf.mxu0
        %4071 = vmatprep.mubr.f32.mxu0 0.0
        %4072 = vmatmul.mubr.f32.gmra.mxu0 %v3892
        %v4073 = vpop.f32.mrf.mxu0
        %v4074 = vadd.f32 %v3930, %v4073
        %v4075 = vpop.f32.mrf.mxu0
        %4076 = vmatprep.mubr.f32.mxu0 0.0
        %4077 = vmatmul.mubr.f32.gmra.mxu0 %v3893
        %v4078 = vpop.f32.mrf.mxu0
        %v4079 = vadd.f32 %v3930, %v4078
        %v4080 = vpop.f32.mrf.mxu0
        %4081 = vmatprep.mubr.f32.mxu0 0.0
        %4082 = vmatmul.mubr.f32.gmra.mxu0 %v3894
        %v4083 = vpop.f32.mrf.mxu0
        %v4084 = vadd.f32 %v3930, %v4083
        %v4085 = vpop.f32.mrf.mxu0
        %4086 = vmatprep.mubr.f32.mxu0 0.0
        %4087 = vmatmul.mubr.f32.gmra.mxu0 %v3895
        %v4088 = vpop.f32.mrf.mxu0
        %v4089 = vadd.f32 %v3930, %v4088
        %v4090 = vpop.f32.mrf.mxu0
        %4091 = vmatprep.mubr.f32.mxu0 0.0
        %4092 = vmatmul.mubr.f32.gmra.mxu0 %v3896
        %v4093 = vpop.f32.mrf.mxu0
        %v4094 = vadd.f32 %v3930, %v4093
        %v4095 = vpop.f32.mrf.mxu0
        %4096 = vmatprep.mubr.f32.mxu0 0.0
        %4097 = vmatmul.mubr.f32.gmra.mxu0 %v3897
        %v4098 = vpop.f32.mrf.mxu0
        %v4099 = vadd.f32 %v3930, %v4098
        %v4100 = vpop.f32.mrf.mxu0
        %4101 = vmatprep.mubr.f32.mxu0 0.0
        %4102 = vmatmul.mubr.f32.gmra.mxu0 %v3898
        %v4103 = vpop.f32.mrf.mxu0
        %v4104 = vadd.f32 %v3930, %v4103
        %v4105 = vpop.f32.mrf.mxu0
        %4106 = vmatprep.mubr.f32.mxu0 0.0
        %4107 = vmatmul.mubr.f32.gmra.mxu0 %v3899
        %v4108 = vpop.f32.mrf.mxu0
        %v4109 = vadd.f32 %v3930, %v4108
        %v4110 = vpop.f32.mrf.mxu0
        %4111 = vmatprep.mubr.f32.mxu0 0.0
        %4112 = vmatmul.mubr.f32.gmra.mxu0 %v3900
        %v4113 = vpop.f32.mrf.mxu0
        %v4114 = vadd.f32 %v3930, %v4113
        %v4115 = vpop.f32.mrf.mxu0
        %4116 = vmatprep.mubr.f32.mxu0 0.0
        %4117 = vmatmul.mubr.f32.gmra.mxu0 %v3901
        %v4118 = vpop.f32.mrf.mxu0
        %v4119 = vadd.f32 %v3930, %v4118
        %v4120 = vpop.f32.mrf.mxu0
        %4121 = vmatprep.mubr.f32.mxu0 0.0
        %4122 = vmatmul.mubr.f32.gmra.mxu0 %v3902
        %v4123 = vpop.f32.mrf.mxu0
        %v4124 = vadd.f32 %v3930, %v4123
        %v4125 = vpop.f32.mrf.mxu0
        %4126 = vmatprep.mubr.f32.mxu0 0.0
        %4127 = vmatmul.mubr.f32.gmra.mxu0 %v3903
        %v4128 = vpop.f32.mrf.mxu0
        %v4129 = vadd.f32 %v3930, %v4128
        %v4130 = vpop.f32.mrf.mxu0
        %4131 = vmatprep.mubr.f32.mxu0 0.0
        %4132 = vmatmul.mubr.f32.gmra.mxu0 %v3904
        %v4133 = vpop.f32.mrf.mxu0
        %v4134 = vadd.f32 %v3930, %v4133
        %v4135 = vpop.f32.mrf.mxu0
        %4136 = vmatprep.mubr.f32.mxu0 0.0
        %4137 = vmatmul.mubr.f32.gmra.mxu0 %v3905
        %v4138 = vpop.f32.mrf.mxu0
        %v4139 = vadd.f32 %v3930, %v4138
        %v4140 = vpop.f32.mrf.mxu0
        %4141 = vmatprep.mubr.f32.mxu0 0.0
        %4142 = vmatmul.mubr.f32.gmra.mxu0 %v3906
        %v4143 = vpop.f32.mrf.mxu0
        %v4144 = vadd.f32 %v3930, %v4143
        %v4145 = vpop.f32.mrf.mxu0
        %4146 = vmatprep.mubr.f32.mxu0 0.0
        %4147 = vmatmul.mubr.f32.gmra.mxu0 %v3907
        %v4148 = vpop.f32.mrf.mxu0
        %v4149 = vadd.f32 %v3930, %v4148
        %v4150 = vpop.f32.mrf.mxu0
        %4151 = vmatprep.mubr.f32.mxu0 0.0
        %4152 = vmatmul.mubr.f32.gmra.mxu0 %v3908
        %v4153 = vpop.f32.mrf.mxu0
        %v4154 = vadd.f32 %v3930, %v4153
        %v4155 = vpop.f32.mrf.mxu0
        %4156 = vdwg.mxu0
        %v4157 = vmul.f32 %v3999, 0.70710677
        %v4158 = vmul.f32 %v4004, 0.70710677
        %v4159 = vmul.f32 %v4009, 0.70710677
        %v4160 = vmul.f32 %v4014, 0.70710677
        %v4161 = vmul.f32 %v4019, 0.70710677
        %v4162 = vmul.f32 %v4024, 0.70710677
        %v4163 = vmul.f32 %v4029, 0.70710677
        %v4164 = vmul.f32 %v4034, 0.70710677
        %v4165 = vmul.f32 %v4039, 0.70710677
        %v4166 = vmul.f32 %v4044, 0.70710677
        %v4167 = vmul.f32 %v4049, 0.70710677
        %v4168 = vmul.f32 %v4054, 0.70710677
        %v4169 = vmul.f32 %v4059, 0.70710677
        %v4170 = vmul.f32 %v4064, 0.70710677
        %v4171 = vmul.f32 %v4069, 0.70710677
        %v4172 = vmul.f32 %v4074, 0.70710677
        %v4173 = vmul.f32 %v4079, 0.70710677
        %v4174 = vmul.f32 %v4084, 0.70710677
        %v4175 = vmul.f32 %v4089, 0.70710677
        %v4176 = vmul.f32 %v4094, 0.70710677
        %v4177 = vmul.f32 %v4099, 0.70710677
        %v4178 = vmul.f32 %v4104, 0.70710677
        %v4179 = vmul.f32 %v4109, 0.70710677
        %v4180 = vmul.f32 %v4114, 0.70710677
        %v4181 = vmul.f32 %v4119, 0.70710677
        %v4182 = vmul.f32 %v4124, 0.70710677
        %v4183 = vmul.f32 %v4129, 0.70710677
        %v4184 = vmul.f32 %v4134, 0.70710677
        %v4185 = vmul.f32 %v4139, 0.70710677
        %v4186 = vmul.f32 %v4144, 0.70710677
        %v4187 = vmul.f32 %v4149, 0.70710677
        %v4188 = vmul.f32 %v4154, 0.70710677
        %v4189 = vand.u32 2147483647, %v4157
        %v4190 = vand.u32 2147483647, %v4158
        %v4191 = vand.u32 2147483647, %v4159
        %v4192 = vand.u32 2147483647, %v4160
        %v4193 = vand.u32 2147483647, %v4161
        %v4194 = vand.u32 2147483647, %v4162
        %v4195 = vand.u32 2147483647, %v4163
        %v4196 = vand.u32 2147483647, %v4164
        %v4197 = vand.u32 2147483647, %v4165
        %v4198 = vand.u32 2147483647, %v4166
        %v4199 = vand.u32 2147483647, %v4167
        %v4200 = vand.u32 2147483647, %v4168
        %v4201 = vand.u32 2147483647, %v4169
        %v4202 = vand.u32 2147483647, %v4170
        %v4203 = vand.u32 2147483647, %v4171
        %v4204 = vand.u32 2147483647, %v4172
        %v4205 = vand.u32 2147483647, %v4173
        %v4206 = vand.u32 2147483647, %v4174
        %v4207 = vand.u32 2147483647, %v4175
        %v4208 = vand.u32 2147483647, %v4176
        %v4209 = vand.u32 2147483647, %v4177
        %v4210 = vand.u32 2147483647, %v4178
        %v4211 = vand.u32 2147483647, %v4179
        %v4212 = vand.u32 2147483647, %v4180
        %v4213 = vand.u32 2147483647, %v4181
        %v4214 = vand.u32 2147483647, %v4182
        %v4215 = vand.u32 2147483647, %v4183
        %v4216 = vand.u32 2147483647, %v4184
        %v4217 = vand.u32 2147483647, %v4185
        %v4218 = vand.u32 2147483647, %v4186
        %v4219 = vand.u32 2147483647, %v4187
        %v4220 = vand.u32 2147483647, %v4188
        %v4221 = vmul.f32 %v4189, 0.3275911
        %v4222 = vmul.f32 %v4190, 0.3275911
        %v4223 = vmul.f32 %v4191, 0.3275911
        %v4224 = vmul.f32 %v4192, 0.3275911
        %v4225 = vmul.f32 %v4193, 0.3275911
        %v4226 = vmul.f32 %v4194, 0.3275911
        %v4227 = vmul.f32 %v4195, 0.3275911
        %v4228 = vmul.f32 %v4196, 0.3275911
        %v4229 = vmul.f32 %v4197, 0.3275911
        %v4230 = vmul.f32 %v4198, 0.3275911
        %v4231 = vmul.f32 %v4199, 0.3275911
        %v4232 = vmul.f32 %v4200, 0.3275911
        %v4233 = vmul.f32 %v4201, 0.3275911
        %v4234 = vmul.f32 %v4202, 0.3275911
        %v4235 = vmul.f32 %v4203, 0.3275911
        %v4236 = vmul.f32 %v4204, 0.3275911
        %v4237 = vmul.f32 %v4205, 0.3275911
        %v4238 = vmul.f32 %v4206, 0.3275911
        %v4239 = vmul.f32 %v4207, 0.3275911
        %v4240 = vmul.f32 %v4208, 0.3275911
        %v4241 = vmul.f32 %v4209, 0.3275911
        %v4242 = vmul.f32 %v4210, 0.3275911
        %v4243 = vmul.f32 %v4211, 0.3275911
        %v4244 = vmul.f32 %v4212, 0.3275911
        %v4245 = vmul.f32 %v4213, 0.3275911
        %v4246 = vmul.f32 %v4214, 0.3275911
        %v4247 = vmul.f32 %v4215, 0.3275911
        %v4248 = vmul.f32 %v4216, 0.3275911
        %v4249 = vmul.f32 %v4217, 0.3275911
        %v4250 = vmul.f32 %v4218, 0.3275911
        %v4251 = vmul.f32 %v4219, 0.3275911
        %v4252 = vmul.f32 %v4220, 0.3275911
        %v4253 = vadd.f32 %v4221, 1.0
        %v4254 = vadd.f32 %v4222, 1.0
        %v4255 = vadd.f32 %v4223, 1.0
        %v4256 = vadd.f32 %v4224, 1.0
        %v4257 = vadd.f32 %v4225, 1.0
        %v4258 = vadd.f32 %v4226, 1.0
        %v4259 = vadd.f32 %v4227, 1.0
        %v4260 = vadd.f32 %v4228, 1.0
        %v4261 = vadd.f32 %v4229, 1.0
        %v4262 = vadd.f32 %v4230, 1.0
        %v4263 = vadd.f32 %v4231, 1.0
        %v4264 = vadd.f32 %v4232, 1.0
        %v4265 = vadd.f32 %v4233, 1.0
        %v4266 = vadd.f32 %v4234, 1.0
        %v4267 = vadd.f32 %v4235, 1.0
        %v4268 = vadd.f32 %v4236, 1.0
        %v4269 = vadd.f32 %v4237, 1.0
        %v4270 = vadd.f32 %v4238, 1.0
        %v4271 = vadd.f32 %v4239, 1.0
        %v4272 = vadd.f32 %v4240, 1.0
        %v4273 = vadd.f32 %v4241, 1.0
        %v4274 = vadd.f32 %v4242, 1.0
        %v4275 = vadd.f32 %v4243, 1.0
        %v4276 = vadd.f32 %v4244, 1.0
        %v4277 = vadd.f32 %v4245, 1.0
        %v4278 = vadd.f32 %v4246, 1.0
        %v4279 = vadd.f32 %v4247, 1.0
        %v4280 = vadd.f32 %v4248, 1.0
        %v4281 = vadd.f32 %v4249, 1.0
        %v4282 = vadd.f32 %v4250, 1.0
        %v4283 = vadd.f32 %v4251, 1.0
        %v4284 = vadd.f32 %v4252, 1.0
        %v4285 = vrcp.pop %v4253
        %v4286 = vmul.f32 1.0, %v4285
        %v4287 = vrcp.pop %v4254
        %v4288 = vmul.f32 1.0, %v4287
        %v4289 = vrcp.pop %v4255
        %v4290 = vmul.f32 1.0, %v4289
        %v4291 = vrcp.pop %v4256
        %v4292 = vmul.f32 1.0, %v4291
        %v4293 = vrcp.pop %v4257
        %v4294 = vmul.f32 1.0, %v4293
        %v4295 = vrcp.pop %v4258
        %v4296 = vmul.f32 1.0, %v4295
        %v4297 = vrcp.pop %v4259
        %v4298 = vmul.f32 1.0, %v4297
        %v4299 = vrcp.pop %v4260
        %v4300 = vmul.f32 1.0, %v4299
        %v4301 = vrcp.pop %v4261
        %v4302 = vmul.f32 1.0, %v4301
        %v4303 = vrcp.pop %v4262
        %v4304 = vmul.f32 1.0, %v4303
        %v4305 = vrcp.pop %v4263
        %v4306 = vmul.f32 1.0, %v4305
        %v4307 = vrcp.pop %v4264
        %v4308 = vmul.f32 1.0, %v4307
        %v4309 = vrcp.pop %v4265
        %v4310 = vmul.f32 1.0, %v4309
        %v4311 = vrcp.pop %v4266
        %v4312 = vmul.f32 1.0, %v4311
        %v4313 = vrcp.pop %v4267
        %v4314 = vmul.f32 1.0, %v4313
        %v4315 = vrcp.pop %v4268
        %v4316 = vmul.f32 1.0, %v4315
        %v4317 = vrcp.pop %v4269
        %v4318 = vmul.f32 1.0, %v4317
        %v4319 = vrcp.pop %v4270
        %v4320 = vmul.f32 1.0, %v4319
        %v4321 = vrcp.pop %v4271
        %v4322 = vmul.f32 1.0, %v4321
        %v4323 = vrcp.pop %v4272
        %v4324 = vmul.f32 1.0, %v4323
        %v4325 = vrcp.pop %v4273
        %v4326 = vmul.f32 1.0, %v4325
        %v4327 = vrcp.pop %v4274
        %v4328 = vmul.f32 1.0, %v4327
        %v4329 = vrcp.pop %v4275
        %v4330 = vmul.f32 1.0, %v4329
        %v4331 = vrcp.pop %v4276
        %v4332 = vmul.f32 1.0, %v4331
        %v4333 = vrcp.pop %v4277
        %v4334 = vmul.f32 1.0, %v4333
        %v4335 = vrcp.pop %v4278
        %v4336 = vmul.f32 1.0, %v4335
        %v4337 = vrcp.pop %v4279
        %v4338 = vmul.f32 1.0, %v4337
        %v4339 = vrcp.pop %v4280
        %v4340 = vmul.f32 1.0, %v4339
        %v4341 = vrcp.pop %v4281
        %v4342 = vmul.f32 1.0, %v4341
        %v4343 = vrcp.pop %v4282
        %v4344 = vmul.f32 1.0, %v4343
        %v4345 = vrcp.pop %v4283
        %v4346 = vmul.f32 1.0, %v4345
        %v4347 = vrcp.pop %v4284
        %v4348 = vmul.f32 1.0, %v4347
        %v4349 = vmul.f32 %v4286, 1.0614054
        %v4350 = vmul.f32 %v4288, 1.0614054
        %v4351 = vmul.f32 %v4290, 1.0614054
        %v4352 = vmul.f32 %v4292, 1.0614054
        %v4353 = vmul.f32 %v4294, 1.0614054
        %v4354 = vmul.f32 %v4296, 1.0614054
        %v4355 = vmul.f32 %v4298, 1.0614054
        %v4356 = vmul.f32 %v4300, 1.0614054
        %v4357 = vmul.f32 %v4302, 1.0614054
        %v4358 = vmul.f32 %v4304, 1.0614054
        %v4359 = vmul.f32 %v4306, 1.0614054
        %v4360 = vmul.f32 %v4308, 1.0614054
        %v4361 = vmul.f32 %v4310, 1.0614054
        %v4362 = vmul.f32 %v4312, 1.0614054
        %v4363 = vmul.f32 %v4314, 1.0614054
        %v4364 = vmul.f32 %v4316, 1.0614054
        %v4365 = vmul.f32 %v4318, 1.0614054
        %v4366 = vmul.f32 %v4320, 1.0614054
        %v4367 = vmul.f32 %v4322, 1.0614054
        %v4368 = vmul.f32 %v4324, 1.0614054
        %v4369 = vmul.f32 %v4326, 1.0614054
        %v4370 = vmul.f32 %v4328, 1.0614054
        %v4371 = vmul.f32 %v4330, 1.0614054
        %v4372 = vmul.f32 %v4332, 1.0614054
        %v4373 = vmul.f32 %v4334, 1.0614054
        %v4374 = vmul.f32 %v4336, 1.0614054
        %v4375 = vmul.f32 %v4338, 1.0614054
        %v4376 = vmul.f32 %v4340, 1.0614054
        %v4377 = vmul.f32 %v4342, 1.0614054
        %v4378 = vmul.f32 %v4344, 1.0614054
        %v4379 = vmul.f32 %v4346, 1.0614054
        %v4380 = vmul.f32 %v4348, 1.0614054
        %v4381 = vsub.f32 %v4349, 1.4531521
        %v4382 = vsub.f32 %v4350, 1.4531521
        %v4383 = vsub.f32 %v4351, 1.4531521
        %v4384 = vsub.f32 %v4352, 1.4531521
        %v4385 = vsub.f32 %v4353, 1.4531521
        %v4386 = vsub.f32 %v4354, 1.4531521
        %v4387 = vsub.f32 %v4355, 1.4531521
        %v4388 = vsub.f32 %v4356, 1.4531521
        %v4389 = vsub.f32 %v4357, 1.4531521
        %v4390 = vsub.f32 %v4358, 1.4531521
        %v4391 = vsub.f32 %v4359, 1.4531521
        %v4392 = vsub.f32 %v4360, 1.4531521
        %v4393 = vsub.f32 %v4361, 1.4531521
        %v4394 = vsub.f32 %v4362, 1.4531521
        %v4395 = vsub.f32 %v4363, 1.4531521
        %v4396 = vsub.f32 %v4364, 1.4531521
        %v4397 = vsub.f32 %v4365, 1.4531521
        %v4398 = vsub.f32 %v4366, 1.4531521
        %v4399 = vsub.f32 %v4367, 1.4531521
        %v4400 = vsub.f32 %v4368, 1.4531521
        %v4401 = vsub.f32 %v4369, 1.4531521
        %v4402 = vsub.f32 %v4370, 1.4531521
        %v4403 = vsub.f32 %v4371, 1.4531521
        %v4404 = vsub.f32 %v4372, 1.4531521
        %v4405 = vsub.f32 %v4373, 1.4531521
        %v4406 = vsub.f32 %v4374, 1.4531521
        %v4407 = vsub.f32 %v4375, 1.4531521
        %v4408 = vsub.f32 %v4376, 1.4531521
        %v4409 = vsub.f32 %v4377, 1.4531521
        %v4410 = vsub.f32 %v4378, 1.4531521
        %v4411 = vsub.f32 %v4379, 1.4531521
        %v4412 = vsub.f32 %v4380, 1.4531521
        %v4413 = vmul.f32 %v4381, %v4286
        %v4414 = vmul.f32 %v4382, %v4288
        %v4415 = vmul.f32 %v4383, %v4290
        %v4416 = vmul.f32 %v4384, %v4292
        %v4417 = vmul.f32 %v4385, %v4294
        %v4418 = vmul.f32 %v4386, %v4296
        %v4419 = vmul.f32 %v4387, %v4298
        %v4420 = vmul.f32 %v4388, %v4300
        %v4421 = vmul.f32 %v4389, %v4302
        %v4422 = vmul.f32 %v4390, %v4304
        %v4423 = vmul.f32 %v4391, %v4306
        %v4424 = vmul.f32 %v4392, %v4308
        %v4425 = vmul.f32 %v4393, %v4310
        %v4426 = vmul.f32 %v4394, %v4312
        %v4427 = vmul.f32 %v4395, %v4314
        %v4428 = vmul.f32 %v4396, %v4316
        %v4429 = vmul.f32 %v4397, %v4318
        %v4430 = vmul.f32 %v4398, %v4320
        %v4431 = vmul.f32 %v4399, %v4322
        %v4432 = vmul.f32 %v4400, %v4324
        %v4433 = vmul.f32 %v4401, %v4326
        %v4434 = vmul.f32 %v4402, %v4328
        %v4435 = vmul.f32 %v4403, %v4330
        %v4436 = vmul.f32 %v4404, %v4332
        %v4437 = vmul.f32 %v4405, %v4334
        %v4438 = vmul.f32 %v4406, %v4336
        %v4439 = vmul.f32 %v4407, %v4338
        %v4440 = vmul.f32 %v4408, %v4340
        %v4441 = vmul.f32 %v4409, %v4342
        %v4442 = vmul.f32 %v4410, %v4344
        %v4443 = vmul.f32 %v4411, %v4346
        %v4444 = vmul.f32 %v4412, %v4348
        %v4445 = vadd.f32 %v4413, 1.4214138
        %v4446 = vadd.f32 %v4414, 1.4214138
        %v4447 = vadd.f32 %v4415, 1.4214138
        %v4448 = vadd.f32 %v4416, 1.4214138
        %v4449 = vadd.f32 %v4417, 1.4214138
        %v4450 = vadd.f32 %v4418, 1.4214138
        %v4451 = vadd.f32 %v4419, 1.4214138
        %v4452 = vadd.f32 %v4420, 1.4214138
        %v4453 = vadd.f32 %v4421, 1.4214138
        %v4454 = vadd.f32 %v4422, 1.4214138
        %v4455 = vadd.f32 %v4423, 1.4214138
        %v4456 = vadd.f32 %v4424, 1.4214138
        %v4457 = vadd.f32 %v4425, 1.4214138
        %v4458 = vadd.f32 %v4426, 1.4214138
        %v4459 = vadd.f32 %v4427, 1.4214138
        %v4460 = vadd.f32 %v4428, 1.4214138
        %v4461 = vadd.f32 %v4429, 1.4214138
        %v4462 = vadd.f32 %v4430, 1.4214138
        %v4463 = vadd.f32 %v4431, 1.4214138
        %v4464 = vadd.f32 %v4432, 1.4214138
        %v4465 = vadd.f32 %v4433, 1.4214138
        %v4466 = vadd.f32 %v4434, 1.4214138
        %v4467 = vadd.f32 %v4435, 1.4214138
        %v4468 = vadd.f32 %v4436, 1.4214138
        %v4469 = vadd.f32 %v4437, 1.4214138
        %v4470 = vadd.f32 %v4438, 1.4214138
        %v4471 = vadd.f32 %v4439, 1.4214138
        %v4472 = vadd.f32 %v4440, 1.4214138
        %v4473 = vadd.f32 %v4441, 1.4214138
        %v4474 = vadd.f32 %v4442, 1.4214138
        %v4475 = vadd.f32 %v4443, 1.4214138
        %v4476 = vadd.f32 %v4444, 1.4214138
        %v4477 = vmul.f32 %v4445, %v4286
        %v4478 = vmul.f32 %v4446, %v4288
        %v4479 = vmul.f32 %v4447, %v4290
        %v4480 = vmul.f32 %v4448, %v4292
        %v4481 = vmul.f32 %v4449, %v4294
        %v4482 = vmul.f32 %v4450, %v4296
        %v4483 = vmul.f32 %v4451, %v4298
        %v4484 = vmul.f32 %v4452, %v4300
        %v4485 = vmul.f32 %v4453, %v4302
        %v4486 = vmul.f32 %v4454, %v4304
        %v4487 = vmul.f32 %v4455, %v4306
        %v4488 = vmul.f32 %v4456, %v4308
        %v4489 = vmul.f32 %v4457, %v4310
        %v4490 = vmul.f32 %v4458, %v4312
        %v4491 = vmul.f32 %v4459, %v4314
        %v4492 = vmul.f32 %v4460, %v4316
        %v4493 = vmul.f32 %v4461, %v4318
        %v4494 = vmul.f32 %v4462, %v4320
        %v4495 = vmul.f32 %v4463, %v4322
        %v4496 = vmul.f32 %v4464, %v4324
        %v4497 = vmul.f32 %v4465, %v4326
        %v4498 = vmul.f32 %v4466, %v4328
        %v4499 = vmul.f32 %v4467, %v4330
        %v4500 = vmul.f32 %v4468, %v4332
        %v4501 = vmul.f32 %v4469, %v4334
        %v4502 = vmul.f32 %v4470, %v4336
        %v4503 = vmul.f32 %v4471, %v4338
        %v4504 = vmul.f32 %v4472, %v4340
        %v4505 = vmul.f32 %v4473, %v4342
        %v4506 = vmul.f32 %v4474, %v4344
        %v4507 = vmul.f32 %v4475, %v4346
        %v4508 = vmul.f32 %v4476, %v4348
        %v4509 = vsub.f32 %v4477, 0.28449672
        %v4510 = vsub.f32 %v4478, 0.28449672
        %v4511 = vsub.f32 %v4479, 0.28449672
        %v4512 = vsub.f32 %v4480, 0.28449672
        %v4513 = vsub.f32 %v4481, 0.28449672
        %v4514 = vsub.f32 %v4482, 0.28449672
        %v4515 = vsub.f32 %v4483, 0.28449672
        %v4516 = vsub.f32 %v4484, 0.28449672
        %v4517 = vsub.f32 %v4485, 0.28449672
        %v4518 = vsub.f32 %v4486, 0.28449672
        %v4519 = vsub.f32 %v4487, 0.28449672
        %v4520 = vsub.f32 %v4488, 0.28449672
        %v4521 = vsub.f32 %v4489, 0.28449672
        %v4522 = vsub.f32 %v4490, 0.28449672
        %v4523 = vsub.f32 %v4491, 0.28449672
        %v4524 = vsub.f32 %v4492, 0.28449672
        %v4525 = vsub.f32 %v4493, 0.28449672
        %v4526 = vsub.f32 %v4494, 0.28449672
        %v4527 = vsub.f32 %v4495, 0.28449672
        %v4528 = vsub.f32 %v4496, 0.28449672
        %v4529 = vsub.f32 %v4497, 0.28449672
        %v4530 = vsub.f32 %v4498, 0.28449672
        %v4531 = vsub.f32 %v4499, 0.28449672
        %v4532 = vsub.f32 %v4500, 0.28449672
        %v4533 = vsub.f32 %v4501, 0.28449672
        %v4534 = vsub.f32 %v4502, 0.28449672
        %v4535 = vsub.f32 %v4503, 0.28449672
        %v4536 = vsub.f32 %v4504, 0.28449672
        %v4537 = vsub.f32 %v4505, 0.28449672
        %v4538 = vsub.f32 %v4506, 0.28449672
        %v4539 = vsub.f32 %v4507, 0.28449672
        %v4540 = vsub.f32 %v4508, 0.28449672
        %v4541 = vmul.f32 %v4509, %v4286
        %v4542 = vmul.f32 %v4510, %v4288
        %v4543 = vmul.f32 %v4511, %v4290
        %v4544 = vmul.f32 %v4512, %v4292
        %v4545 = vmul.f32 %v4513, %v4294
        %v4546 = vmul.f32 %v4514, %v4296
        %v4547 = vmul.f32 %v4515, %v4298
        %v4548 = vmul.f32 %v4516, %v4300
        %v4549 = vmul.f32 %v4517, %v4302
        %v4550 = vmul.f32 %v4518, %v4304
        %v4551 = vmul.f32 %v4519, %v4306
        %v4552 = vmul.f32 %v4520, %v4308
        %v4553 = vmul.f32 %v4521, %v4310
        %v4554 = vmul.f32 %v4522, %v4312
        %v4555 = vmul.f32 %v4523, %v4314
        %v4556 = vmul.f32 %v4524, %v4316
        %v4557 = vmul.f32 %v4525, %v4318
        %v4558 = vmul.f32 %v4526, %v4320
        %v4559 = vmul.f32 %v4527, %v4322
        %v4560 = vmul.f32 %v4528, %v4324
        %v4561 = vmul.f32 %v4529, %v4326
        %v4562 = vmul.f32 %v4530, %v4328
        %v4563 = vmul.f32 %v4531, %v4330
        %v4564 = vmul.f32 %v4532, %v4332
        %v4565 = vmul.f32 %v4533, %v4334
        %v4566 = vmul.f32 %v4534, %v4336
        %v4567 = vmul.f32 %v4535, %v4338
        %v4568 = vmul.f32 %v4536, %v4340
        %v4569 = vmul.f32 %v4537, %v4342
        %v4570 = vmul.f32 %v4538, %v4344
        %v4571 = vmul.f32 %v4539, %v4346
        %v4572 = vmul.f32 %v4540, %v4348
        %v4573 = vadd.f32 %v4541, 0.2548296
        %v4574 = vadd.f32 %v4542, 0.2548296
        %v4575 = vadd.f32 %v4543, 0.2548296
        %v4576 = vadd.f32 %v4544, 0.2548296
        %v4577 = vadd.f32 %v4545, 0.2548296
        %v4578 = vadd.f32 %v4546, 0.2548296
        %v4579 = vadd.f32 %v4547, 0.2548296
        %v4580 = vadd.f32 %v4548, 0.2548296
        %v4581 = vadd.f32 %v4549, 0.2548296
        %v4582 = vadd.f32 %v4550, 0.2548296
        %v4583 = vadd.f32 %v4551, 0.2548296
        %v4584 = vadd.f32 %v4552, 0.2548296
        %v4585 = vadd.f32 %v4553, 0.2548296
        %v4586 = vadd.f32 %v4554, 0.2548296
        %v4587 = vadd.f32 %v4555, 0.2548296
        %v4588 = vadd.f32 %v4556, 0.2548296
        %v4589 = vadd.f32 %v4557, 0.2548296
        %v4590 = vadd.f32 %v4558, 0.2548296
        %v4591 = vadd.f32 %v4559, 0.2548296
        %v4592 = vadd.f32 %v4560, 0.2548296
        %v4593 = vadd.f32 %v4561, 0.2548296
        %v4594 = vadd.f32 %v4562, 0.2548296
        %v4595 = vadd.f32 %v4563, 0.2548296
        %v4596 = vadd.f32 %v4564, 0.2548296
        %v4597 = vadd.f32 %v4565, 0.2548296
        %v4598 = vadd.f32 %v4566, 0.2548296
        %v4599 = vadd.f32 %v4567, 0.2548296
        %v4600 = vadd.f32 %v4568, 0.2548296
        %v4601 = vadd.f32 %v4569, 0.2548296
        %v4602 = vadd.f32 %v4570, 0.2548296
        %v4603 = vadd.f32 %v4571, 0.2548296
        %v4604 = vadd.f32 %v4572, 0.2548296
        %v4605 = vmul.f32 %v4573, %v4286
        %v4606 = vmul.f32 %v4574, %v4288
        %v4607 = vmul.f32 %v4575, %v4290
        %v4608 = vmul.f32 %v4576, %v4292
        %v4609 = vmul.f32 %v4577, %v4294
        %v4610 = vmul.f32 %v4578, %v4296
        %v4611 = vmul.f32 %v4579, %v4298
        %v4612 = vmul.f32 %v4580, %v4300
        %v4613 = vmul.f32 %v4581, %v4302
        %v4614 = vmul.f32 %v4582, %v4304
        %v4615 = vmul.f32 %v4583, %v4306
        %v4616 = vmul.f32 %v4584, %v4308
        %v4617 = vmul.f32 %v4585, %v4310
        %v4618 = vmul.f32 %v4586, %v4312
        %v4619 = vmul.f32 %v4587, %v4314
        %v4620 = vmul.f32 %v4588, %v4316
        %v4621 = vmul.f32 %v4589, %v4318
        %v4622 = vmul.f32 %v4590, %v4320
        %v4623 = vmul.f32 %v4591, %v4322
        %v4624 = vmul.f32 %v4592, %v4324
        %v4625 = vmul.f32 %v4593, %v4326
        %v4626 = vmul.f32 %v4594, %v4328
        %v4627 = vmul.f32 %v4595, %v4330
        %v4628 = vmul.f32 %v4596, %v4332
        %v4629 = vmul.f32 %v4597, %v4334
        %v4630 = vmul.f32 %v4598, %v4336
        %v4631 = vmul.f32 %v4599, %v4338
        %v4632 = vmul.f32 %v4600, %v4340
        %v4633 = vmul.f32 %v4601, %v4342
        %v4634 = vmul.f32 %v4602, %v4344
        %v4635 = vmul.f32 %v4603, %v4346
        %v4636 = vmul.f32 %v4604, %v4348
        %v4637 = vsub.f32 0.0, %v4189
        %v4638 = vsub.f32 0.0, %v4190
        %v4639 = vsub.f32 0.0, %v4191
        %v4640 = vsub.f32 0.0, %v4192
        %v4641 = vsub.f32 0.0, %v4193
        %v4642 = vsub.f32 0.0, %v4194
        %v4643 = vsub.f32 0.0, %v4195
        %v4644 = vsub.f32 0.0, %v4196
        %v4645 = vsub.f32 0.0, %v4197
        %v4646 = vsub.f32 0.0, %v4198
        %v4647 = vsub.f32 0.0, %v4199
        %v4648 = vsub.f32 0.0, %v4200
        %v4649 = vsub.f32 0.0, %v4201
        %v4650 = vsub.f32 0.0, %v4202
        %v4651 = vsub.f32 0.0, %v4203
        %v4652 = vsub.f32 0.0, %v4204
        %v4653 = vsub.f32 0.0, %v4205
        %v4654 = vsub.f32 0.0, %v4206
        %v4655 = vsub.f32 0.0, %v4207
        %v4656 = vsub.f32 0.0, %v4208
        %v4657 = vsub.f32 0.0, %v4209
        %v4658 = vsub.f32 0.0, %v4210
        %v4659 = vsub.f32 0.0, %v4211
        %v4660 = vsub.f32 0.0, %v4212
        %v4661 = vsub.f32 0.0, %v4213
        %v4662 = vsub.f32 0.0, %v4214
        %v4663 = vsub.f32 0.0, %v4215
        %v4664 = vsub.f32 0.0, %v4216
        %v4665 = vsub.f32 0.0, %v4217
        %v4666 = vsub.f32 0.0, %v4218
        %v4667 = vsub.f32 0.0, %v4219
        %v4668 = vsub.f32 0.0, %v4220
        %v4669 = vmul.f32 %v4637, %v4189
        %v4670 = vmul.f32 %v4638, %v4190
        %v4671 = vmul.f32 %v4639, %v4191
        %v4672 = vmul.f32 %v4640, %v4192
        %v4673 = vmul.f32 %v4641, %v4193
        %v4674 = vmul.f32 %v4642, %v4194
        %v4675 = vmul.f32 %v4643, %v4195
        %v4676 = vmul.f32 %v4644, %v4196
        %v4677 = vmul.f32 %v4645, %v4197
        %v4678 = vmul.f32 %v4646, %v4198
        %v4679 = vmul.f32 %v4647, %v4199
        %v4680 = vmul.f32 %v4648, %v4200
        %v4681 = vmul.f32 %v4649, %v4201
        %v4682 = vmul.f32 %v4650, %v4202
        %v4683 = vmul.f32 %v4651, %v4203
        %v4684 = vmul.f32 %v4652, %v4204
        %v4685 = vmul.f32 %v4653, %v4205
        %v4686 = vmul.f32 %v4654, %v4206
        %v4687 = vmul.f32 %v4655, %v4207
        %v4688 = vmul.f32 %v4656, %v4208
        %v4689 = vmul.f32 %v4657, %v4209
        %v4690 = vmul.f32 %v4658, %v4210
        %v4691 = vmul.f32 %v4659, %v4211
        %v4692 = vmul.f32 %v4660, %v4212
        %v4693 = vmul.f32 %v4661, %v4213
        %v4694 = vmul.f32 %v4662, %v4214
        %v4695 = vmul.f32 %v4663, %v4215
        %v4696 = vmul.f32 %v4664, %v4216
        %v4697 = vmul.f32 %v4665, %v4217
        %v4698 = vmul.f32 %v4666, %v4218
        %v4699 = vmul.f32 %v4667, %v4219
        %v4700 = vmul.f32 %v4668, %v4220
        %v4701 = vmul.f32 %v4669, 1.442695
        %v4702 = vpow.pop %v4701
        %v4703 = vmul.f32 %v4670, 1.442695
        %v4704 = vpow.pop %v4703
        %v4705 = vmul.f32 %v4671, 1.442695
        %v4706 = vpow.pop %v4705
        %v4707 = vmul.f32 %v4672, 1.442695
        %v4708 = vpow.pop %v4707
        %v4709 = vmul.f32 %v4673, 1.442695
        %v4710 = vpow.pop %v4709
        %v4711 = vmul.f32 %v4674, 1.442695
        %v4712 = vpow.pop %v4711
        %v4713 = vmul.f32 %v4675, 1.442695
        %v4714 = vpow.pop %v4713
        %v4715 = vmul.f32 %v4676, 1.442695
        %v4716 = vpow.pop %v4715
        %v4717 = vmul.f32 %v4677, 1.442695
        %v4718 = vpow.pop %v4717
        %v4719 = vmul.f32 %v4678, 1.442695
        %v4720 = vpow.pop %v4719
        %v4721 = vmul.f32 %v4679, 1.442695
        %v4722 = vpow.pop %v4721
        %v4723 = vmul.f32 %v4680, 1.442695
        %v4724 = vpow.pop %v4723
        %v4725 = vmul.f32 %v4681, 1.442695
        %v4726 = vpow.pop %v4725
        %v4727 = vmul.f32 %v4682, 1.442695
        %v4728 = vpow.pop %v4727
        %v4729 = vmul.f32 %v4683, 1.442695
        %v4730 = vpow.pop %v4729
        %v4731 = vmul.f32 %v4684, 1.442695
        %v4732 = vpow.pop %v4731
        %v4733 = vmul.f32 %v4685, 1.442695
        %v4734 = vpow.pop %v4733
        %v4735 = vmul.f32 %v4686, 1.442695
        %v4736 = vpow.pop %v4735
        %v4737 = vmul.f32 %v4687, 1.442695
        %v4738 = vpow.pop %v4737
        %v4739 = vmul.f32 %v4688, 1.442695
        %v4740 = vpow.pop %v4739
        %v4741 = vmul.f32 %v4689, 1.442695
        %v4742 = vpow.pop %v4741
        %v4743 = vmul.f32 %v4690, 1.442695
        %v4744 = vpow.pop %v4743
        %v4745 = vmul.f32 %v4691, 1.442695
        %v4746 = vpow.pop %v4745
        %v4747 = vmul.f32 %v4692, 1.442695
        %v4748 = vpow.pop %v4747
        %v4749 = vmul.f32 %v4693, 1.442695
        %v4750 = vpow.pop %v4749
        %v4751 = vmul.f32 %v4694, 1.442695
        %v4752 = vpow.pop %v4751
        %v4753 = vmul.f32 %v4695, 1.442695
        %v4754 = vpow.pop %v4753
        %v4755 = vmul.f32 %v4696, 1.442695
        %v4756 = vpow.pop %v4755
        %v4757 = vmul.f32 %v4697, 1.442695
        %v4758 = vpow.pop %v4757
        %v4759 = vmul.f32 %v4698, 1.442695
        %v4760 = vpow.pop %v4759
        %v4761 = vmul.f32 %v4699, 1.442695
        %v4762 = vpow.pop %v4761
        %v4763 = vmul.f32 %v4700, 1.442695
        %v4764 = vpow.pop %v4763
        %v4765 = vmul.f32 %v4605, %v4702
        %v4766 = vmul.f32 %v4606, %v4704
        %v4767 = vmul.f32 %v4607, %v4706
        %v4768 = vmul.f32 %v4608, %v4708
        %v4769 = vmul.f32 %v4609, %v4710
        %v4770 = vmul.f32 %v4610, %v4712
        %v4771 = vmul.f32 %v4611, %v4714
        %v4772 = vmul.f32 %v4612, %v4716
        %v4773 = vmul.f32 %v4613, %v4718
        %v4774 = vmul.f32 %v4614, %v4720
        %v4775 = vmul.f32 %v4615, %v4722
        %v4776 = vmul.f32 %v4616, %v4724
        %v4777 = vmul.f32 %v4617, %v4726
        %v4778 = vmul.f32 %v4618, %v4728
        %v4779 = vmul.f32 %v4619, %v4730
        %v4780 = vmul.f32 %v4620, %v4732
        %v4781 = vmul.f32 %v4621, %v4734
        %v4782 = vmul.f32 %v4622, %v4736
        %v4783 = vmul.f32 %v4623, %v4738
        %v4784 = vmul.f32 %v4624, %v4740
        %v4785 = vmul.f32 %v4625, %v4742
        %v4786 = vmul.f32 %v4626, %v4744
        %v4787 = vmul.f32 %v4627, %v4746
        %v4788 = vmul.f32 %v4628, %v4748
        %v4789 = vmul.f32 %v4629, %v4750
        %v4790 = vmul.f32 %v4630, %v4752
        %v4791 = vmul.f32 %v4631, %v4754
        %v4792 = vmul.f32 %v4632, %v4756
        %v4793 = vmul.f32 %v4633, %v4758
        %v4794 = vmul.f32 %v4634, %v4760
        %v4795 = vmul.f32 %v4635, %v4762
        %v4796 = vmul.f32 %v4636, %v4764
        %v4797 = vsub.f32 1.0, %v4765
        %v4798 = vsub.f32 1.0, %v4766
        %v4799 = vsub.f32 1.0, %v4767
        %v4800 = vsub.f32 1.0, %v4768
        %v4801 = vsub.f32 1.0, %v4769
        %v4802 = vsub.f32 1.0, %v4770
        %v4803 = vsub.f32 1.0, %v4771
        %v4804 = vsub.f32 1.0, %v4772
        %v4805 = vsub.f32 1.0, %v4773
        %v4806 = vsub.f32 1.0, %v4774
        %v4807 = vsub.f32 1.0, %v4775
        %v4808 = vsub.f32 1.0, %v4776
        %v4809 = vsub.f32 1.0, %v4777
        %v4810 = vsub.f32 1.0, %v4778
        %v4811 = vsub.f32 1.0, %v4779
        %v4812 = vsub.f32 1.0, %v4780
        %v4813 = vsub.f32 1.0, %v4781
        %v4814 = vsub.f32 1.0, %v4782
        %v4815 = vsub.f32 1.0, %v4783
        %v4816 = vsub.f32 1.0, %v4784
        %v4817 = vsub.f32 1.0, %v4785
        %v4818 = vsub.f32 1.0, %v4786
        %v4819 = vsub.f32 1.0, %v4787
        %v4820 = vsub.f32 1.0, %v4788
        %v4821 = vsub.f32 1.0, %v4789
        %v4822 = vsub.f32 1.0, %v4790
        %v4823 = vsub.f32 1.0, %v4791
        %v4824 = vsub.f32 1.0, %v4792
        %v4825 = vsub.f32 1.0, %v4793
        %v4826 = vsub.f32 1.0, %v4794
        %v4827 = vsub.f32 1.0, %v4795
        %v4828 = vsub.f32 1.0, %v4796
        %vm4829 = vcmp.lt.f32.partialorder %v4157, 0.0
        %vm4830 = vcmp.lt.f32.partialorder %v4158, 0.0
        %vm4831 = vcmp.lt.f32.partialorder %v4159, 0.0
        %vm4832 = vcmp.lt.f32.partialorder %v4160, 0.0
        %vm4833 = vcmp.lt.f32.partialorder %v4161, 0.0
        %vm4834 = vcmp.lt.f32.partialorder %v4162, 0.0
        %vm4835 = vcmp.lt.f32.partialorder %v4163, 0.0
        %vm4836 = vcmp.lt.f32.partialorder %v4164, 0.0
        %vm4837 = vcmp.lt.f32.partialorder %v4165, 0.0
        %vm4838 = vcmp.lt.f32.partialorder %v4166, 0.0
        %vm4839 = vcmp.lt.f32.partialorder %v4167, 0.0
        %vm4840 = vcmp.lt.f32.partialorder %v4168, 0.0
        %vm4841 = vcmp.lt.f32.partialorder %v4169, 0.0
        %vm4842 = vcmp.lt.f32.partialorder %v4170, 0.0
        %vm4843 = vcmp.lt.f32.partialorder %v4171, 0.0
        %vm4844 = vcmp.lt.f32.partialorder %v4172, 0.0
        %vm4845 = vcmp.lt.f32.partialorder %v4173, 0.0
        %vm4846 = vcmp.lt.f32.partialorder %v4174, 0.0
        %vm4847 = vcmp.lt.f32.partialorder %v4175, 0.0
        %vm4848 = vcmp.lt.f32.partialorder %v4176, 0.0
        %vm4849 = vcmp.lt.f32.partialorder %v4177, 0.0
        %vm4850 = vcmp.lt.f32.partialorder %v4178, 0.0
        %vm4851 = vcmp.lt.f32.partialorder %v4179, 0.0
        %vm4852 = vcmp.lt.f32.partialorder %v4180, 0.0
        %vm4853 = vcmp.lt.f32.partialorder %v4181, 0.0
        %vm4854 = vcmp.lt.f32.partialorder %v4182, 0.0
        %vm4855 = vcmp.lt.f32.partialorder %v4183, 0.0
        %vm4856 = vcmp.lt.f32.partialorder %v4184, 0.0
        %vm4857 = vcmp.lt.f32.partialorder %v4185, 0.0
        %vm4858 = vcmp.lt.f32.partialorder %v4186, 0.0
        %vm4859 = vcmp.lt.f32.partialorder %v4187, 0.0
        %vm4860 = vcmp.lt.f32.partialorder %v4188, 0.0
        %v4861 = vsub.f32 0.0, %v4797
        %v4862 = vsub.f32 0.0, %v4798
        %v4863 = vsub.f32 0.0, %v4799
        %v4864 = vsub.f32 0.0, %v4800
        %v4865 = vsub.f32 0.0, %v4801
        %v4866 = vsub.f32 0.0, %v4802
        %v4867 = vsub.f32 0.0, %v4803
        %v4868 = vsub.f32 0.0, %v4804
        %v4869 = vsub.f32 0.0, %v4805
        %v4870 = vsub.f32 0.0, %v4806
        %v4871 = vsub.f32 0.0, %v4807
        %v4872 = vsub.f32 0.0, %v4808
        %v4873 = vsub.f32 0.0, %v4809
        %v4874 = vsub.f32 0.0, %v4810
        %v4875 = vsub.f32 0.0, %v4811
        %v4876 = vsub.f32 0.0, %v4812
        %v4877 = vsub.f32 0.0, %v4813
        %v4878 = vsub.f32 0.0, %v4814
        %v4879 = vsub.f32 0.0, %v4815
        %v4880 = vsub.f32 0.0, %v4816
        %v4881 = vsub.f32 0.0, %v4817
        %v4882 = vsub.f32 0.0, %v4818
        %v4883 = vsub.f32 0.0, %v4819
        %v4884 = vsub.f32 0.0, %v4820
        %v4885 = vsub.f32 0.0, %v4821
        %v4886 = vsub.f32 0.0, %v4822
        %v4887 = vsub.f32 0.0, %v4823
        %v4888 = vsub.f32 0.0, %v4824
        %v4889 = vsub.f32 0.0, %v4825
        %v4890 = vsub.f32 0.0, %v4826
        %v4891 = vsub.f32 0.0, %v4827
        %v4892 = vsub.f32 0.0, %v4828
        %v4893 = vsel %vm4829, %v4861, %v4797
        %v4894 = vsel %vm4830, %v4862, %v4798
        %v4895 = vsel %vm4831, %v4863, %v4799
        %v4896 = vsel %vm4832, %v4864, %v4800
        %v4897 = vsel %vm4833, %v4865, %v4801
        %v4898 = vsel %vm4834, %v4866, %v4802
        %v4899 = vsel %vm4835, %v4867, %v4803
        %v4900 = vsel %vm4836, %v4868, %v4804
        %v4901 = vsel %vm4837, %v4869, %v4805
        %v4902 = vsel %vm4838, %v4870, %v4806
        %v4903 = vsel %vm4839, %v4871, %v4807
        %v4904 = vsel %vm4840, %v4872, %v4808
        %v4905 = vsel %vm4841, %v4873, %v4809
        %v4906 = vsel %vm4842, %v4874, %v4810
        %v4907 = vsel %vm4843, %v4875, %v4811
        %v4908 = vsel %vm4844, %v4876, %v4812
        %v4909 = vsel %vm4845, %v4877, %v4813
        %v4910 = vsel %vm4846, %v4878, %v4814
        %v4911 = vsel %vm4847, %v4879, %v4815
        %v4912 = vsel %vm4848, %v4880, %v4816
        %v4913 = vsel %vm4849, %v4881, %v4817
        %v4914 = vsel %vm4850, %v4882, %v4818
        %v4915 = vsel %vm4851, %v4883, %v4819
        %v4916 = vsel %vm4852, %v4884, %v4820
        %v4917 = vsel %vm4853, %v4885, %v4821
        %v4918 = vsel %vm4854, %v4886, %v4822
        %v4919 = vsel %vm4855, %v4887, %v4823
        %v4920 = vsel %vm4856, %v4888, %v4824
        %v4921 = vsel %vm4857, %v4889, %v4825
        %v4922 = vsel %vm4858, %v4890, %v4826
        %v4923 = vsel %vm4859, %v4891, %v4827
        %v4924 = vsel %vm4860, %v4892, %v4828
        %v4925 = vmul.f32 %v3999, 0.5
        %v4926 = vmul.f32 %v4004, 0.5
        %v4927 = vmul.f32 %v4009, 0.5
        %v4928 = vmul.f32 %v4014, 0.5
        %v4929 = vmul.f32 %v4019, 0.5
        %v4930 = vmul.f32 %v4024, 0.5
        %v4931 = vmul.f32 %v4029, 0.5
        %v4932 = vmul.f32 %v4034, 0.5
        %v4933 = vmul.f32 %v4039, 0.5
        %v4934 = vmul.f32 %v4044, 0.5
        %v4935 = vmul.f32 %v4049, 0.5
        %v4936 = vmul.f32 %v4054, 0.5
        %v4937 = vmul.f32 %v4059, 0.5
        %v4938 = vmul.f32 %v4064, 0.5
        %v4939 = vmul.f32 %v4069, 0.5
        %v4940 = vmul.f32 %v4074, 0.5
        %v4941 = vmul.f32 %v4079, 0.5
        %v4942 = vmul.f32 %v4084, 0.5
        %v4943 = vmul.f32 %v4089, 0.5
        %v4944 = vmul.f32 %v4094, 0.5
        %v4945 = vmul.f32 %v4099, 0.5
        %v4946 = vmul.f32 %v4104, 0.5
        %v4947 = vmul.f32 %v4109, 0.5
        %v4948 = vmul.f32 %v4114, 0.5
        %v4949 = vmul.f32 %v4119, 0.5
        %v4950 = vmul.f32 %v4124, 0.5
        %v4951 = vmul.f32 %v4129, 0.5
        %v4952 = vmul.f32 %v4134, 0.5
        %v4953 = vmul.f32 %v4139, 0.5
        %v4954 = vmul.f32 %v4144, 0.5
        %v4955 = vmul.f32 %v4149, 0.5
        %v4956 = vmul.f32 %v4154, 0.5
        %v4957 = vadd.f32 %v4893, 1.0
        %v4958 = vadd.f32 %v4894, 1.0
        %v4959 = vadd.f32 %v4895, 1.0
        %v4960 = vadd.f32 %v4896, 1.0
        %v4961 = vadd.f32 %v4897, 1.0
        %v4962 = vadd.f32 %v4898, 1.0
        %v4963 = vadd.f32 %v4899, 1.0
        %v4964 = vadd.f32 %v4900, 1.0
        %v4965 = vadd.f32 %v4901, 1.0
        %v4966 = vadd.f32 %v4902, 1.0
        %v4967 = vadd.f32 %v4903, 1.0
        %v4968 = vadd.f32 %v4904, 1.0
        %v4969 = vadd.f32 %v4905, 1.0
        %v4970 = vadd.f32 %v4906, 1.0
        %v4971 = vadd.f32 %v4907, 1.0
        %v4972 = vadd.f32 %v4908, 1.0
        %v4973 = vadd.f32 %v4909, 1.0
        %v4974 = vadd.f32 %v4910, 1.0
        %v4975 = vadd.f32 %v4911, 1.0
        %v4976 = vadd.f32 %v4912, 1.0
        %v4977 = vadd.f32 %v4913, 1.0
        %v4978 = vadd.f32 %v4914, 1.0
        %v4979 = vadd.f32 %v4915, 1.0
        %v4980 = vadd.f32 %v4916, 1.0
        %v4981 = vadd.f32 %v4917, 1.0
        %v4982 = vadd.f32 %v4918, 1.0
        %v4983 = vadd.f32 %v4919, 1.0
        %v4984 = vadd.f32 %v4920, 1.0
        %v4985 = vadd.f32 %v4921, 1.0
        %v4986 = vadd.f32 %v4922, 1.0
        %v4987 = vadd.f32 %v4923, 1.0
        %v4988 = vadd.f32 %v4924, 1.0
        %v4989 = vmul.f32 %v4925, %v4957
        %v4990 = vmul.f32 %v4926, %v4958
        %v4991 = vmul.f32 %v4927, %v4959
        %v4992 = vmul.f32 %v4928, %v4960
        %v4993 = vmul.f32 %v4929, %v4961
        %v4994 = vmul.f32 %v4930, %v4962
        %v4995 = vmul.f32 %v4931, %v4963
        %v4996 = vmul.f32 %v4932, %v4964
        %v4997 = vmul.f32 %v4933, %v4965
        %v4998 = vmul.f32 %v4934, %v4966
        %v4999 = vmul.f32 %v4935, %v4967
        %v5000 = vmul.f32 %v4936, %v4968
        %v5001 = vmul.f32 %v4937, %v4969
        %v5002 = vmul.f32 %v4938, %v4970
        %v5003 = vmul.f32 %v4939, %v4971
        %v5004 = vmul.f32 %v4940, %v4972
        %v5005 = vmul.f32 %v4941, %v4973
        %v5006 = vmul.f32 %v4942, %v4974
        %v5007 = vmul.f32 %v4943, %v4975
        %v5008 = vmul.f32 %v4944, %v4976
        %v5009 = vmul.f32 %v4945, %v4977
        %v5010 = vmul.f32 %v4946, %v4978
        %v5011 = vmul.f32 %v4947, %v4979
        %v5012 = vmul.f32 %v4948, %v4980
        %v5013 = vmul.f32 %v4949, %v4981
        %v5014 = vmul.f32 %v4950, %v4982
        %v5015 = vmul.f32 %v4951, %v4983
        %v5016 = vmul.f32 %v4952, %v4984
        %v5017 = vmul.f32 %v4953, %v4985
        %v5018 = vmul.f32 %v4954, %v4986
        %v5019 = vmul.f32 %v4955, %v4987
        %v5020 = vmul.f32 %v4956, %v4988
        %v5021 = vld [vmem:[%s7] sm:$0xff]
        %v5022 = vld [vmem:[%s7 + $0x8] sm:$0xff]
        %v5023 = vld [vmem:[%s7 + $0x10] sm:$0xff]
        %v5024 = vld [vmem:[%s7 + $0x18] sm:$0xff]
        %v5025 = vld [vmem:[%s7 + $0x20] sm:$0xff]
        %v5026 = vld [vmem:[%s7 + $0x28] sm:$0xff]
        %v5027 = vld [vmem:[%s7 + $0x30] sm:$0xff]
        %v5028 = vld [vmem:[%s7 + $0x38] sm:$0xff]
        %v5029 = vld [vmem:[%s7 + $0x40] sm:$0xff]
        %v5030 = vld [vmem:[%s7 + $0x48] sm:$0xff]
        %v5031 = vld [vmem:[%s7 + $0x50] sm:$0xff]
        %v5032 = vld [vmem:[%s7 + $0x58] sm:$0xff]
        %v5033 = vld [vmem:[%s7 + $0x60] sm:$0xff]
        %v5034 = vld [vmem:[%s7 + $0x68] sm:$0xff]
        %v5035 = vld [vmem:[%s7 + $0x70] sm:$0xff]
        %v5036 = vld [vmem:[%s7 + $0x78] sm:$0xff]
        %v5037 = vld [vmem:[%s8] sm:$0x1]
        %v5039 = vlaneseq
        %v5040 = vshrl.u32 %v5039, 7
        %v5041 = vsub.s32 0, %v5040
        %v5042 = vrot.slane %v5037, %v5041
        %5044 = vmatprep.subr.mxu0 0.0
        %5045 = vmatpush1.msra.mxu0 %v5036
        %5046 = vmatprep.subr.mxu0 0.0
        %5047 = vmatpush1.msra.mxu0 %v5035
        %5048 = vmatprep.subr.mxu0 0.0
        %5049 = vmatpush1.msra.mxu0 %v5034
        %5050 = vmatprep.subr.mxu0 0.0
        %5051 = vmatpush1.msra.mxu0 %v5033
        %5052 = vmatprep.subr.mxu0 0.0
        %5053 = vmatpush1.msra.mxu0 %v5032
        %5054 = vmatprep.subr.mxu0 0.0
        %5055 = vmatpush1.msra.mxu0 %v5031
        %5056 = vmatprep.subr.mxu0 0.0
        %5057 = vmatpush1.msra.mxu0 %v5030
        %5058 = vmatprep.subr.mxu0 0.0
        %5059 = vmatpush1.msra.mxu0 %v5029
        %5060 = vmatprep.subr.mxu0 0.0
        %5061 = vmatpush1.msra.mxu0 %v5028
        %5062 = vmatprep.subr.mxu0 0.0
        %5063 = vmatpush1.msra.mxu0 %v5027
        %5064 = vmatprep.subr.mxu0 0.0
        %5065 = vmatpush1.msra.mxu0 %v5026
        %5066 = vmatprep.subr.mxu0 0.0
        %5067 = vmatpush1.msra.mxu0 %v5025
        %5068 = vmatprep.subr.mxu0 0.0
        %5069 = vmatpush1.msra.mxu0 %v5024
        %5070 = vmatprep.subr.mxu0 0.0
        %5071 = vmatpush1.msra.mxu0 %v5023
        %5072 = vmatprep.subr.mxu0 0.0
        %5073 = vmatpush1.msra.mxu0 %v5022
        %5074 = vmatprep.subr.mxu0 0.0
        %5075 = vmatpush1.msra.mxu0 %v5021
        %5076 = vmatprep.subr.mxu0 0.0
        %5077 = vmatpush2.msra.mxu0 0.0
        %5078 = vmatprep.subr.mxu0 0.0
        %5079 = vmatpush2.msra.mxu0 0.0
        %5080 = vmatprep.subr.mxu0 0.0
        %5081 = vmatpush2.msra.mxu0 0.0
        %5082 = vmatprep.subr.mxu0 0.0
        %5083 = vmatpush2.msra.mxu0 0.0
        %5084 = vmatprep.subr.mxu0 0.0
        %5085 = vmatpush2.msra.mxu0 0.0
        %5086 = vmatprep.subr.mxu0 0.0
        %5087 = vmatpush2.msra.mxu0 0.0
        %5088 = vmatprep.subr.mxu0 0.0
        %5089 = vmatpush2.msra.mxu0 0.0
        %5090 = vmatprep.subr.mxu0 0.0
        %5091 = vmatpush2.msra.mxu0 0.0
        %5092 = vmatprep.subr.mxu0 0.0
        %5093 = vmatpush2.msra.mxu0 0.0
        %5094 = vmatprep.subr.mxu0 0.0
        %5095 = vmatpush2.msra.mxu0 0.0
        %5096 = vmatprep.subr.mxu0 0.0
        %5097 = vmatpush2.msra.mxu0 0.0
        %5098 = vmatprep.subr.mxu0 0.0
        %5099 = vmatpush2.msra.mxu0 0.0
        %5100 = vmatprep.subr.mxu0 0.0
        %5101 = vmatpush2.msra.mxu0 0.0
        %5102 = vmatprep.subr.mxu0 0.0
        %5103 = vmatpush2.msra.mxu0 0.0
        %5104 = vmatprep.subr.mxu0 0.0
        %5105 = vmatpush2.msra.mxu0 0.0
        %5106 = vmatprep.subr.mxu0 0.0
        %5107 = vmatpush2.msra.mxu0 0.0
        %5108 = vmatprep.mubr.f32.mxu0 0.0
        %5109 = vmatmul.mubr.f32.gmra.mxu0 %v4989
        %v5110 = vpop.f32.mrf.mxu0
        %v5111 = vadd.f32 %v5042, %v5110
        %v5112 = vpop.f32.mrf.mxu0
        %5113 = vmatprep.mubr.f32.mxu0 0.0
        %5114 = vmatmul.mubr.f32.gmra.mxu0 %v4990
        %v5115 = vpop.f32.mrf.mxu0
        %v5116 = vadd.f32 %v5042, %v5115
        %v5117 = vpop.f32.mrf.mxu0
        %5118 = vmatprep.mubr.f32.mxu0 0.0
        %5119 = vmatmul.mubr.f32.gmra.mxu0 %v4991
        %v5120 = vpop.f32.mrf.mxu0
        %v5121 = vadd.f32 %v5042, %v5120
        %v5122 = vpop.f32.mrf.mxu0
        %5123 = vmatprep.mubr.f32.mxu0 0.0
        %5124 = vmatmul.mubr.f32.gmra.mxu0 %v4992
        %v5125 = vpop.f32.mrf.mxu0
        %v5126 = vadd.f32 %v5042, %v5125
        %v5127 = vpop.f32.mrf.mxu0
        %5128 = vmatprep.mubr.f32.mxu0 0.0
        %5129 = vmatmul.mubr.f32.gmra.mxu0 %v4993
        %v5130 = vpop.f32.mrf.mxu0
        %v5131 = vadd.f32 %v5042, %v5130
        %v5132 = vpop.f32.mrf.mxu0
        %5133 = vmatprep.mubr.f32.mxu0 0.0
        %5134 = vmatmul.mubr.f32.gmra.mxu0 %v4994
        %v5135 = vpop.f32.mrf.mxu0
        %v5136 = vadd.f32 %v5042, %v5135
        %v5137 = vpop.f32.mrf.mxu0
        %5138 = vmatprep.mubr.f32.mxu0 0.0
        %5139 = vmatmul.mubr.f32.gmra.mxu0 %v4995
        %v5140 = vpop.f32.mrf.mxu0
        %v5141 = vadd.f32 %v5042, %v5140
        %v5142 = vpop.f32.mrf.mxu0
        %5143 = vmatprep.mubr.f32.mxu0 0.0
        %5144 = vmatmul.mubr.f32.gmra.mxu0 %v4996
        %v5145 = vpop.f32.mrf.mxu0
        %v5146 = vadd.f32 %v5042, %v5145
        %v5147 = vpop.f32.mrf.mxu0
        %5148 = vmatprep.mubr.f32.mxu0 0.0
        %5149 = vmatmul.mubr.f32.gmra.mxu0 %v4997
        %v5150 = vpop.f32.mrf.mxu0
        %v5151 = vadd.f32 %v5042, %v5150
        %v5152 = vpop.f32.mrf.mxu0
        %5153 = vmatprep.mubr.f32.mxu0 0.0
        %5154 = vmatmul.mubr.f32.gmra.mxu0 %v4998
        %v5155 = vpop.f32.mrf.mxu0
        %v5156 = vadd.f32 %v5042, %v5155
        %v5157 = vpop.f32.mrf.mxu0
        %5158 = vmatprep.mubr.f32.mxu0 0.0
        %5159 = vmatmul.mubr.f32.gmra.mxu0 %v4999
        %v5160 = vpop.f32.mrf.mxu0
        %v5161 = vadd.f32 %v5042, %v5160
        %v5162 = vpop.f32.mrf.mxu0
        %5163 = vmatprep.mubr.f32.mxu0 0.0
        %5164 = vmatmul.mubr.f32.gmra.mxu0 %v5000
        %v5165 = vpop.f32.mrf.mxu0
        %v5166 = vadd.f32 %v5042, %v5165
        %v5167 = vpop.f32.mrf.mxu0
        %5168 = vmatprep.mubr.f32.mxu0 0.0
        %5169 = vmatmul.mubr.f32.gmra.mxu0 %v5001
        %v5170 = vpop.f32.mrf.mxu0
        %v5171 = vadd.f32 %v5042, %v5170
        %v5172 = vpop.f32.mrf.mxu0
        %5173 = vmatprep.mubr.f32.mxu0 0.0
        %5174 = vmatmul.mubr.f32.gmra.mxu0 %v5002
        %v5175 = vpop.f32.mrf.mxu0
        %v5176 = vadd.f32 %v5042, %v5175
        %v5177 = vpop.f32.mrf.mxu0
        %5178 = vmatprep.mubr.f32.mxu0 0.0
        %5179 = vmatmul.mubr.f32.gmra.mxu0 %v5003
        %v5180 = vpop.f32.mrf.mxu0
        %v5181 = vadd.f32 %v5042, %v5180
        %v5182 = vpop.f32.mrf.mxu0
        %5183 = vmatprep.mubr.f32.mxu0 0.0
        %5184 = vmatmul.mubr.f32.gmra.mxu0 %v5004
        %v5185 = vpop.f32.mrf.mxu0
        %v5186 = vadd.f32 %v5042, %v5185
        %v5187 = vpop.f32.mrf.mxu0
        %5188 = vmatprep.mubr.f32.mxu0 0.0
        %5189 = vmatmul.mubr.f32.gmra.mxu0 %v5005
        %v5190 = vpop.f32.mrf.mxu0
        %v5191 = vadd.f32 %v5042, %v5190
        %v5192 = vpop.f32.mrf.mxu0
        %5193 = vmatprep.mubr.f32.mxu0 0.0
        %5194 = vmatmul.mubr.f32.gmra.mxu0 %v5006
        %v5195 = vpop.f32.mrf.mxu0
        %v5196 = vadd.f32 %v5042, %v5195
        %v5197 = vpop.f32.mrf.mxu0
        %5198 = vmatprep.mubr.f32.mxu0 0.0
        %5199 = vmatmul.mubr.f32.gmra.mxu0 %v5007
        %v5200 = vpop.f32.mrf.mxu0
        %v5201 = vadd.f32 %v5042, %v5200
        %v5202 = vpop.f32.mrf.mxu0
        %5203 = vmatprep.mubr.f32.mxu0 0.0
        %5204 = vmatmul.mubr.f32.gmra.mxu0 %v5008
        %v5205 = vpop.f32.mrf.mxu0
        %v5206 = vadd.f32 %v5042, %v5205
        %v5207 = vpop.f32.mrf.mxu0
        %5208 = vmatprep.mubr.f32.mxu0 0.0
        %5209 = vmatmul.mubr.f32.gmra.mxu0 %v5009
        %v5210 = vpop.f32.mrf.mxu0
        %v5211 = vadd.f32 %v5042, %v5210
        %v5212 = vpop.f32.mrf.mxu0
        %5213 = vmatprep.mubr.f32.mxu0 0.0
        %5214 = vmatmul.mubr.f32.gmra.mxu0 %v5010
        %v5215 = vpop.f32.mrf.mxu0
        %v5216 = vadd.f32 %v5042, %v5215
        %v5217 = vpop.f32.mrf.mxu0
        %5218 = vmatprep.mubr.f32.mxu0 0.0
        %5219 = vmatmul.mubr.f32.gmra.mxu0 %v5011
        %v5220 = vpop.f32.mrf.mxu0
        %v5221 = vadd.f32 %v5042, %v5220
        %v5222 = vpop.f32.mrf.mxu0
        %5223 = vmatprep.mubr.f32.mxu0 0.0
        %5224 = vmatmul.mubr.f32.gmra.mxu0 %v5012
        %v5225 = vpop.f32.mrf.mxu0
        %v5226 = vadd.f32 %v5042, %v5225
        %v5227 = vpop.f32.mrf.mxu0
        %5228 = vmatprep.mubr.f32.mxu0 0.0
        %5229 = vmatmul.mubr.f32.gmra.mxu0 %v5013
        %v5230 = vpop.f32.mrf.mxu0
        %v5231 = vadd.f32 %v5042, %v5230
        %v5232 = vpop.f32.mrf.mxu0
        %5233 = vmatprep.mubr.f32.mxu0 0.0
        %5234 = vmatmul.mubr.f32.gmra.mxu0 %v5014
        %v5235 = vpop.f32.mrf.mxu0
        %v5236 = vadd.f32 %v5042, %v5235
        %v5237 = vpop.f32.mrf.mxu0
        %5238 = vmatprep.mubr.f32.mxu0 0.0
        %5239 = vmatmul.mubr.f32.gmra.mxu0 %v5015
        %v5240 = vpop.f32.mrf.mxu0
        %v5241 = vadd.f32 %v5042, %v5240
        %v5242 = vpop.f32.mrf.mxu0
        %5243 = vmatprep.mubr.f32.mxu0 0.0
        %5244 = vmatmul.mubr.f32.gmra.mxu0 %v5016
        %v5245 = vpop.f32.mrf.mxu0
        %v5246 = vadd.f32 %v5042, %v5245
        %v5247 = vpop.f32.mrf.mxu0
        %5248 = vmatprep.mubr.f32.mxu0 0.0
        %5249 = vmatmul.mubr.f32.gmra.mxu0 %v5017
        %v5250 = vpop.f32.mrf.mxu0
        %v5251 = vadd.f32 %v5042, %v5250
        %v5252 = vpop.f32.mrf.mxu0
        %5253 = vmatprep.mubr.f32.mxu0 0.0
        %5254 = vmatmul.mubr.f32.gmra.mxu0 %v5018
        %v5255 = vpop.f32.mrf.mxu0
        %v5256 = vadd.f32 %v5042, %v5255
        %v5257 = vpop.f32.mrf.mxu0
        %5258 = vmatprep.mubr.f32.mxu0 0.0
        %5259 = vmatmul.mubr.f32.gmra.mxu0 %v5019
        %v5260 = vpop.f32.mrf.mxu0
        %v5261 = vadd.f32 %v5042, %v5260
        %v5262 = vpop.f32.mrf.mxu0
        %5263 = vmatprep.mubr.f32.mxu0 0.0
        %5264 = vmatmul.mubr.f32.gmra.mxu0 %v5020
        %v5265 = vpop.f32.mrf.mxu0
        %v5266 = vadd.f32 %v5042, %v5265
        %v5267 = vpop.f32.mrf.mxu0
        %5268 = vdwg.mxu0
        %v5269 = vld [vmem:[%s9] sm:$0x1]
        %v5271 = vlaneseq
        %v5272 = vshrl.u32 %v5271, 7
        %v5273 = vsub.s32 0, %v5272
        %v5274 = vrot.slane %v5269, %v5273
        %v5276 = vmul.f32 %v5111, %v5274
        %v5277 = vmul.f32 %v5116, %v5274
        %v5278 = vmul.f32 %v5121, %v5274
        %v5279 = vmul.f32 %v5126, %v5274
        %v5280 = vmul.f32 %v5131, %v5274
        %v5281 = vmul.f32 %v5136, %v5274
        %v5282 = vmul.f32 %v5141, %v5274
        %v5283 = vmul.f32 %v5146, %v5274
        %v5284 = vmul.f32 %v5151, %v5274
        %v5285 = vmul.f32 %v5156, %v5274
        %v5286 = vmul.f32 %v5161, %v5274
        %v5287 = vmul.f32 %v5166, %v5274
        %v5288 = vmul.f32 %v5171, %v5274
        %v5289 = vmul.f32 %v5176, %v5274
        %v5290 = vmul.f32 %v5181, %v5274
        %v5291 = vmul.f32 %v5186, %v5274
        %v5292 = vmul.f32 %v5191, %v5274
        %v5293 = vmul.f32 %v5196, %v5274
        %v5294 = vmul.f32 %v5201, %v5274
        %v5295 = vmul.f32 %v5206, %v5274
        %v5296 = vmul.f32 %v5211, %v5274
        %v5297 = vmul.f32 %v5216, %v5274
        %v5298 = vmul.f32 %v5221, %v5274
        %v5299 = vmul.f32 %v5226, %v5274
        %v5300 = vmul.f32 %v5231, %v5274
        %v5301 = vmul.f32 %v5236, %v5274
        %v5302 = vmul.f32 %v5241, %v5274
        %v5303 = vmul.f32 %v5246, %v5274
        %v5304 = vmul.f32 %v5251, %v5274
        %v5305 = vmul.f32 %v5256, %v5274
        %v5306 = vmul.f32 %v5261, %v5274
        %v5307 = vmul.f32 %v5266, %v5274
        %s5308 = scalar_lea.vmem %s377, 96
        %v5309 = vld [vmem:[%s5308 + $0x8] sm:$0xff]
        %v5310 = vld [vmem:[%s5308 + $0x10] sm:$0xff]
        %v5311 = vld [vmem:[%s5308 + $0x28] sm:$0xff]
        %v5312 = vld [vmem:[%s5308 + $0x30] sm:$0xff]
        %v5313 = vld [vmem:[%s5308 + $0x48] sm:$0xff]
        %v5314 = vld [vmem:[%s5308 + $0x50] sm:$0xff]
        %v5315 = vld [vmem:[%s5308 + $0x68] sm:$0xff]
        %v5316 = vld [vmem:[%s5308 + $0x70] sm:$0xff]
        %v5317 = vld [vmem:[%s5308 + $0x88] sm:$0xff]
        %v5318 = vld [vmem:[%s5308 + $0x90] sm:$0xff]
        %v5319 = vld [vmem:[%s5308 + $0xa8] sm:$0xff]
        %v5320 = vld [vmem:[%s5308 + $0xb0] sm:$0xff]
        %v5321 = vld [vmem:[%s5308 + $0xc8] sm:$0xff]
        %v5322 = vld [vmem:[%s5308 + $0xd0] sm:$0xff]
        %v5323 = vld [vmem:[%s5308 + $0xe8] sm:$0xff]
        %v5324 = vld [vmem:[%s5308 + $0xf0] sm:$0xff]
        %v5325 = vld [vmem:[%s5308 + $0x108] sm:$0xff]
        %v5326 = vld [vmem:[%s5308 + $0x110] sm:$0xff]
        %v5327 = vld [vmem:[%s5308 + $0x128] sm:$0xff]
        %v5328 = vld [vmem:[%s5308 + $0x130] sm:$0xff]
        %v5329 = vld [vmem:[%s5308 + $0x148] sm:$0xff]
        %v5330 = vld [vmem:[%s5308 + $0x150] sm:$0xff]
        %v5331 = vld [vmem:[%s5308 + $0x168] sm:$0xff]
        %v5332 = vld [vmem:[%s5308 + $0x170] sm:$0xff]
        %v5333 = vld [vmem:[%s5308 + $0x188] sm:$0xff]
        %v5334 = vld [vmem:[%s5308 + $0x190] sm:$0xff]
        %v5335 = vld [vmem:[%s5308 + $0x1a8] sm:$0xff]
        %v5336 = vld [vmem:[%s5308 + $0x1b0] sm:$0xff]
        %v5337 = vld [vmem:[%s5308 + $0x1c8] sm:$0xff]
        %v5338 = vld [vmem:[%s5308 + $0x1d0] sm:$0xff]
        %v5339 = vld [vmem:[%s5308 + $0x1e8] sm:$0xff]
        %v5340 = vld [vmem:[%s5308 + $0x1f0] sm:$0xff]
        %v5341 = vadd.f32 %v5309, %v5276
        %v5342 = vadd.f32 %v5310, %v5277
        %v5343 = vadd.f32 %v5311, %v5278
        %v5344 = vadd.f32 %v5312, %v5279
        %v5345 = vadd.f32 %v5313, %v5280
        %v5346 = vadd.f32 %v5314, %v5281
        %v5347 = vadd.f32 %v5315, %v5282
        %v5348 = vadd.f32 %v5316, %v5283
        %v5349 = vadd.f32 %v5317, %v5284
        %v5350 = vadd.f32 %v5318, %v5285
        %v5351 = vadd.f32 %v5319, %v5286
        %v5352 = vadd.f32 %v5320, %v5287
        %v5353 = vadd.f32 %v5321, %v5288
        %v5354 = vadd.f32 %v5322, %v5289
        %v5355 = vadd.f32 %v5323, %v5290
        %v5356 = vadd.f32 %v5324, %v5291
        %v5357 = vadd.f32 %v5325, %v5292
        %v5358 = vadd.f32 %v5326, %v5293
        %v5359 = vadd.f32 %v5327, %v5294
        %v5360 = vadd.f32 %v5328, %v5295
        %v5361 = vadd.f32 %v5329, %v5296
        %v5362 = vadd.f32 %v5330, %v5297
        %v5363 = vadd.f32 %v5331, %v5298
        %v5364 = vadd.f32 %v5332, %v5299
        %v5365 = vadd.f32 %v5333, %v5300
        %v5366 = vadd.f32 %v5334, %v5301
        %v5367 = vadd.f32 %v5335, %v5302
        %v5368 = vadd.f32 %v5336, %v5303
        %v5369 = vadd.f32 %v5337, %v5304
        %v5370 = vadd.f32 %v5338, %v5305
        %v5371 = vadd.f32 %v5339, %v5306
        %v5372 = vadd.f32 %v5340, %v5307
        %5373 = vst [vmem:[%s371] sm:$0xff] %v5341
        %5374 = vst [vmem:[%s371 + $0x8] sm:$0xff] %v5342
        %5375 = vst [vmem:[%s371 + $0x10] sm:$0xff] %v5343
        %5376 = vst [vmem:[%s371 + $0x18] sm:$0xff] %v5344
        %5377 = vst [vmem:[%s371 + $0x20] sm:$0xff] %v5345
        %5378 = vst [vmem:[%s371 + $0x28] sm:$0xff] %v5346
        %5379 = vst [vmem:[%s371 + $0x30] sm:$0xff] %v5347
        %5380 = vst [vmem:[%s371 + $0x38] sm:$0xff] %v5348
        %5381 = vst [vmem:[%s371 + $0x40] sm:$0xff] %v5349
        %5382 = vst [vmem:[%s371 + $0x48] sm:$0xff] %v5350
        %5383 = vst [vmem:[%s371 + $0x50] sm:$0xff] %v5351
        %5384 = vst [vmem:[%s371 + $0x58] sm:$0xff] %v5352
        %5385 = vst [vmem:[%s371 + $0x60] sm:$0xff] %v5353
        %5386 = vst [vmem:[%s371 + $0x68] sm:$0xff] %v5354
        %5387 = vst [vmem:[%s371 + $0x70] sm:$0xff] %v5355
        %5388 = vst [vmem:[%s371 + $0x78] sm:$0xff] %v5356
        %5389 = vst [vmem:[%s371 + $0x80] sm:$0xff] %v5357
        %5390 = vst [vmem:[%s371 + $0x88] sm:$0xff] %v5358
        %5391 = vst [vmem:[%s371 + $0x90] sm:$0xff] %v5359
        %5392 = vst [vmem:[%s371 + $0x98] sm:$0xff] %v5360
        %5393 = vst [vmem:[%s371 + $0xa0] sm:$0xff] %v5361
        %5394 = vst [vmem:[%s371 + $0xa8] sm:$0xff] %v5362
        %5395 = vst [vmem:[%s371 + $0xb0] sm:$0xff] %v5363
        %5396 = vst [vmem:[%s371 + $0xb8] sm:$0xff] %v5364
        %5397 = vst [vmem:[%s371 + $0xc0] sm:$0xff] %v5365
        %5398 = vst [vmem:[%s371 + $0xc8] sm:$0xff] %v5366
        %5399 = vst [vmem:[%s371 + $0xd0] sm:$0xff] %v5367
        %5400 = vst [vmem:[%s371 + $0xd8] sm:$0xff] %v5368
        %5401 = vst [vmem:[%s371 + $0xe0] sm:$0xff] %v5369
        %5402 = vst [vmem:[%s371 + $0xe8] sm:$0xff] %v5370
        %5403 = vst [vmem:[%s371 + $0xf0] sm:$0xff] %v5371
        %5404 = vst [vmem:[%s371 + $0xf8] sm:$0xff] %v5372
        %s5405 = sand.u32 %s263, 1
        %s5406 = scalar_lea.sflag [#allocation4], %s5405
        %s5407 = sand.u32 %s263, 1
        %s5408 = smul.addr %s5407, 256
        %s5409 = scalar_lea.vmem [#allocation3], %s5408
        // Predicated region
        $region68: #{tpu_custom_call.1} parent=59 // pred_check
          %p5410 = pneg %p273
        $region69: #{tpu_custom_call.1} parent=59 // pred_check_branch
          %5412 = sbr.rel (%p5410) target = $region71
        $region70: #{tpu_custom_call.1} parent=59 // pred_region
          %s5413 = smul.u32 16, %s29
          %s5415 = ssub.s32 4096, 4096
          %5416 = vsyncadd %s5406, %s5415
          %s5417 = smul.addr %s5413, 2
          %s5418 = smul.addr %s28, 32
          %s5419 = sadd.s32 %s5417, %s5418
          %s5420 = smul.addr %s5419, 128
          %s5421 = scalar_lea.hbm %s10, %s5420
          %s5422 = sshll.u32 %s5409, 4
          %s5423 = int_to_ptr.vmem [resolvable:$true] %s5422
          %5428 = dma.vmem_to_hbm [thread:$0]  %s5423, 4096, %s5421, %s5406, 128, 128, 8
        $region71: #{tpu_custom_call.1} parent=59 // pred_fallthru
          _
      $region60: #{tpu_custom_call.1} parent=5 // pred_fallthru
        _
      %p5429 = scmp.le.s32.totalorder 2, %s19
      // Predicated region
      $region72: #{tpu_custom_call.1} parent=5 // pred_check
        %p5430 = pneg %p5429
      $region73: #{tpu_custom_call.1} parent=5 // pred_check_branch
        %5432 = sbr.rel (%p5430) target = $region75
      $region74: #{tpu_custom_call.1} parent=5 // pred_region
        %s5433 = ssub.s32 %s19, 2
        // Predicated region
        $region76: #{tpu_custom_call.1} parent=74 // pred_check
          %p5434 = pneg %p279
        $region77: #{tpu_custom_call.1} parent=74 // pred_check_branch
          %5436 = sbr.rel (%p5434) target = $region79
        $region78: #{tpu_custom_call.1} parent=74 // pred_region
          %s5437 = sand.u32 %s264, 1
          %s5438 = scalar_lea.sflag [#allocation4], %s5437
          %s5439 = sand.u32 %s264, 1
          %s5440 = smul.addr %s5439, 256
          %s5441 = scalar_lea.vmem [#allocation3], %s5440
          %5442 = dma.done %s5438, 4096
        $region79: #{tpu_custom_call.1} parent=74 // pred_fallthru
          _
      $region75: #{tpu_custom_call.1} parent=5 // pred_fallthru
        _
    $region6: #{tpu_custom_call.1} parent=1 // loop_footer
      %s23 = sadd.s32 1, %s19
    $region7: #{tpu_custom_call.1} parent=1 // loop_footer_branch
      %18 = sbr.rel target = $region3
    $region8: #{tpu_custom_call.1} parent=1 // loop_exit
      _
    %5443 = vsyncpa [#allocation4], 1
    %s5444 = scalar_lea.sflag [#allocation4], 1
    %5445 = vsyncpa %s5444, 1

</llo_original>
